<compile_context>
chip_gen: v7x
topology: tpu7x:2x2x1
jax: 0.10.0
libtpu: 0.0.40
codegen_flags: <defaults>
</compile_context>

<pallas_src>
import jax
import jax.numpy as jnp
from jax.experimental import pallas as pl
from jax.experimental.pallas import tpu as pltpu

TEMPERATURE = 0.5
INV_TEMPERATURE = 1.0 / TEMPERATURE          # 2.0 — power of two, exact in bf16
NEG_INF = -1e9
_EXP_DTYPE = jnp.bfloat16                    # use jnp.float32 on v5e (no bf16 EUP)


def _sampled_softmax_kernel(ue_ref, iet_ref, logq_ref, pmask_ref, bitsel_ref,
                            out_ref, m_sc, l_sc, diag_sc, ue_sc):
    # Grid: axis 0 = row (user) tiles [parallel], axis 1 = column (item) tiles
    # [arbitrary; online LSE reduction].  tm == tn, so block (i, i) holds the
    # in-batch-positive diagonal.
    i = pl.program_id(0)
    j = pl.program_id(1)

    @pl.when(j == 0)
    def _init():
        m_sc[...] = jnp.full_like(m_sc, -jnp.inf)
        l_sc[...] = jnp.zeros_like(l_sc)
        # Hoisted 1/T scale: once per row tile instead of once per column tile.
        ue_sc[...] = ue_ref[...] * INV_TEMPERATURE           # bf16, exact (1/T = 2)

    # (TM, TN) logits tile on the MXU; bf16 operands, f32 accumulation.
    logits = jnp.dot(ue_sc[...], iet_ref[...], preferred_element_type=jnp.float32)

    # ---- unpack the bit-packed mask (32 rows / uint32 word, sublane-interleaved) ----
    # pmask tile: (G, TN) uint32 with G = TM // 32; row r of the logits tile lives in
    # packed row (r % G) at bit (r // G).  Expansion = 32 sublane-aligned copies;
    # bit extraction = AND with the precomputed per-row selector column.
    pm = pmask_ref[...]                                       # (G, TN) uint32
    words = jnp.concatenate([pm] * 32, axis=0)                # (TM, TN) uint32
    is_masked = (words & bitsel_ref[...]) != 0                # (TM, TN) bool

    # Fused log-Q correction + negative-sample masking (single VPU select).
    logits = jnp.where(is_masked, NEG_INF, logits - logq_ref[...])

    @pl.when(j == i)
    def _diag():
        # Harvest the positive (diagonal) logit straight from the corrected tile —
        # same bf16 MXU path as its contribution to the LSE.
        rr = jax.lax.broadcasted_iota(jnp.int32, logits.shape, 0)
        cc = jax.lax.broadcasted_iota(jnp.int32, logits.shape, 1)
        diag_sc[...] = jnp.sum(jnp.where(rr == cc, logits, 0.0),
                               axis=-1, keepdims=True)

    # ---- online (flash-style) log-sum-exp across column tiles ----
    m_prev = m_sc[...]
    m_new = jnp.maximum(m_prev, jnp.max(logits, axis=-1, keepdims=True))
    # exp in bf16 (EUP relief on v6e/v7x); the running max bounds the argument.
    p = jnp.exp((logits - m_new).astype(_EXP_DTYPE))
    l_sc[...] = (jnp.exp(m_prev - m_new) * l_sc[...]
                 + jnp.sum(p.astype(jnp.float32), axis=-1, keepdims=True))
    m_sc[...] = m_new

    @pl.when(j == pl.num_programs(1) - 1)
    def _finalize():
        lse = m_sc[...] + jnp.log(l_sc[...])
        out_ref[...] = lse - diag_sc[...]                      # per-row CE term


def sampled_softmax_loss(user_embed, item_embed, user_id, item_id,
                         pos_matrix, item_freq, *, tile=512):
    """Forward pass of SampledSoftmaxLoss.

    pos_matrix: (num_users, num_items) bool; pos_matrix[u, i] == user u clicked item i
                (dense equivalent of the dict `user_pos_item` built in __init__).
    item_freq : (num_items,) float32 normalized item frequencies (sums to 1).
    """
    B = user_id.shape[0]
    d = user_embed.shape[1]

    # ---- tile selection ----
    # Constraints: tm == tn (diagonal harvest), tm multiple of 256 (packed-mask
    # sublane alignment: tm//32 must be a multiple of 8), tn multiple of 128.
    tile = max(256, (tile // 256) * 256)
    # Prefer >= 2 row tiles so the "parallel" axis shards over both v7x TensorCores.
    while tile > 256 and -(-B // tile) < 2:
        tile //= 2
    tm = tn = tile
    b_pad = -(-B // tile) * tile
    d_pad = -(-d // 128) * 128
    G = tm // 32                              # packed-mask rows per logits tile

    # ---- index plumbing in plain JAX (torch.isin over per-user positive sets) ----
    mask = pos_matrix[user_id][:, item_id]                     # (B, B) bool
    mask = mask & ~jnp.eye(B, dtype=bool)                      # keep in-batch positive
    log_q = jnp.log(item_freq[item_id]).astype(jnp.float32)    # (B,)

    # ---- pad to MXU / lane friendly shapes (zeros in d, fully-masked in B) ----
    ue = jnp.zeros((b_pad, d_pad), jnp.bfloat16).at[:B, :d].set(
        user_embed.astype(jnp.bfloat16))
    ie_t = jnp.zeros((d_pad, b_pad), jnp.bfloat16).at[:d, :B].set(
        item_embed.astype(jnp.bfloat16).T)                     # pre-transposed RHS
    logq_col = jnp.zeros((1, b_pad), jnp.float32).at[0, :B].set(log_q)

    # ---- bit-pack the mask: 32 rows per uint32 word, sublane-interleaved per tile ----
    # packed[i*G + g, C] bit b == mask_full[i*tm + b*G + g, C]
    mask_full = jnp.ones((b_pad, b_pad), jnp.bool_).at[:B, :B].set(mask)
    n_rt = b_pad // tm
    m4 = mask_full.reshape(n_rt, 32, G, b_pad).astype(jnp.uint32)
    bit_weights = jnp.arange(32, dtype=jnp.uint32)[None, :, None, None]
    pmask = jnp.sum(m4 << bit_weights, axis=1, dtype=jnp.uint32)
    pmask = pmask.reshape(b_pad // 32, b_pad)                  # (b_pad//32, b_pad)

    # Per-row bit selector (constant across row tiles): bitsel[r] = 1 << (r // G).
    bitsel = (jnp.uint32(1)
              << (jnp.arange(tm, dtype=jnp.uint32) // jnp.uint32(G)))[:, None]

    grid = (b_pad // tm, b_pad // tn)
    out = pl.pallas_call(
        _sampled_softmax_kernel,
        out_shape=jax.ShapeDtypeStruct((b_pad, 1), jnp.float32),
        grid_spec=pltpu.PrefetchScalarGridSpec(
            num_scalar_prefetch=0,
            grid=grid,
            in_specs=[
                pl.BlockSpec((tm, d_pad), lambda i, j: (i, 0)),      # user rows (bf16)
                pl.BlockSpec((d_pad, tn), lambda i, j: (0, j)),      # item cols (bf16)
                pl.BlockSpec((1, tn), lambda i, j: (0, j)),          # log Q by column
                pl.BlockSpec((G, tn), lambda i, j: (i, j)),          # packed mask (u32)
                pl.BlockSpec((tm, 1), lambda i, j: (0, 0)),          # bit selector
            ],
            out_specs=pl.BlockSpec((tm, 1), lambda i, j: (i, 0)),
            scratch_shapes=[
                pltpu.VMEM((tm, 1), jnp.float32),      # running max
                pltpu.VMEM((tm, 1), jnp.float32),      # running sum(exp)
                pltpu.VMEM((tm, 1), jnp.float32),      # positive logit
                pltpu.VMEM((tm, d_pad), jnp.bfloat16), # hoisted (user / T) tile
            ],
        ),
        compiler_params=pltpu.CompilerParams(
            dimension_semantics=("parallel", "arbitrary"),
            vmem_limit_bytes=64 * 1024 * 1024),
    )(ue, ie_t, logq_col, pmask, bitsel)

    # Padded rows are ignored; mean over the real batch.
    return jnp.sum(out[:B, 0]) / B


def _reference(user_embed, item_embed, user_id, item_id, pos_matrix, item_freq):
    # Pure-JAX reference matching the PyTorch module (with bf16-quantized embeddings,
    # since the kernel deliberately feeds bf16 operands to the MXU).
    B = user_id.shape[0]
    ue = user_embed.astype(jnp.bfloat16).astype(jnp.float32)
    ie = item_embed.astype(jnp.bfloat16).astype(jnp.float32)
    mask = pos_matrix[user_id][:, item_id]
    mask = mask & ~jnp.eye(B, dtype=bool)
    logits = jnp.matmul(ue, ie.T, precision=jax.lax.Precision.HIGHEST) / TEMPERATURE
    logits = logits - jnp.log(item_freq[item_id])[None, :]
    logits = jnp.where(mask, NEG_INF, logits)
    logp = jax.nn.log_softmax(logits, axis=-1)
    return -jnp.mean(jnp.diagonal(logp))


if __name__ == "__main__":
    key = jax.random.PRNGKey(0)
    B, d = 300, 96                        # non-aligned: exercises padding + 2x2 grid
    num_users, num_items = 37, 500

    k1, k2, k3, k4, k5, k6 = jax.random.split(key, 6)
    user_embed = jax.random.normal(k1, (B, d), dtype=jnp.float32)
    item_embed = jax.random.normal(k2, (B, d), dtype=jnp.float32)
    user_id = jax.random.randint(k3, (B,), 0, num_users, dtype=jnp.int32)
    item_id = jax.random.randint(k4, (B,), 0, num_items, dtype=jnp.int32)

    # Synthetic dataset state that __init__ would build:
    #   user_pos_item dict -> dense boolean membership matrix (num_users, num_items)
    #   item_count         -> normalized item frequency
    pos_matrix = jax.random.bernoulli(k5, 0.05, (num_users, num_items))
    item_count = jax.random.uniform(k6, (num_items,), minval=1.0, maxval=10.0)
    item_freq = item_count / jnp.sum(item_count)

    loss_fn = jax.jit(lambda ue, ie, uid, iid, pm, f:
                      sampled_softmax_loss(ue, ie, uid, iid, pm, f, tile=512))
    loss = jax.block_until_ready(
        loss_fn(user_embed, item_embed, user_id, item_id, pos_matrix, item_freq))

    ref = _reference(user_embed, item_embed, user_id, item_id,
                     pos_matrix, item_freq)

    assert jnp.isfinite(loss), f"loss not finite: {loss}"
    # bf16 MXU operands + bf16 in-kernel exp => small controlled deviation vs f32 ref.
    assert jnp.allclose(loss, ref, rtol=2e-3, atol=2e-3), (loss, ref)
    print("KERNEL_OK")
</pallas_src>

<mosaic_0001>
module attributes {stable_mosaic.version = 11 : i64} {
  func.func @_sampled_softmax_kernel(%arg0: i32, %arg1: i32, %arg2: memref<256x128xbf16, #tpu.memory_space<vmem>>, %arg3: memref<128x256xbf16, #tpu.memory_space<vmem>>, %arg4: memref<1x256xf32, #tpu.memory_space<vmem>>, %arg5: memref<8x256xi32, #tpu.memory_space<vmem>>, %arg6: memref<256x1xi32, #tpu.memory_space<vmem>>, %arg7: memref<256x1xf32, #tpu.memory_space<vmem>>, %arg8: memref<256x1xf32, #tpu.memory_space<vmem>>, %arg9: memref<256x1xf32, #tpu.memory_space<vmem>>, %arg10: memref<256x1xf32, #tpu.memory_space<vmem>>, %arg11: memref<256x128xbf16, #tpu.memory_space<vmem>>) attributes {dimension_semantics = [#tpu.dimension_semantics<parallel>, #tpu.dimension_semantics<arbitrary>], iteration_bounds = array<i64: 2, 2>, scalar_prefetch = 0 : i64, scratch_operands = 4 : i64, tpu.core_type = #tpu.core_type<tc>, window_params = [{transform_indices = @transform_0, window_bounds = array<i64: 256, 128>}, {transform_indices = @transform_1, window_bounds = array<i64: 128, 256>}, {transform_indices = @transform_2, window_bounds = array<i64: 1, 256>}, {transform_indices = @transform_3, window_bounds = array<i64: 8, 256>}, {pipeline_mode = #tpu.pipeline_mode<synchronous>, transform_indices = @transform_4, window_bounds = array<i64: 256, 1>}, {transform_indices = @transform_5, window_bounds = array<i64: 256, 1>}]} {
    %c0_i32 = arith.constant 0 : i32
    %0 = arith.cmpi eq, %arg1, %c0_i32 : i32
    %1 = arith.extui %0 : i1 to i32
    %c0_i32_0 = arith.constant 0 : i32
    %2 = arith.cmpi ne, %1, %c0_i32_0 : i32
    scf.if %2 {
      %cst_24 = arith.constant 0xFF800000 : f32
      %44 = vector.broadcast %cst_24 : f32 to vector<256x1xf32>
      %c0_25 = arith.constant 0 : index
      %c0_26 = arith.constant 0 : index
      %45 = vector.load %arg8[%c0_25, %c0_26] : memref<256x1xf32, #tpu.memory_space<vmem>>, vector<256x1xf32>
      tpu.vector_store %arg8[%c0_25, %c0_26], %44 {strides = array<i32>} : memref<256x1xf32, #tpu.memory_space<vmem>>, vector<256x1xf32>,
      %cst_27 = arith.constant 0.000000e+00 : f32
      %46 = vector.broadcast %cst_27 : f32 to vector<256x1xf32>
      %c0_28 = arith.constant 0 : index
      %c0_29 = arith.constant 0 : index
      %47 = vector.load %arg9[%c0_28, %c0_29] : memref<256x1xf32, #tpu.memory_space<vmem>>, vector<256x1xf32>
      tpu.vector_store %arg9[%c0_28, %c0_29], %46 {strides = array<i32>} : memref<256x1xf32, #tpu.memory_space<vmem>>, vector<256x1xf32>,
      %c0_30 = arith.constant 0 : index
      %c0_31 = arith.constant 0 : index
      %48 = vector.load %arg2[%c0_30, %c0_31] : memref<256x128xbf16, #tpu.memory_space<vmem>>, vector<256x128xbf16>
      %cst_32 = arith.constant 2.000000e+00 : bf16
      %49 = vector.broadcast %cst_32 : bf16 to vector<256x128xbf16>
      %50 = arith.mulf %48, %49 : vector<256x128xbf16>
      %c0_33 = arith.constant 0 : index
      %c0_34 = arith.constant 0 : index
      %51 = vector.load %arg11[%c0_33, %c0_34] : memref<256x128xbf16, #tpu.memory_space<vmem>>, vector<256x128xbf16>
      tpu.vector_store %arg11[%c0_33, %c0_34], %50 {strides = array<i32>} : memref<256x128xbf16, #tpu.memory_space<vmem>>, vector<256x128xbf16>,
    } else {
    }
    %c0 = arith.constant 0 : index
    %c0_1 = arith.constant 0 : index
    %3 = vector.load %arg11[%c0, %c0_1] : memref<256x128xbf16, #tpu.memory_space<vmem>>, vector<256x128xbf16>
    %c0_2 = arith.constant 0 : index
    %c0_3 = arith.constant 0 : index
    %4 = vector.load %arg3[%c0_2, %c0_3] : memref<128x256xbf16, #tpu.memory_space<vmem>>, vector<128x256xbf16>
    %cst = arith.constant dense<0.000000e+00> : vector<256x256xf32>
    %5 = tpu.matmul %3, %4, %cst {dimension_numbers = #tpu.dot_dimension_numbers<[1], [0], [0], [1], [0, 0, 1, 1], [], []>} : vector<256x128xbf16>, vector<128x256xbf16>, vector<256x256xf32> -> vector<256x256xf32>
    %c0_4 = arith.constant 0 : index
    %c0_5 = arith.constant 0 : index
    %6 = vector.load %arg5[%c0_4, %c0_5] : memref<8x256xi32, #tpu.memory_space<vmem>>, vector<8x256xi32>
    %7 = tpu.concatenate %6, %6, %6, %6, %6, %6, %6, %6, %6, %6, %6, %6, %6, %6, %6, %6 in 0 : vector<8x256xi32>, vector<8x256xi32>, vector<8x256xi32>, vector<8x256xi32>, vector<8x256xi32>, vector<8x256xi32>, vector<8x256xi32>, vector<8x256xi32>, vector<8x256xi32>, vector<8x256xi32>, vector<8x256xi32>, vector<8x256xi32>, vector<8x256xi32>, vector<8x256xi32>, vector<8x256xi32>, vector<8x256xi32> -> vector<128x256xi32>
    %8 = tpu.concatenate %6, %6, %6, %6, %6, %6, %6, %6, %6, %6, %6, %6, %6, %6, %6, %6 in 0 : vector<8x256xi32>, vector<8x256xi32>, vector<8x256xi32>, vector<8x256xi32>, vector<8x256xi32>, vector<8x256xi32>, vector<8x256xi32>, vector<8x256xi32>, vector<8x256xi32>, vector<8x256xi32>, vector<8x256xi32>, vector<8x256xi32>, vector<8x256xi32>, vector<8x256xi32>, vector<8x256xi32>, vector<8x256xi32> -> vector<128x256xi32>
    %9 = tpu.concatenate %7, %8 in 0 : vector<128x256xi32>, vector<128x256xi32> -> vector<256x256xi32>
    %c0_6 = arith.constant 0 : index
    %c0_7 = arith.constant 0 : index
    %10 = vector.load %arg6[%c0_6, %c0_7] : memref<256x1xi32, #tpu.memory_space<vmem>>, vector<256x1xi32>
    %11 = vector.broadcast %10 : vector<256x1xi32> to vector<256x256xi32>
    %12 = arith.andi %9, %11 : vector<256x256xi32>
    %c0_i32_8 = arith.constant 0 : i32
    %13 = vector.broadcast %c0_i32_8 : i32 to vector<256x256xi32>
    %14 = arith.cmpi ne, %12, %13 : vector<256x256xi32>
    %c0_9 = arith.constant 0 : index
    %c0_10 = arith.constant 0 : index
    %15 = vector.load %arg4[%c0_9, %c0_10] : memref<1x256xf32, #tpu.memory_space<vmem>>, vector<1x256xf32>
    %16 = vector.broadcast %15 : vector<1x256xf32> to vector<256x256xf32>
    %17 = arith.subf %5, %16 : vector<256x256xf32>
    %cst_11 = arith.constant -1.000000e+09 : f32
    %18 = vector.broadcast %cst_11 : f32 to vector<256x256xf32>
    %19 = arith.select %14, %18, %17 : vector<256x256xi1>, vector<256x256xf32>
    %20 = arith.cmpi eq, %arg1, %arg0 : i32
    %21 = arith.extui %20 : i1 to i32
    %c0_i32_12 = arith.constant 0 : i32
    %22 = arith.cmpi ne, %21, %c0_i32_12 : i32
    scf.if %22 {
      %44 = tpu.iota {dimensions = array<i32: 0>} : vector<256x256xi32>
      %45 = tpu.iota {dimensions = array<i32: 1>} : vector<256x256xi32>
      %46 = arith.cmpi eq, %44, %45 : vector<256x256xi32>
      %cst_24 = arith.constant 0.000000e+00 : f32
      %47 = vector.broadcast %cst_24 : f32 to vector<256x256xf32>
      %48 = arith.select %46, %19, %47 : vector<256x256xi1>, vector<256x256xf32>
      %cst_25 = arith.constant dense<0.000000e+00> : vector<256xf32>
      %49 = vector.multi_reduction <add>, %48, %cst_25 [1] : vector<256x256xf32> to vector<256xf32>
      %50 = vector.shape_cast %49 : vector<256xf32> to vector<256x1xf32>
      %c0_26 = arith.constant 0 : index
      %c0_27 = arith.constant 0 : index
      %51 = vector.load %arg10[%c0_26, %c0_27] : memref<256x1xf32, #tpu.memory_space<vmem>>, vector<256x1xf32>
      tpu.vector_store %arg10[%c0_26, %c0_27], %50 {strides = array<i32>} : memref<256x1xf32, #tpu.memory_space<vmem>>, vector<256x1xf32>,
    } else {
    }
    %c0_13 = arith.constant 0 : index
    %c0_14 = arith.constant 0 : index
    %23 = vector.load %arg8[%c0_13, %c0_14] : memref<256x1xf32, #tpu.memory_space<vmem>>, vector<256x1xf32>
    %cst_15 = arith.constant dense<0xFF800000> : vector<256xf32>
    %24 = vector.multi_reduction <maximumf>, %19, %cst_15 [1] : vector<256x256xf32> to vector<256xf32>
    %25 = vector.shape_cast %24 : vector<256xf32> to vector<256x1xf32>
    %26 = arith.maximumf %23, %25 : vector<256x1xf32>
    %27 = vector.broadcast %26 : vector<256x1xf32> to vector<256x256xf32>
    %28 = arith.subf %19, %27 : vector<256x256xf32>
    %29 = arith.truncf %28 : vector<256x256xf32> to vector<256x256xbf16>
    %30 = math.exp %29 : vector<256x256xbf16>
    %31 = arith.subf %23, %26 : vector<256x1xf32>
    %32 = math.exp %31 : vector<256x1xf32>
    %c0_16 = arith.constant 0 : index
    %c0_17 = arith.constant 0 : index
    %33 = vector.load %arg9[%c0_16, %c0_17] : memref<256x1xf32, #tpu.memory_space<vmem>>, vector<256x1xf32>
    %34 = arith.mulf %32, %33 : vector<256x1xf32>
    %35 = arith.extf %30 : vector<256x256xbf16> to vector<256x256xf32>
    %cst_18 = arith.constant dense<0.000000e+00> : vector<256xf32>
    %36 = vector.multi_reduction <add>, %35, %cst_18 [1] : vector<256x256xf32> to vector<256xf32>
    %37 = vector.shape_cast %36 : vector<256xf32> to vector<256x1xf32>
    %38 = arith.addf %34, %37 : vector<256x1xf32>
    %c0_19 = arith.constant 0 : index
    %c0_20 = arith.constant 0 : index
    %39 = vector.load %arg9[%c0_19, %c0_20] : memref<256x1xf32, #tpu.memory_space<vmem>>, vector<256x1xf32>
    tpu.vector_store %arg9[%c0_19, %c0_20], %38 {strides = array<i32>} : memref<256x1xf32, #tpu.memory_space<vmem>>, vector<256x1xf32>,
    %c0_21 = arith.constant 0 : index
    %c0_22 = arith.constant 0 : index
    %40 = vector.load %arg8[%c0_21, %c0_22] : memref<256x1xf32, #tpu.memory_space<vmem>>, vector<256x1xf32>
    tpu.vector_store %arg8[%c0_21, %c0_22], %26 {strides = array<i32>} : memref<256x1xf32, #tpu.memory_space<vmem>>, vector<256x1xf32>,
    %c1_i32 = arith.constant 1 : i32
    %41 = arith.cmpi eq, %arg1, %c1_i32 : i32
    %42 = arith.extui %41 : i1 to i32
    %c0_i32_23 = arith.constant 0 : i32
    %43 = arith.cmpi ne, %42, %c0_i32_23 : i32
    scf.if %43 {
      %c0_24 = arith.constant 0 : index
      %c0_25 = arith.constant 0 : index
      %44 = vector.load %arg8[%c0_24, %c0_25] : memref<256x1xf32, #tpu.memory_space<vmem>>, vector<256x1xf32>
      %c0_26 = arith.constant 0 : index
      %c0_27 = arith.constant 0 : index
      %45 = vector.load %arg9[%c0_26, %c0_27] : memref<256x1xf32, #tpu.memory_space<vmem>>, vector<256x1xf32>
      %46 = math.log %45 : vector<256x1xf32>
      %47 = arith.addf %44, %46 : vector<256x1xf32>
      %c0_28 = arith.constant 0 : index
      %c0_29 = arith.constant 0 : index
      %48 = vector.load %arg10[%c0_28, %c0_29] : memref<256x1xf32, #tpu.memory_space<vmem>>, vector<256x1xf32>
      %49 = arith.subf %47, %48 : vector<256x1xf32>
      %c0_30 = arith.constant 0 : index
      %c0_31 = arith.constant 0 : index
      %50 = vector.load %arg7[%c0_30, %c0_31] : memref<256x1xf32, #tpu.memory_space<vmem>>, vector<256x1xf32>
      tpu.vector_store %arg7[%c0_30, %c0_31], %49 {strides = array<i32>} : memref<256x1xf32, #tpu.memory_space<vmem>>, vector<256x1xf32>,
    } else {
    }
    return
  }
  func.func @transform_0(%arg0: i32, %arg1: i32) -> (i32, i32) {
    %c0_i32 = arith.constant 0 : i32
    %c0_i32_0 = arith.constant 0 : i32
    return %arg0, %c0_i32 : i32, i32
  }
  func.func @transform_1(%arg0: i32, %arg1: i32) -> (i32, i32) {
    %c0_i32 = arith.constant 0 : i32
    %c0_i32_0 = arith.constant 0 : i32
    return %c0_i32, %arg1 : i32, i32
  }
  func.func @transform_2(%arg0: i32, %arg1: i32) -> (i32, i32) {
    %c0_i32 = arith.constant 0 : i32
    %c0_i32_0 = arith.constant 0 : i32
    return %c0_i32, %arg1 : i32, i32
  }
  func.func @transform_3(%arg0: i32, %arg1: i32) -> (i32, i32) {
    %c0_i32 = arith.constant 0 : i32
    return %arg0, %arg1 : i32, i32
  }
  func.func @transform_4(%arg0: i32, %arg1: i32) -> (i32, i32) {
    %c0_i32 = arith.constant 0 : i32
    %c0_i32_0 = arith.constant 0 : i32
    %c0_i32_1 = arith.constant 0 : i32
    return %c0_i32, %c0_i32_0 : i32, i32
  }
  func.func @transform_5(%arg0: i32, %arg1: i32) -> (i32, i32) {
    %c0_i32 = arith.constant 0 : i32
    %c0_i32_0 = arith.constant 0 : i32
    return %arg0, %c0_i32 : i32, i32
  }
}

</mosaic_0001>

<llo_original>
// kernel: _lambda_.1
$region0: #{_lambda_.1}
  #allocation0 [shape = 'u32[]', space=smem, size = 0x4, offset = 0x4, fixed_abs, tag = 'smem constant byte address 0x4 - core index']
  #allocation1 [shape = 'u32[144,128]{1,0:T(1,128)}', space=vmem, size = 0x12000, scoped, tag = 'internal scratch']
  #allocation2 [shape = 'f32[256,1]{1,0:T(8,128)}', space=vmem, size = 0x20000, scoped, tag = 'scratch operand']
  #allocation3 [shape = 'f32[256,1]{1,0:T(8,128)}', space=vmem, size = 0x20000, scoped, tag = 'scratch operand']
  #allocation4 [shape = 'f32[256,1]{1,0:T(8,128)}', space=vmem, size = 0x20000, scoped, tag = 'scratch operand']
  #allocation5 [shape = 'bf16[256,128]{1,0:T(16,128)(2,1)}', space=vmem, size = 0x10000, scoped, tag = 'scratch operand']
  %s0 = inlined_call_operand.hbm [shape: bf16[512,128], index: 0, kind: input, shape index: {}]
  %s1 = inlined_call_operand.hbm [shape: bf16[128,512], index: 1, kind: input, shape index: {}]
  %s2 = inlined_call_operand.hbm [shape: f32[1,512], index: 2, kind: input, shape index: {}]
  %s3 = inlined_call_operand.hbm [shape: u32[16,512], index: 3, kind: input, shape index: {}]
  %s4 = inlined_call_operand.hbm [shape: u32[256,1], index: 4, kind: input, shape index: {}]
  %s5 = inlined_call_operand.hbm [shape: f32[512,1], index: 5, kind: output, shape index: {}]
  %s6 = sld [smem:[#allocation0]]
  $region85: #{_lambda_.1} parent=0
    _
  %s8 = ssub.s32 1, %s6
  %s9 = scalar_select 0, %s8, %s6
  $region1: #{_lambda_.1} parent=0
    #allocation6 [shape = 'u8[131072]{0}', space=vmem, size = 0x20000, scoped, tag = 'input window, operand 0']
    #allocation7 [shape = 's32[2]{0}', space=sflag, size = 0x8, scoped, tag = 'scoped memory for _lambda_.1']
    #allocation8 [shape = 's32[2]{0}', space=sflag, size = 0x8, scoped, tag = 'scoped memory for _lambda_.1']
    #allocation9 [shape = 'u8[131072]{0}', space=vmem, size = 0x20000, scoped, tag = 'input window, operand 1']
    #allocation10 [shape = 's32[2]{0}', space=sflag, size = 0x8, scoped, tag = 'scoped memory for _lambda_.1']
    #allocation11 [shape = 'u8[2048]{0}', space=vmem, size = 0x800, scoped, tag = 'input window, operand 2']
    #allocation12 [shape = 'u8[16384]{0}', space=vmem, size = 0x4000, scoped, tag = 'input window, operand 3']
    #allocation13 [shape = 's32[2]{0}', space=sflag, size = 0x8, scoped, tag = 'scoped memory for _lambda_.1']
    #allocation14 [shape = 'u8[131072]{0}', space=vmem, size = 0x20000, scoped, tag = 'input window, operand 4, single buffered']
    #allocation15 [shape = 'u8[262144]{0}', space=vmem, size = 0x40000, scoped, tag = 'output window, operand 0']
    %10 = vsyncpa [#allocation7], 0
    %s11 = scalar_lea.sflag [#allocation7], 1
    %12 = vsyncpa %s11, 0
    %13 = vsyncpa [#allocation10], 0
    %s14 = scalar_lea.sflag [#allocation10], 1
    %15 = vsyncpa %s14, 0
    %16 = vsyncpa [#allocation13], 0
    %s17 = scalar_lea.sflag [#allocation13], 1
    %18 = vsyncpa %s17, 0
    %19 = vsyncpa [#allocation8], 0
    %s20 = scalar_lea.sflag [#allocation8], 1
    %21 = vsyncpa %s20, 0
    loop: start=0, step=1, limit=6
    $region2: #{_lambda_.1} parent=1 // loop_pre_header
      _
    $region3: #{_lambda_.1} parent=1 // loop_header
      %s23 = sphi 0, %s27
      %p24 = scmp.ge.s32.totalorder %s23, 6
      %s30 = sphi 0, %s42
      %s31 = sphi 0, %s38
      %s32 = sphi 0, %s30
      %s33 = sphi 0, %s31
      %s34 = sphi 0, %s32
      %s35 = sphi 0, %s33
      %s45 = sphi 0, %s47
      %s48 = sphi 0, %s45
      %s49 = sphi 0, %s48
      %s65 = sphi 0, %s49
      %s71 = sphi 0, %s73
      %s74 = sphi 0, %s71
      %s75 = sphi 0, %s74
      %s91 = sphi 0, %s75
      %s97 = sphi 0, %s99
      %s100 = sphi 0, %s97
      %s101 = sphi 0, %s100
      %s117 = sphi 0, %s101
      %s125 = sphi 0, %s127
      %s128 = sphi 0, %s125
      %s129 = sphi 0, %s128
      %s145 = sphi 0, %s129
      %s149 = sphi 0, %s149
      %s151 = sphi 0, %s149
      %s152 = sphi 0, %s151
      %s166 = sphi 0, %s152
      %s172 = sphi 0, %s174
      %s175 = sphi 0, %s172
      %s176 = sphi 0, %s175
      %s192 = sphi 0, %s176
    $region4: #{_lambda_.1} parent=1 // loop_header_branch
      %26 = sbr.rel (%p24) target = $region8
    $region5: #{_lambda_.1} parent=1 // loop_body
      %s28 = ssub.s32 %s23, 1
      %s29 = ssub.s32 %s23, 2
      %s36 = sadd.s32 1, %s31
      %p37 = scmp.ge.s32.totalorder %s36, 2
      %s38 = scalar_select %p37, 0, %s36
      %s39 = sadd.s32 1, %s30
      %s40 = scalar_select %p37, %s39, %s30
      %p41 = scmp.ge.s32.totalorder %s40, 2
      %s42 = scalar_select %p41, 0, %s40
      %s43 = ssub.s32 %s30, %s42
      %p44 = scmp.eq.s32.totalorder %s43, 0
      %s46 = sadd.s32 %s45, 1
      %s47 = scalar_select %p44, %s45, %s46
      %p50 = pneg %p44
      %p51 = scmp.eq.s32.totalorder %s23, 3
      %p52 = por %p50, %p51
      %p53 = scmp.ne.s32.totalorder %s45, %s48
      %p54 = scmp.eq.s32.totalorder %s23, 0
      %p55 = por %p53, %p54
      %p56 = scmp.ne.s32.totalorder %s45, %s48
      %p57 = scmp.eq.s32.totalorder %s28, 3
      %p58 = por %p56, %p57
      %p59 = scmp.ne.s32.totalorder %s48, %s49
      %p60 = scmp.eq.s32.totalorder %s28, 0
      %p61 = por %p59, %p60
      %p62 = scmp.ne.s32.totalorder %s48, %s49
      %p63 = scmp.eq.s32.totalorder %s29, 3
      %p64 = por %p62, %p63
      %p66 = scmp.ne.s32.totalorder %s49, %s65
      %p67 = scmp.eq.s32.totalorder %s29, 0
      %p68 = por %p66, %p67
      %s69 = ssub.s32 %s31, %s38
      %p70 = scmp.eq.s32.totalorder %s69, 0
      %s72 = sadd.s32 %s71, 1
      %s73 = scalar_select %p70, %s71, %s72
      %p76 = pneg %p70
      %p77 = scmp.eq.s32.totalorder %s23, 3
      %p78 = por %p76, %p77
      %p79 = scmp.ne.s32.totalorder %s71, %s74
      %p80 = scmp.eq.s32.totalorder %s23, 0
      %p81 = por %p79, %p80
      %p82 = scmp.ne.s32.totalorder %s71, %s74
      %p83 = scmp.eq.s32.totalorder %s28, 3
      %p84 = por %p82, %p83
      %p85 = scmp.ne.s32.totalorder %s74, %s75
      %p86 = scmp.eq.s32.totalorder %s28, 0
      %p87 = por %p85, %p86
      %p88 = scmp.ne.s32.totalorder %s74, %s75
      %p89 = scmp.eq.s32.totalorder %s29, 3
      %p90 = por %p88, %p89
      %p92 = scmp.ne.s32.totalorder %s75, %s91
      %p93 = scmp.eq.s32.totalorder %s29, 0
      %p94 = por %p92, %p93
      %s95 = ssub.s32 %s31, %s38
      %p96 = scmp.eq.s32.totalorder %s95, 0
      %s98 = sadd.s32 %s97, 1
      %s99 = scalar_select %p96, %s97, %s98
      %p102 = pneg %p96
      %p103 = scmp.eq.s32.totalorder %s23, 3
      %p104 = por %p102, %p103
      %p105 = scmp.ne.s32.totalorder %s97, %s100
      %p106 = scmp.eq.s32.totalorder %s23, 0
      %p107 = por %p105, %p106
      %p108 = scmp.ne.s32.totalorder %s97, %s100
      %p109 = scmp.eq.s32.totalorder %s28, 3
      %p110 = por %p108, %p109
      %p111 = scmp.ne.s32.totalorder %s100, %s101
      %p112 = scmp.eq.s32.totalorder %s28, 0
      %p113 = por %p111, %p112
      %p114 = scmp.ne.s32.totalorder %s100, %s101
      %p115 = scmp.eq.s32.totalorder %s29, 3
      %p116 = por %p114, %p115
      %p118 = scmp.ne.s32.totalorder %s101, %s117
      %p119 = scmp.eq.s32.totalorder %s29, 0
      %p120 = por %p118, %p119
      %s121 = ssub.s32 %s30, %s42
      %s122 = ssub.s32 %s31, %s38
      %s123 = sor.u32 %s121, %s122
      %p124 = scmp.eq.s32.totalorder %s123, 0
      %s126 = sadd.s32 %s125, 1
      %s127 = scalar_select %p124, %s125, %s126
      %p130 = pneg %p124
      %p131 = scmp.eq.s32.totalorder %s23, 3
      %p132 = por %p130, %p131
      %p133 = scmp.ne.s32.totalorder %s125, %s128
      %p134 = scmp.eq.s32.totalorder %s23, 0
      %p135 = por %p133, %p134
      %p136 = scmp.ne.s32.totalorder %s125, %s128
      %p137 = scmp.eq.s32.totalorder %s28, 3
      %p138 = por %p136, %p137
      %p139 = scmp.ne.s32.totalorder %s128, %s129
      %p140 = scmp.eq.s32.totalorder %s28, 0
      %p141 = por %p139, %p140
      %p142 = scmp.ne.s32.totalorder %s128, %s129
      %p143 = scmp.eq.s32.totalorder %s29, 3
      %p144 = por %p142, %p143
      %p146 = scmp.ne.s32.totalorder %s129, %s145
      %p147 = scmp.eq.s32.totalorder %s29, 0
      %p148 = por %p146, %p147
      %s150 = sadd.s32 %s149, 1
      %p153 = scmp.eq.s32.totalorder %s23, 3
      %p154 = scmp.ne.s32.totalorder %s149, %s151
      %p155 = scmp.eq.s32.totalorder %s23, 0
      %p156 = por %p154, %p155
      %p157 = scmp.ne.s32.totalorder %s149, %s151
      %p158 = scmp.eq.s32.totalorder %s28, 3
      %p159 = por %p157, %p158
      %p160 = scmp.ne.s32.totalorder %s151, %s152
      %p161 = scmp.eq.s32.totalorder %s28, 0
      %p162 = por %p160, %p161
      %p163 = scmp.ne.s32.totalorder %s151, %s152
      %p164 = scmp.eq.s32.totalorder %s29, 3
      %p165 = por %p163, %p164
      %p167 = scmp.ne.s32.totalorder %s152, %s166
      %p168 = scmp.eq.s32.totalorder %s29, 0
      %p169 = por %p167, %p168
      %s170 = ssub.s32 %s30, %s42
      %p171 = scmp.eq.s32.totalorder %s170, 0
      %s173 = sadd.s32 %s172, 1
      %s174 = scalar_select %p171, %s172, %s173
      %p177 = pneg %p171
      %p178 = scmp.eq.s32.totalorder %s23, 3
      %p179 = por %p177, %p178
      %p180 = scmp.ne.s32.totalorder %s172, %s175
      %p181 = scmp.eq.s32.totalorder %s23, 0
      %p182 = por %p180, %p181
      %p183 = scmp.ne.s32.totalorder %s172, %s175
      %p184 = scmp.eq.s32.totalorder %s28, 3
      %p185 = por %p183, %p184
      %p186 = scmp.ne.s32.totalorder %s175, %s176
      %p187 = scmp.eq.s32.totalorder %s28, 0
      %p188 = por %p186, %p187
      %p189 = scmp.ne.s32.totalorder %s175, %s176
      %p190 = scmp.eq.s32.totalorder %s29, 3
      %p191 = por %p189, %p190
      %p193 = scmp.ne.s32.totalorder %s176, %s192
      %p194 = scmp.eq.s32.totalorder %s29, 0
      %p195 = por %p193, %p194
      %p196 = scmp.le.s32.totalorder 1, %s23
      %p197 = scmp.lt.s32.totalorder %s23, 5
      %p198 = pnand %p196, %p197
      %p199 = pneg %p198
      // Predicated region
      $region9: #{_lambda_.1} parent=5 // pred_check
        _
      $region10: #{_lambda_.1} parent=5 // pred_check_branch
        %201 = sbr.rel (%p198) target = $region12
      $region11: #{_lambda_.1} parent=5 // pred_region
        %s202 = ssub.s32 %s23, 1
        // Predicated region
        $region13: #{_lambda_.1} parent=11 // pred_check
          %p203 = pneg %p162
        $region14: #{_lambda_.1} parent=11 // pred_check_branch
          %205 = sbr.rel (%p203) target = $region16
        $region15: #{_lambda_.1} parent=11 // pred_region
          %s207 = ssub.s32 4096, 4096
          %208 = vsyncadd [#allocation13], %s207
          %s209 = sshll.u32 [#allocation14], 4
          %s210 = int_to_ptr.vmem [resolvable:$true] %s209
          %215 = dma.hbm_to_vmem [thread:$0]  %s4, 4096, %s210, [#allocation13], 128, 128, 8
        $region16: #{_lambda_.1} parent=11 // pred_fallthru
          _
      $region12: #{_lambda_.1} parent=5 // pred_fallthru
        _
      %p216 = scmp.lt.s32.totalorder %s23, 4
      // Predicated region
      $region17: #{_lambda_.1} parent=5 // pred_check
        %p217 = pneg %p216
      $region18: #{_lambda_.1} parent=5 // pred_check_branch
        %219 = sbr.rel (%p217) target = $region20
      $region19: #{_lambda_.1} parent=5 // pred_region
        // Predicated region
        $region21: #{_lambda_.1} parent=19 // pred_check
          %p220 = pneg %p55
        $region22: #{_lambda_.1} parent=19 // pred_check_branch
          %222 = sbr.rel (%p220) target = $region24
        $region23: #{_lambda_.1} parent=19 // pred_region
          %s223 = sand.u32 %s45, 1
          %s224 = scalar_lea.sflag [#allocation7], %s223
          %s225 = sand.u32 %s45, 1
          %s226 = smul.addr %s225, 128
          %s227 = scalar_lea.vmem [#allocation6], %s226
          %s228 = smul.u32 32, %s30
          %s230 = ssub.s32 2048, 2048
          %231 = vsyncadd %s224, %s230
          %s232 = smul.addr %s228, 64
          %s233 = scalar_lea.hbm %s0, %s232
          %s234 = sshll.u32 %s227, 4
          %s235 = int_to_ptr.vmem [resolvable:$true] %s234
          %240 = dma.hbm_to_vmem [thread:$0]  %s233, 2048, %s235, %s224, 64, 64, 4
        $region24: #{_lambda_.1} parent=19 // pred_fallthru
          _
        // Predicated region
        $region25: #{_lambda_.1} parent=19 // pred_check
          %p241 = pneg %p81
        $region26: #{_lambda_.1} parent=19 // pred_check_branch
          %243 = sbr.rel (%p241) target = $region28
        $region27: #{_lambda_.1} parent=19 // pred_region
          %s244 = sand.u32 %s23, 1
          %s245 = scalar_lea.sflag [#allocation10], %s244
          %s246 = sand.u32 %s71, 1
          %s247 = smul.addr %s246, 128
          %s248 = scalar_lea.vmem [#allocation9], %s247
          %s249 = smul.u32 2, %s31
          %s251 = ssub.s32 2048, 2048
          %252 = vsyncadd %s245, %s251
          %s253 = smul.addr %s249, 64
          %s254 = scalar_lea.hbm %s1, %s253
          %s255 = sshll.u32 %s248, 4
          %s256 = int_to_ptr.vmem [resolvable:$true] %s255
          %261 = dma.hbm_to_vmem [thread:$0]  %s254, 2048, %s256, %s245, 256, 128, 8
        $region28: #{_lambda_.1} parent=19 // pred_fallthru
          _
        // Predicated region
        $region29: #{_lambda_.1} parent=19 // pred_check
          %p262 = pneg %p107
        $region30: #{_lambda_.1} parent=19 // pred_check_branch
          %264 = sbr.rel (%p262) target = $region32
        $region31: #{_lambda_.1} parent=19 // pred_region
          %s265 = sand.u32 %s23, 1
          %s266 = scalar_lea.sflag [#allocation10], %s265
          %s267 = sand.u32 %s97, 1
          %s268 = smul.addr %s267, 2
          %s269 = scalar_lea.vmem [#allocation11], %s268
          %s270 = smul.u32 2, %s31
          %s272 = ssub.s32 32, 32
          %273 = vsyncadd %s266, %s272
          %s274 = smul.addr %s270, 16
          %s275 = scalar_lea.hbm %s2, %s274
          %s277 = sshll.u32 %s269, 4
          %s278 = int_to_ptr.vmem [resolvable:$true] %s277
          %280 = dma.hbm_to_vmem [thread:$0]  %s275, 32, %s278, %s266
        $region32: #{_lambda_.1} parent=19 // pred_fallthru
          _
        // Predicated region
        $region33: #{_lambda_.1} parent=19 // pred_check
          %p281 = pneg %p135
        $region34: #{_lambda_.1} parent=19 // pred_check_branch
          %283 = sbr.rel (%p281) target = $region36
        $region35: #{_lambda_.1} parent=19 // pred_region
          %s284 = sand.u32 %s23, 1
          %s285 = scalar_lea.sflag [#allocation13], %s284
          %s286 = sand.u32 %s125, 1
          %s287 = smul.addr %s286, 16
          %s288 = scalar_lea.vmem [#allocation12], %s287
          %s289 = smul.u32 2, %s31
          %s291 = ssub.s32 256, 256
          %292 = vsyncadd %s285, %s291
          %s293 = smul.addr %s30, 4
          %s294 = sadd.s32 %s289, %s293
          %s295 = smul.addr %s294, 128
          %s296 = scalar_lea.hbm %s3, %s295
          %s298 = sshll.u32 %s288, 4
          %s299 = int_to_ptr.vmem [resolvable:$true] %s298
          %301 = dma.hbm_to_vmem [thread:$0]  %s296, 256, %s299, %s285
        $region36: #{_lambda_.1} parent=19 // pred_fallthru
          _
      $region20: #{_lambda_.1} parent=5 // pred_fallthru
        _
      %p302 = scmp.le.s32.totalorder 1, %s23
      %p303 = scmp.lt.s32.totalorder %s23, 5
      %p304 = pnand %p302, %p303
      %p305 = pneg %p304
      // Predicated region
      $region37: #{_lambda_.1} parent=5 // pred_check
        _
      $region38: #{_lambda_.1} parent=5 // pred_check_branch
        %307 = sbr.rel (%p304) target = $region40
      $region39: #{_lambda_.1} parent=5 // pred_region
        %s308 = ssub.s32 %s23, 1
        %s309 = sand.u32 %s48, 1
        %s310 = scalar_lea.sflag [#allocation7], %s309
        %s311 = sand.u32 %s48, 1
        %s312 = smul.addr %s311, 128
        %s313 = scalar_lea.vmem [#allocation6], %s312
        // Predicated region
        $region41: #{_lambda_.1} parent=39 // pred_check
          %p314 = pneg %p61
        $region42: #{_lambda_.1} parent=39 // pred_check_branch
          %316 = sbr.rel (%p314) target = $region44
        $region43: #{_lambda_.1} parent=39 // pred_region
          %317 = dma.done %s310, 2048
        $region44: #{_lambda_.1} parent=39 // pred_fallthru
          _
        %s318 = sand.u32 %s28, 1
        %s319 = scalar_lea.sflag [#allocation10], %s318
        %s320 = sand.u32 %s74, 1
        %s321 = smul.addr %s320, 128
        %s322 = scalar_lea.vmem [#allocation9], %s321
        // Predicated region
        $region45: #{_lambda_.1} parent=39 // pred_check
          %p323 = pneg %p87
        $region46: #{_lambda_.1} parent=39 // pred_check_branch
          %325 = sbr.rel (%p323) target = $region48
        $region47: #{_lambda_.1} parent=39 // pred_region
          %326 = dma.done %s319, 2048
        $region48: #{_lambda_.1} parent=39 // pred_fallthru
          _
        %s327 = sand.u32 %s28, 1
        %s328 = scalar_lea.sflag [#allocation10], %s327
        %s329 = sand.u32 %s100, 1
        %s330 = smul.addr %s329, 2
        %s331 = scalar_lea.vmem [#allocation11], %s330
        // Predicated region
        $region49: #{_lambda_.1} parent=39 // pred_check
          %p332 = pneg %p113
        $region50: #{_lambda_.1} parent=39 // pred_check_branch
          %334 = sbr.rel (%p332) target = $region52
        $region51: #{_lambda_.1} parent=39 // pred_region
          %335 = dma.done %s328, 32
        $region52: #{_lambda_.1} parent=39 // pred_fallthru
          _
        %s336 = sand.u32 %s28, 1
        %s337 = scalar_lea.sflag [#allocation13], %s336
        %s338 = sand.u32 %s128, 1
        %s339 = smul.addr %s338, 16
        %s340 = scalar_lea.vmem [#allocation12], %s339
        // Predicated region
        $region53: #{_lambda_.1} parent=39 // pred_check
          %p341 = pneg %p141
        $region54: #{_lambda_.1} parent=39 // pred_check_branch
          %343 = sbr.rel (%p341) target = $region56
        $region55: #{_lambda_.1} parent=39 // pred_region
          %344 = dma.done %s337, 256
        $region56: #{_lambda_.1} parent=39 // pred_fallthru
          _
        // Predicated region
        $region57: #{_lambda_.1} parent=39 // pred_check
          %p345 = pneg %p162
        $region58: #{_lambda_.1} parent=39 // pred_check_branch
          %347 = sbr.rel (%p345) target = $region60
        $region59: #{_lambda_.1} parent=39 // pred_region
          %348 = dma.done [#allocation13], 4096
        $region60: #{_lambda_.1} parent=39 // pred_fallthru
          _
        %s349 = sand.u32 %s48, 1
        %s350 = scalar_lea.sflag [#allocation7], %s349
        %s351 = sand.u32 %s48, 1
        %s352 = smul.addr %s351, 128
        %s353 = scalar_lea.vmem [#allocation6], %s352
        %p354 = pneg %p61
        %p355 = pneg %p58
        %s356 = sand.u32 %s28, 1
        %s357 = scalar_lea.sflag [#allocation10], %s356
        %s358 = sand.u32 %s74, 1
        %s359 = smul.addr %s358, 128
        %s360 = scalar_lea.vmem [#allocation9], %s359
        %p361 = pneg %p87
        %p362 = pneg %p84
        %s363 = sand.u32 %s28, 1
        %s364 = scalar_lea.sflag [#allocation10], %s363
        %s365 = sand.u32 %s100, 1
        %s366 = smul.addr %s365, 2
        %s367 = scalar_lea.vmem [#allocation11], %s366
        %p368 = pneg %p113
        %p369 = pneg %p110
        %s370 = sand.u32 %s28, 1
        %s371 = scalar_lea.sflag [#allocation13], %s370
        %s372 = sand.u32 %s128, 1
        %s373 = smul.addr %s372, 16
        %s374 = scalar_lea.vmem [#allocation12], %s373
        %p375 = pneg %p141
        %p376 = pneg %p138
        %p377 = pneg %p162
        %p378 = pneg %p159
        %p379 = pneg %p188
        %p380 = pneg %p185
        %s381 = sand.u32 %s175, 1
        %s382 = scalar_lea.sflag [#allocation8], %s381
        %s383 = sand.u32 %s175, 1
        %s384 = smul.addr %s383, 256
        %s385 = scalar_lea.vmem [#allocation15], %s384
        %s386 = smul.u32 32, %s32
        %s387 = smul.u32 2, %s33
        %s388 = smul.u32 2, %s33
        %s389 = smul.u32 2, %s33
        %s390 = smul.u32 32, %s32
        %p393 = scmp.eq.s32.totalorder %s33, 0
        // Predicated region
        $region61: #{_lambda_.1} parent=39 // pred_check
          %p394 = pneg %p393
        $region62: #{_lambda_.1} parent=39 // pred_check_branch
          %396 = sbr.rel (%p394) target = $region64
        $region63: #{_lambda_.1} parent=39 // pred_region
          %vm397 = vcmask 7168
          %398 = vst.msk [vmem:[#allocation2] sm:$0xff] %vm397, -inf
          %399 = vst.msk [vmem:[#allocation2 + $0x8] sm:$0xff] %vm397, -inf
          %400 = vst.msk [vmem:[#allocation2 + $0x10] sm:$0xff] %vm397, -inf
          %401 = vst.msk [vmem:[#allocation2 + $0x18] sm:$0xff] %vm397, -inf
          %402 = vst.msk [vmem:[#allocation2 + $0x20] sm:$0xff] %vm397, -inf
          %403 = vst.msk [vmem:[#allocation2 + $0x28] sm:$0xff] %vm397, -inf
          %404 = vst.msk [vmem:[#allocation2 + $0x30] sm:$0xff] %vm397, -inf
          %405 = vst.msk [vmem:[#allocation2 + $0x38] sm:$0xff] %vm397, -inf
          %406 = vst.msk [vmem:[#allocation2 + $0x40] sm:$0xff] %vm397, -inf
          %407 = vst.msk [vmem:[#allocation2 + $0x48] sm:$0xff] %vm397, -inf
          %408 = vst.msk [vmem:[#allocation2 + $0x50] sm:$0xff] %vm397, -inf
          %409 = vst.msk [vmem:[#allocation2 + $0x58] sm:$0xff] %vm397, -inf
          %410 = vst.msk [vmem:[#allocation2 + $0x60] sm:$0xff] %vm397, -inf
          %411 = vst.msk [vmem:[#allocation2 + $0x68] sm:$0xff] %vm397, -inf
          %412 = vst.msk [vmem:[#allocation2 + $0x70] sm:$0xff] %vm397, -inf
          %413 = vst.msk [vmem:[#allocation2 + $0x78] sm:$0xff] %vm397, -inf
          %414 = vst.msk [vmem:[#allocation2 + $0x80] sm:$0xff] %vm397, -inf
          %415 = vst.msk [vmem:[#allocation2 + $0x88] sm:$0xff] %vm397, -inf
          %416 = vst.msk [vmem:[#allocation2 + $0x90] sm:$0xff] %vm397, -inf
          %417 = vst.msk [vmem:[#allocation2 + $0x98] sm:$0xff] %vm397, -inf
          %418 = vst.msk [vmem:[#allocation2 + $0xa0] sm:$0xff] %vm397, -inf
          %419 = vst.msk [vmem:[#allocation2 + $0xa8] sm:$0xff] %vm397, -inf
          %420 = vst.msk [vmem:[#allocation2 + $0xb0] sm:$0xff] %vm397, -inf
          %421 = vst.msk [vmem:[#allocation2 + $0xb8] sm:$0xff] %vm397, -inf
          %422 = vst.msk [vmem:[#allocation2 + $0xc0] sm:$0xff] %vm397, -inf
          %423 = vst.msk [vmem:[#allocation2 + $0xc8] sm:$0xff] %vm397, -inf
          %424 = vst.msk [vmem:[#allocation2 + $0xd0] sm:$0xff] %vm397, -inf
          %425 = vst.msk [vmem:[#allocation2 + $0xd8] sm:$0xff] %vm397, -inf
          %426 = vst.msk [vmem:[#allocation2 + $0xe0] sm:$0xff] %vm397, -inf
          %427 = vst.msk [vmem:[#allocation2 + $0xe8] sm:$0xff] %vm397, -inf
          %428 = vst.msk [vmem:[#allocation2 + $0xf0] sm:$0xff] %vm397, -inf
          %429 = vst.msk [vmem:[#allocation2 + $0xf8] sm:$0xff] %vm397, -inf
          %430 = vst.msk [vmem:[#allocation3] sm:$0xff] %vm397, 0.0
          %431 = vst.msk [vmem:[#allocation3 + $0x8] sm:$0xff] %vm397, 0.0
          %432 = vst.msk [vmem:[#allocation3 + $0x10] sm:$0xff] %vm397, 0.0
          %433 = vst.msk [vmem:[#allocation3 + $0x18] sm:$0xff] %vm397, 0.0
          %434 = vst.msk [vmem:[#allocation3 + $0x20] sm:$0xff] %vm397, 0.0
          %435 = vst.msk [vmem:[#allocation3 + $0x28] sm:$0xff] %vm397, 0.0
          %436 = vst.msk [vmem:[#allocation3 + $0x30] sm:$0xff] %vm397, 0.0
          %437 = vst.msk [vmem:[#allocation3 + $0x38] sm:$0xff] %vm397, 0.0
          %438 = vst.msk [vmem:[#allocation3 + $0x40] sm:$0xff] %vm397, 0.0
          %439 = vst.msk [vmem:[#allocation3 + $0x48] sm:$0xff] %vm397, 0.0
          %440 = vst.msk [vmem:[#allocation3 + $0x50] sm:$0xff] %vm397, 0.0
          %441 = vst.msk [vmem:[#allocation3 + $0x58] sm:$0xff] %vm397, 0.0
          %442 = vst.msk [vmem:[#allocation3 + $0x60] sm:$0xff] %vm397, 0.0
          %443 = vst.msk [vmem:[#allocation3 + $0x68] sm:$0xff] %vm397, 0.0
          %444 = vst.msk [vmem:[#allocation3 + $0x70] sm:$0xff] %vm397, 0.0
          %445 = vst.msk [vmem:[#allocation3 + $0x78] sm:$0xff] %vm397, 0.0
          %446 = vst.msk [vmem:[#allocation3 + $0x80] sm:$0xff] %vm397, 0.0
          %447 = vst.msk [vmem:[#allocation3 + $0x88] sm:$0xff] %vm397, 0.0
          %448 = vst.msk [vmem:[#allocation3 + $0x90] sm:$0xff] %vm397, 0.0
          %449 = vst.msk [vmem:[#allocation3 + $0x98] sm:$0xff] %vm397, 0.0
          %450 = vst.msk [vmem:[#allocation3 + $0xa0] sm:$0xff] %vm397, 0.0
          %451 = vst.msk [vmem:[#allocation3 + $0xa8] sm:$0xff] %vm397, 0.0
          %452 = vst.msk [vmem:[#allocation3 + $0xb0] sm:$0xff] %vm397, 0.0
          %453 = vst.msk [vmem:[#allocation3 + $0xb8] sm:$0xff] %vm397, 0.0
          %454 = vst.msk [vmem:[#allocation3 + $0xc0] sm:$0xff] %vm397, 0.0
          %455 = vst.msk [vmem:[#allocation3 + $0xc8] sm:$0xff] %vm397, 0.0
          %456 = vst.msk [vmem:[#allocation3 + $0xd0] sm:$0xff] %vm397, 0.0
          %457 = vst.msk [vmem:[#allocation3 + $0xd8] sm:$0xff] %vm397, 0.0
          %458 = vst.msk [vmem:[#allocation3 + $0xe0] sm:$0xff] %vm397, 0.0
          %459 = vst.msk [vmem:[#allocation3 + $0xe8] sm:$0xff] %vm397, 0.0
          %460 = vst.msk [vmem:[#allocation3 + $0xf0] sm:$0xff] %vm397, 0.0
          %461 = vst.msk [vmem:[#allocation3 + $0xf8] sm:$0xff] %vm397, 0.0
          %v462 = vld [vmem:[%s313] sm:$0xf]
          %v463 = vld [vmem:[%s313 + $0x4] sm:$0xf]
          %v464 = vld [vmem:[%s313 + $0x8] sm:$0xf]
          %v465 = vld [vmem:[%s313 + $0xc] sm:$0xf]
          %v466 = vld [vmem:[%s313 + $0x10] sm:$0xf]
          %v467 = vld [vmem:[%s313 + $0x14] sm:$0xf]
          %v468 = vld [vmem:[%s313 + $0x18] sm:$0xf]
          %v469 = vld [vmem:[%s313 + $0x1c] sm:$0xf]
          %v470 = vld [vmem:[%s313 + $0x20] sm:$0xf]
          %v471 = vld [vmem:[%s313 + $0x24] sm:$0xf]
          %v472 = vld [vmem:[%s313 + $0x28] sm:$0xf]
          %v473 = vld [vmem:[%s313 + $0x2c] sm:$0xf]
          %v474 = vld [vmem:[%s313 + $0x30] sm:$0xf]
          %v475 = vld [vmem:[%s313 + $0x34] sm:$0xf]
          %v476 = vld [vmem:[%s313 + $0x38] sm:$0xf]
          %v477 = vld [vmem:[%s313 + $0x3c] sm:$0xf]
          %v478 = vld [vmem:[%s313 + $0x40] sm:$0xf]
          %v479 = vld [vmem:[%s313 + $0x44] sm:$0xf]
          %v480 = vld [vmem:[%s313 + $0x48] sm:$0xf]
          %v481 = vld [vmem:[%s313 + $0x4c] sm:$0xf]
          %v482 = vld [vmem:[%s313 + $0x50] sm:$0xf]
          %v483 = vld [vmem:[%s313 + $0x54] sm:$0xf]
          %v484 = vld [vmem:[%s313 + $0x58] sm:$0xf]
          %v485 = vld [vmem:[%s313 + $0x5c] sm:$0xf]
          %v486 = vld [vmem:[%s313 + $0x60] sm:$0xf]
          %v487 = vld [vmem:[%s313 + $0x64] sm:$0xf]
          %v488 = vld [vmem:[%s313 + $0x68] sm:$0xf]
          %v489 = vld [vmem:[%s313 + $0x6c] sm:$0xf]
          %v490 = vld [vmem:[%s313 + $0x70] sm:$0xf]
          %v491 = vld [vmem:[%s313 + $0x74] sm:$0xf]
          %v492 = vld [vmem:[%s313 + $0x78] sm:$0xf]
          %v493 = vld [vmem:[%s313 + $0x7c] sm:$0xf]
          %v494 = vmul.bf16 %v462, 1073758208
          %v495 = vmul.bf16 %v463, 1073758208
          %v496 = vmul.bf16 %v464, 1073758208
          %v497 = vmul.bf16 %v465, 1073758208
          %v498 = vmul.bf16 %v466, 1073758208
          %v499 = vmul.bf16 %v467, 1073758208
          %v500 = vmul.bf16 %v468, 1073758208
          %v501 = vmul.bf16 %v469, 1073758208
          %v502 = vmul.bf16 %v470, 1073758208
          %v503 = vmul.bf16 %v471, 1073758208
          %v504 = vmul.bf16 %v472, 1073758208
          %v505 = vmul.bf16 %v473, 1073758208
          %v506 = vmul.bf16 %v474, 1073758208
          %v507 = vmul.bf16 %v475, 1073758208
          %v508 = vmul.bf16 %v476, 1073758208
          %v509 = vmul.bf16 %v477, 1073758208
          %v510 = vmul.bf16 %v478, 1073758208
          %v511 = vmul.bf16 %v479, 1073758208
          %v512 = vmul.bf16 %v480, 1073758208
          %v513 = vmul.bf16 %v481, 1073758208
          %v514 = vmul.bf16 %v482, 1073758208
          %v515 = vmul.bf16 %v483, 1073758208
          %v516 = vmul.bf16 %v484, 1073758208
          %v517 = vmul.bf16 %v485, 1073758208
          %v518 = vmul.bf16 %v486, 1073758208
          %v519 = vmul.bf16 %v487, 1073758208
          %v520 = vmul.bf16 %v488, 1073758208
          %v521 = vmul.bf16 %v489, 1073758208
          %v522 = vmul.bf16 %v490, 1073758208
          %v523 = vmul.bf16 %v491, 1073758208
          %v524 = vmul.bf16 %v492, 1073758208
          %v525 = vmul.bf16 %v493, 1073758208
          %v558 = vunpack.c.l.b16 %v494
          %v559 = vunpack.c.l.b16 %v495
          %v560 = vunpack.c.l.b16 %v496
          %v561 = vunpack.c.l.b16 %v497
          %v562 = vunpack.c.l.b16 %v498
          %v563 = vunpack.c.l.b16 %v499
          %v564 = vunpack.c.l.b16 %v500
          %v565 = vunpack.c.l.b16 %v501
          %v566 = vunpack.c.l.b16 %v502
          %v567 = vunpack.c.l.b16 %v503
          %v568 = vunpack.c.l.b16 %v504
          %v569 = vunpack.c.l.b16 %v505
          %v570 = vunpack.c.l.b16 %v506
          %v571 = vunpack.c.l.b16 %v507
          %v572 = vunpack.c.l.b16 %v508
          %v573 = vunpack.c.l.b16 %v509
          %v574 = vunpack.c.l.b16 %v510
          %v575 = vunpack.c.l.b16 %v511
          %v576 = vunpack.c.l.b16 %v512
          %v577 = vunpack.c.l.b16 %v513
          %v578 = vunpack.c.l.b16 %v514
          %v579 = vunpack.c.l.b16 %v515
          %v580 = vunpack.c.l.b16 %v516
          %v581 = vunpack.c.l.b16 %v517
          %v582 = vunpack.c.l.b16 %v518
          %v583 = vunpack.c.l.b16 %v519
          %v584 = vunpack.c.l.b16 %v520
          %v585 = vunpack.c.l.b16 %v521
          %v586 = vunpack.c.l.b16 %v522
          %v587 = vunpack.c.l.b16 %v523
          %v588 = vunpack.c.l.b16 %v524
          %v589 = vunpack.c.l.b16 %v525
          %v590 = vpack.c.b16 %v559, %v558
          %v591 = vpack.c.b16 %v561, %v560
          %v592 = vpack.c.b16 %v563, %v562
          %v593 = vpack.c.b16 %v565, %v564
          %v594 = vpack.c.b16 %v567, %v566
          %v595 = vpack.c.b16 %v569, %v568
          %v596 = vpack.c.b16 %v571, %v570
          %v597 = vpack.c.b16 %v573, %v572
          %v598 = vpack.c.b16 %v575, %v574
          %v599 = vpack.c.b16 %v577, %v576
          %v600 = vpack.c.b16 %v579, %v578
          %v601 = vpack.c.b16 %v581, %v580
          %v602 = vpack.c.b16 %v583, %v582
          %v603 = vpack.c.b16 %v585, %v584
          %v604 = vpack.c.b16 %v587, %v586
          %v605 = vpack.c.b16 %v589, %v588
          %622 = vst [vmem:[#allocation5] sm:$0xff] %v590
          %623 = vst [vmem:[#allocation5 + $0x8] sm:$0xff] %v591
          %624 = vst [vmem:[#allocation5 + $0x10] sm:$0xff] %v592
          %625 = vst [vmem:[#allocation5 + $0x18] sm:$0xff] %v593
          %626 = vst [vmem:[#allocation5 + $0x20] sm:$0xff] %v594
          %627 = vst [vmem:[#allocation5 + $0x28] sm:$0xff] %v595
          %628 = vst [vmem:[#allocation5 + $0x30] sm:$0xff] %v596
          %629 = vst [vmem:[#allocation5 + $0x38] sm:$0xff] %v597
          %630 = vst [vmem:[#allocation5 + $0x40] sm:$0xff] %v598
          %631 = vst [vmem:[#allocation5 + $0x48] sm:$0xff] %v599
          %632 = vst [vmem:[#allocation5 + $0x50] sm:$0xff] %v600
          %633 = vst [vmem:[#allocation5 + $0x58] sm:$0xff] %v601
          %634 = vst [vmem:[#allocation5 + $0x60] sm:$0xff] %v602
          %635 = vst [vmem:[#allocation5 + $0x68] sm:$0xff] %v603
          %636 = vst [vmem:[#allocation5 + $0x70] sm:$0xff] %v604
          %637 = vst [vmem:[#allocation5 + $0x78] sm:$0xff] %v605
        $region64: #{_lambda_.1} parent=39 // pred_fallthru
          _
        %v638 = vld [vmem:[#allocation5] sm:$0xff]
        %v639 = vld [vmem:[#allocation5 + $0x8] sm:$0xff]
        %v640 = vld [vmem:[#allocation5 + $0x10] sm:$0xff]
        %v641 = vld [vmem:[#allocation5 + $0x18] sm:$0xff]
        %v642 = vld [vmem:[#allocation5 + $0x20] sm:$0xff]
        %v643 = vld [vmem:[#allocation5 + $0x28] sm:$0xff]
        %v644 = vld [vmem:[#allocation5 + $0x30] sm:$0xff]
        %v645 = vld [vmem:[#allocation5 + $0x38] sm:$0xff]
        %v646 = vld [vmem:[#allocation5 + $0x40] sm:$0xff]
        %v647 = vld [vmem:[#allocation5 + $0x48] sm:$0xff]
        %v648 = vld [vmem:[#allocation5 + $0x50] sm:$0xff]
        %v649 = vld [vmem:[#allocation5 + $0x58] sm:$0xff]
        %v650 = vld [vmem:[#allocation5 + $0x60] sm:$0xff]
        %v651 = vld [vmem:[#allocation5 + $0x68] sm:$0xff]
        %v652 = vld [vmem:[#allocation5 + $0x70] sm:$0xff]
        %v653 = vld [vmem:[#allocation5 + $0x78] sm:$0xff]
        %v654 = vld [vmem:[%s322] sm:$0xff]
        %v655 = vld [vmem:[%s322 + $0x8] sm:$0xff]
        %v656 = vld [vmem:[%s322 + $0x10] sm:$0xff]
        %v657 = vld [vmem:[%s322 + $0x18] sm:$0xff]
        %v658 = vld [vmem:[%s322 + $0x20] sm:$0xff]
        %v659 = vld [vmem:[%s322 + $0x28] sm:$0xff]
        %v660 = vld [vmem:[%s322 + $0x30] sm:$0xff]
        %v661 = vld [vmem:[%s322 + $0x38] sm:$0xff]
        %v662 = vld [vmem:[%s322 + $0x40] sm:$0xff]
        %v663 = vld [vmem:[%s322 + $0x48] sm:$0xff]
        %v664 = vld [vmem:[%s322 + $0x50] sm:$0xff]
        %v665 = vld [vmem:[%s322 + $0x58] sm:$0xff]
        %v666 = vld [vmem:[%s322 + $0x60] sm:$0xff]
        %v667 = vld [vmem:[%s322 + $0x68] sm:$0xff]
        %v668 = vld [vmem:[%s322 + $0x70] sm:$0xff]
        %v669 = vld [vmem:[%s322 + $0x78] sm:$0xff]
        %v686 = vunpack.c.l.b16 %v654
        %v687 = vunpack.c.h.b16 %v654
        %v688 = vunpack.c.l.b16 %v655
        %v689 = vunpack.c.h.b16 %v655
        %v690 = vunpack.c.l.b16 %v656
        %v691 = vunpack.c.h.b16 %v656
        %v692 = vunpack.c.l.b16 %v657
        %v693 = vunpack.c.h.b16 %v657
        %v694 = vunpack.c.l.b16 %v658
        %v695 = vunpack.c.h.b16 %v658
        %v696 = vunpack.c.l.b16 %v659
        %v697 = vunpack.c.h.b16 %v659
        %v698 = vunpack.c.l.b16 %v660
        %v699 = vunpack.c.h.b16 %v660
        %v700 = vunpack.c.l.b16 %v661
        %v701 = vunpack.c.h.b16 %v661
        %v702 = vunpack.c.l.b16 %v662
        %v703 = vunpack.c.h.b16 %v662
        %v704 = vunpack.c.l.b16 %v663
        %v705 = vunpack.c.h.b16 %v663
        %v706 = vunpack.c.l.b16 %v664
        %v707 = vunpack.c.h.b16 %v664
        %v708 = vunpack.c.l.b16 %v665
        %v709 = vunpack.c.h.b16 %v665
        %v710 = vunpack.c.l.b16 %v666
        %v711 = vunpack.c.h.b16 %v666
        %v712 = vunpack.c.l.b16 %v667
        %v713 = vunpack.c.h.b16 %v667
        %v714 = vunpack.c.l.b16 %v668
        %v715 = vunpack.c.h.b16 %v668
        %v716 = vunpack.c.l.b16 %v669
        %v717 = vunpack.c.h.b16 %v669
        %v718 = vpack.c.b16 %v688, %v686
        %v719 = vpack.c.b16 %v689, %v687
        %v720 = vpack.c.b16 %v692, %v690
        %v721 = vpack.c.b16 %v693, %v691
        %v722 = vpack.c.b16 %v696, %v694
        %v723 = vpack.c.b16 %v697, %v695
        %v724 = vpack.c.b16 %v700, %v698
        %v725 = vpack.c.b16 %v701, %v699
        %v726 = vpack.c.b16 %v704, %v702
        %v727 = vpack.c.b16 %v705, %v703
        %v728 = vpack.c.b16 %v708, %v706
        %v729 = vpack.c.b16 %v709, %v707
        %v730 = vpack.c.b16 %v712, %v710
        %v731 = vpack.c.b16 %v713, %v711
        %v732 = vpack.c.b16 %v716, %v714
        %v733 = vpack.c.b16 %v717, %v715
        %750 = vmatprep.subr.bf16.mxu0 %v719
        %751 = vmatpush1.bf16.msra.mxu0 %v718
        %752 = vmatprep.subr.bf16.mxu0 %v721
        %753 = vmatpush1.bf16.msra.mxu0 %v720
        %754 = vmatprep.subr.bf16.mxu0 %v723
        %755 = vmatpush1.bf16.msra.mxu0 %v722
        %756 = vmatprep.subr.bf16.mxu0 %v725
        %757 = vmatpush1.bf16.msra.mxu0 %v724
        %758 = vmatprep.subr.bf16.mxu0 %v727
        %759 = vmatpush1.bf16.msra.mxu0 %v726
        %760 = vmatprep.subr.bf16.mxu0 %v729
        %761 = vmatpush1.bf16.msra.mxu0 %v728
        %762 = vmatprep.subr.bf16.mxu0 %v731
        %763 = vmatpush1.bf16.msra.mxu0 %v730
        %764 = vmatprep.subr.bf16.mxu0 %v733
        %765 = vmatpush1.bf16.msra.mxu0 %v732
        %766 = vmatprep.subr.bf16.mxu0 0
        %767 = vmatpush1.bf16.msra.mxu0 0
        %768 = vmatprep.subr.bf16.mxu0 0
        %769 = vmatpush1.bf16.msra.mxu0 0
        %770 = vmatprep.subr.bf16.mxu0 0
        %771 = vmatpush1.bf16.msra.mxu0 0
        %772 = vmatprep.subr.bf16.mxu0 0
        %773 = vmatpush1.bf16.msra.mxu0 0
        %774 = vmatprep.subr.bf16.mxu0 0
        %775 = vmatpush1.bf16.msra.mxu0 0
        %776 = vmatprep.subr.bf16.mxu0 0
        %777 = vmatpush1.bf16.msra.mxu0 0
        %778 = vmatprep.subr.bf16.mxu0 0
        %779 = vmatpush1.bf16.msra.mxu0 0
        %780 = vmatprep.subr.bf16.mxu0 0
        %781 = vmatpush1.bf16.msra.mxu0 0
        %782 = vmatprep.mubr.bf16.mxu0 0
        %783 = vmatmul.mubr.bf16.gmra.mrb[0].mxu0 %v638
        %v784 = vpop.f32.mrb[0].mxu0
        %v785 = vadd.f32 0.0, %v784
        %v786 = vpop.f32.mrb[0].mxu0
        %v787 = vadd.f32 0.0, %v786
        %v788 = vpop.f32.mrb[0].mxu0
        %v789 = vadd.f32 0.0, %v788
        %v790 = vpop.f32.mrb[0].mxu0
        %v791 = vadd.f32 0.0, %v790
        %792 = vmatprep.mubr.bf16.mxu0 0
        %793 = vmatmul.mubr.bf16.gmra.mrb[0].mxu0 %v639
        %v794 = vpop.f32.mrb[0].mxu0
        %v795 = vadd.f32 0.0, %v794
        %v796 = vpop.f32.mrb[0].mxu0
        %v797 = vadd.f32 0.0, %v796
        %v798 = vpop.f32.mrb[0].mxu0
        %v799 = vadd.f32 0.0, %v798
        %v800 = vpop.f32.mrb[0].mxu0
        %v801 = vadd.f32 0.0, %v800
        %802 = vmatprep.mubr.bf16.mxu0 0
        %803 = vmatmul.mubr.bf16.gmra.mrb[0].mxu0 %v640
        %v804 = vpop.f32.mrb[0].mxu0
        %v805 = vadd.f32 0.0, %v804
        %v806 = vpop.f32.mrb[0].mxu0
        %v807 = vadd.f32 0.0, %v806
        %v808 = vpop.f32.mrb[0].mxu0
        %v809 = vadd.f32 0.0, %v808
        %v810 = vpop.f32.mrb[0].mxu0
        %v811 = vadd.f32 0.0, %v810
        %812 = vmatprep.mubr.bf16.mxu0 0
        %813 = vmatmul.mubr.bf16.gmra.mrb[0].mxu0 %v641
        %v814 = vpop.f32.mrb[0].mxu0
        %v815 = vadd.f32 0.0, %v814
        %v816 = vpop.f32.mrb[0].mxu0
        %v817 = vadd.f32 0.0, %v816
        %v818 = vpop.f32.mrb[0].mxu0
        %v819 = vadd.f32 0.0, %v818
        %v820 = vpop.f32.mrb[0].mxu0
        %v821 = vadd.f32 0.0, %v820
        %822 = vmatprep.mubr.bf16.mxu0 0
        %823 = vmatmul.mubr.bf16.gmra.mrb[0].mxu0 %v642
        %v824 = vpop.f32.mrb[0].mxu0
        %v825 = vadd.f32 0.0, %v824
        %v826 = vpop.f32.mrb[0].mxu0
        %v827 = vadd.f32 0.0, %v826
        %v828 = vpop.f32.mrb[0].mxu0
        %v829 = vadd.f32 0.0, %v828
        %v830 = vpop.f32.mrb[0].mxu0
        %v831 = vadd.f32 0.0, %v830
        %832 = vmatprep.mubr.bf16.mxu0 0
        %833 = vmatmul.mubr.bf16.gmra.mrb[0].mxu0 %v643
        %v834 = vpop.f32.mrb[0].mxu0
        %v835 = vadd.f32 0.0, %v834
        %v836 = vpop.f32.mrb[0].mxu0
        %v837 = vadd.f32 0.0, %v836
        %v838 = vpop.f32.mrb[0].mxu0
        %v839 = vadd.f32 0.0, %v838
        %v840 = vpop.f32.mrb[0].mxu0
        %v841 = vadd.f32 0.0, %v840
        %842 = vmatprep.mubr.bf16.mxu0 0
        %843 = vmatmul.mubr.bf16.gmra.mrb[0].mxu0 %v644
        %v844 = vpop.f32.mrb[0].mxu0
        %v845 = vadd.f32 0.0, %v844
        %v846 = vpop.f32.mrb[0].mxu0
        %v847 = vadd.f32 0.0, %v846
        %v848 = vpop.f32.mrb[0].mxu0
        %v849 = vadd.f32 0.0, %v848
        %v850 = vpop.f32.mrb[0].mxu0
        %v851 = vadd.f32 0.0, %v850
        %852 = vmatprep.mubr.bf16.mxu0 0
        %853 = vmatmul.mubr.bf16.gmra.mrb[0].mxu0 %v645
        %v854 = vpop.f32.mrb[0].mxu0
        %v855 = vadd.f32 0.0, %v854
        %v856 = vpop.f32.mrb[0].mxu0
        %v857 = vadd.f32 0.0, %v856
        %v858 = vpop.f32.mrb[0].mxu0
        %v859 = vadd.f32 0.0, %v858
        %v860 = vpop.f32.mrb[0].mxu0
        %v861 = vadd.f32 0.0, %v860
        %862 = vmatprep.mubr.bf16.mxu0 0
        %863 = vmatmul.mubr.bf16.gmra.mrb[0].mxu0 %v646
        %v864 = vpop.f32.mrb[0].mxu0
        %v865 = vadd.f32 0.0, %v864
        %v866 = vpop.f32.mrb[0].mxu0
        %v867 = vadd.f32 0.0, %v866
        %v868 = vpop.f32.mrb[0].mxu0
        %v869 = vadd.f32 0.0, %v868
        %v870 = vpop.f32.mrb[0].mxu0
        %v871 = vadd.f32 0.0, %v870
        %872 = vmatprep.mubr.bf16.mxu0 0
        %873 = vmatmul.mubr.bf16.gmra.mrb[0].mxu0 %v647
        %v874 = vpop.f32.mrb[0].mxu0
        %v875 = vadd.f32 0.0, %v874
        %v876 = vpop.f32.mrb[0].mxu0
        %v877 = vadd.f32 0.0, %v876
        %v878 = vpop.f32.mrb[0].mxu0
        %v879 = vadd.f32 0.0, %v878
        %v880 = vpop.f32.mrb[0].mxu0
        %v881 = vadd.f32 0.0, %v880
        %882 = vmatprep.mubr.bf16.mxu0 0
        %883 = vmatmul.mubr.bf16.gmra.mrb[0].mxu0 %v648
        %v884 = vpop.f32.mrb[0].mxu0
        %v885 = vadd.f32 0.0, %v884
        %v886 = vpop.f32.mrb[0].mxu0
        %v887 = vadd.f32 0.0, %v886
        %v888 = vpop.f32.mrb[0].mxu0
        %v889 = vadd.f32 0.0, %v888
        %v890 = vpop.f32.mrb[0].mxu0
        %v891 = vadd.f32 0.0, %v890
        %892 = vmatprep.mubr.bf16.mxu0 0
        %893 = vmatmul.mubr.bf16.gmra.mrb[0].mxu0 %v649
        %v894 = vpop.f32.mrb[0].mxu0
        %v895 = vadd.f32 0.0, %v894
        %v896 = vpop.f32.mrb[0].mxu0
        %v897 = vadd.f32 0.0, %v896
        %v898 = vpop.f32.mrb[0].mxu0
        %v899 = vadd.f32 0.0, %v898
        %v900 = vpop.f32.mrb[0].mxu0
        %v901 = vadd.f32 0.0, %v900
        %902 = vmatprep.mubr.bf16.mxu0 0
        %903 = vmatmul.mubr.bf16.gmra.mrb[0].mxu0 %v650
        %v904 = vpop.f32.mrb[0].mxu0
        %v905 = vadd.f32 0.0, %v904
        %v906 = vpop.f32.mrb[0].mxu0
        %v907 = vadd.f32 0.0, %v906
        %v908 = vpop.f32.mrb[0].mxu0
        %v909 = vadd.f32 0.0, %v908
        %v910 = vpop.f32.mrb[0].mxu0
        %v911 = vadd.f32 0.0, %v910
        %912 = vmatprep.mubr.bf16.mxu0 0
        %913 = vmatmul.mubr.bf16.gmra.mrb[0].mxu0 %v651
        %v914 = vpop.f32.mrb[0].mxu0
        %v915 = vadd.f32 0.0, %v914
        %v916 = vpop.f32.mrb[0].mxu0
        %v917 = vadd.f32 0.0, %v916
        %v918 = vpop.f32.mrb[0].mxu0
        %v919 = vadd.f32 0.0, %v918
        %v920 = vpop.f32.mrb[0].mxu0
        %v921 = vadd.f32 0.0, %v920
        %922 = vmatprep.mubr.bf16.mxu0 0
        %923 = vmatmul.mubr.bf16.gmra.mrb[0].mxu0 %v652
        %v924 = vpop.f32.mrb[0].mxu0
        %v925 = vadd.f32 0.0, %v924
        %v926 = vpop.f32.mrb[0].mxu0
        %v927 = vadd.f32 0.0, %v926
        %v928 = vpop.f32.mrb[0].mxu0
        %v929 = vadd.f32 0.0, %v928
        %v930 = vpop.f32.mrb[0].mxu0
        %v931 = vadd.f32 0.0, %v930
        %932 = vmatprep.mubr.bf16.mxu0 0
        %933 = vmatmul.mubr.bf16.gmra.mrb[0].mxu0 %v653
        %v934 = vpop.f32.mrb[0].mxu0
        %v935 = vadd.f32 0.0, %v934
        %v936 = vpop.f32.mrb[0].mxu0
        %v937 = vadd.f32 0.0, %v936
        %v938 = vpop.f32.mrb[0].mxu0
        %v939 = vadd.f32 0.0, %v938
        %v940 = vpop.f32.mrb[0].mxu0
        %v941 = vadd.f32 0.0, %v940
        %942 = vdwg.mxu0
        %v943 = vld [vmem:[%s340] sm:$0xff]
        %v944 = vld [vmem:[%s340 + $0x8] sm:$0xff]
        %v945 = vld [vmem:[#allocation14] sm:$0xff]
        %v946 = vld [vmem:[#allocation14 + $0x8] sm:$0xff]
        %v947 = vld [vmem:[#allocation14 + $0x10] sm:$0xff]
        %v948 = vld [vmem:[#allocation14 + $0x18] sm:$0xff]
        %v949 = vld [vmem:[#allocation14 + $0x20] sm:$0xff]
        %v950 = vld [vmem:[#allocation14 + $0x28] sm:$0xff]
        %v951 = vld [vmem:[#allocation14 + $0x30] sm:$0xff]
        %v952 = vld [vmem:[#allocation14 + $0x38] sm:$0xff]
        %v953 = vld [vmem:[#allocation14 + $0x40] sm:$0xff]
        %v954 = vld [vmem:[#allocation14 + $0x48] sm:$0xff]
        %v955 = vld [vmem:[#allocation14 + $0x50] sm:$0xff]
        %v956 = vld [vmem:[#allocation14 + $0x58] sm:$0xff]
        %v957 = vld [vmem:[#allocation14 + $0x60] sm:$0xff]
        %v958 = vld [vmem:[#allocation14 + $0x68] sm:$0xff]
        %v959 = vld [vmem:[#allocation14 + $0x70] sm:$0xff]
        %v960 = vld [vmem:[#allocation14 + $0x78] sm:$0xff]
        %v961 = vld [vmem:[#allocation14 + $0x80] sm:$0xff]
        %v962 = vld [vmem:[#allocation14 + $0x88] sm:$0xff]
        %v963 = vld [vmem:[#allocation14 + $0x90] sm:$0xff]
        %v964 = vld [vmem:[#allocation14 + $0x98] sm:$0xff]
        %v965 = vld [vmem:[#allocation14 + $0xa0] sm:$0xff]
        %v966 = vld [vmem:[#allocation14 + $0xa8] sm:$0xff]
        %v967 = vld [vmem:[#allocation14 + $0xb0] sm:$0xff]
        %v968 = vld [vmem:[#allocation14 + $0xb8] sm:$0xff]
        %v969 = vld [vmem:[#allocation14 + $0xc0] sm:$0xff]
        %v970 = vld [vmem:[#allocation14 + $0xc8] sm:$0xff]
        %v971 = vld [vmem:[#allocation14 + $0xd0] sm:$0xff]
        %v972 = vld [vmem:[#allocation14 + $0xd8] sm:$0xff]
        %v973 = vld [vmem:[#allocation14 + $0xe0] sm:$0xff]
        %v974 = vld [vmem:[#allocation14 + $0xe8] sm:$0xff]
        %v975 = vld [vmem:[#allocation14 + $0xf0] sm:$0xff]
        %v976 = vld [vmem:[#allocation14 + $0xf8] sm:$0xff]
        %977 = vset.pattern.permute.xlu0 0
        %978 = vperm.xlu0 %977, %v945
        %v979 = vpop.permute.xlu0 %978
        %980 = vset.pattern.permute.xlu0 0
        %981 = vperm.xlu0 %980, %v946
        %v982 = vpop.permute.xlu0 %981
        %983 = vset.pattern.permute.xlu0 0
        %984 = vperm.xlu0 %983, %v947
        %v985 = vpop.permute.xlu0 %984
        %986 = vset.pattern.permute.xlu0 0
        %987 = vperm.xlu0 %986, %v948
        %v988 = vpop.permute.xlu0 %987
        %989 = vset.pattern.permute.xlu0 0
        %990 = vperm.xlu0 %989, %v949
        %v991 = vpop.permute.xlu0 %990
        %992 = vset.pattern.permute.xlu0 0
        %993 = vperm.xlu0 %992, %v950
        %v994 = vpop.permute.xlu0 %993
        %995 = vset.pattern.permute.xlu0 0
        %996 = vperm.xlu0 %995, %v951
        %v997 = vpop.permute.xlu0 %996
        %998 = vset.pattern.permute.xlu0 0
        %999 = vperm.xlu0 %998, %v952
        %v1000 = vpop.permute.xlu0 %999
        %1001 = vset.pattern.permute.xlu0 0
        %1002 = vperm.xlu0 %1001, %v953
        %v1003 = vpop.permute.xlu0 %1002
        %1004 = vset.pattern.permute.xlu0 0
        %1005 = vperm.xlu0 %1004, %v954
        %v1006 = vpop.permute.xlu0 %1005
        %1007 = vset.pattern.permute.xlu0 0
        %1008 = vperm.xlu0 %1007, %v955
        %v1009 = vpop.permute.xlu0 %1008
        %1010 = vset.pattern.permute.xlu0 0
        %1011 = vperm.xlu0 %1010, %v956
        %v1012 = vpop.permute.xlu0 %1011
        %1013 = vset.pattern.permute.xlu0 0
        %1014 = vperm.xlu0 %1013, %v957
        %v1015 = vpop.permute.xlu0 %1014
        %1016 = vset.pattern.permute.xlu0 0
        %1017 = vperm.xlu0 %1016, %v958
        %v1018 = vpop.permute.xlu0 %1017
        %1019 = vset.pattern.permute.xlu0 0
        %1020 = vperm.xlu0 %1019, %v959
        %v1021 = vpop.permute.xlu0 %1020
        %1022 = vset.pattern.permute.xlu0 0
        %1023 = vperm.xlu0 %1022, %v960
        %v1024 = vpop.permute.xlu0 %1023
        %1025 = vset.pattern.permute.xlu0 0
        %1026 = vperm.xlu0 %1025, %v961
        %v1027 = vpop.permute.xlu0 %1026
        %1028 = vset.pattern.permute.xlu0 0
        %1029 = vperm.xlu0 %1028, %v962
        %v1030 = vpop.permute.xlu0 %1029
        %1031 = vset.pattern.permute.xlu0 0
        %1032 = vperm.xlu0 %1031, %v963
        %v1033 = vpop.permute.xlu0 %1032
        %1034 = vset.pattern.permute.xlu0 0
        %1035 = vperm.xlu0 %1034, %v964
        %v1036 = vpop.permute.xlu0 %1035
        %1037 = vset.pattern.permute.xlu0 0
        %1038 = vperm.xlu0 %1037, %v965
        %v1039 = vpop.permute.xlu0 %1038
        %1040 = vset.pattern.permute.xlu0 0
        %1041 = vperm.xlu0 %1040, %v966
        %v1042 = vpop.permute.xlu0 %1041
        %1043 = vset.pattern.permute.xlu0 0
        %1044 = vperm.xlu0 %1043, %v967
        %v1045 = vpop.permute.xlu0 %1044
        %1046 = vset.pattern.permute.xlu0 0
        %1047 = vperm.xlu0 %1046, %v968
        %v1048 = vpop.permute.xlu0 %1047
        %1049 = vset.pattern.permute.xlu0 0
        %1050 = vperm.xlu0 %1049, %v969
        %v1051 = vpop.permute.xlu0 %1050
        %1052 = vset.pattern.permute.xlu0 0
        %1053 = vperm.xlu0 %1052, %v970
        %v1054 = vpop.permute.xlu0 %1053
        %1055 = vset.pattern.permute.xlu0 0
        %1056 = vperm.xlu0 %1055, %v971
        %v1057 = vpop.permute.xlu0 %1056
        %1058 = vset.pattern.permute.xlu0 0
        %1059 = vperm.xlu0 %1058, %v972
        %v1060 = vpop.permute.xlu0 %1059
        %1061 = vset.pattern.permute.xlu0 0
        %1062 = vperm.xlu0 %1061, %v973
        %v1063 = vpop.permute.xlu0 %1062
        %1064 = vset.pattern.permute.xlu0 0
        %1065 = vperm.xlu0 %1064, %v974
        %v1066 = vpop.permute.xlu0 %1065
        %1067 = vset.pattern.permute.xlu0 0
        %1068 = vperm.xlu0 %1067, %v975
        %v1069 = vpop.permute.xlu0 %1068
        %1070 = vset.pattern.permute.xlu0 0
        %1071 = vperm.xlu0 %1070, %v976
        %v1072 = vpop.permute.xlu0 %1071
        %v1073 = vand.u32 %v943, %v979
        %v1074 = vand.u32 %v944, %v979
        %v1075 = vand.u32 %v943, %v982
        %v1076 = vand.u32 %v944, %v982
        %v1077 = vand.u32 %v943, %v985
        %v1078 = vand.u32 %v944, %v985
        %v1079 = vand.u32 %v943, %v988
        %v1080 = vand.u32 %v944, %v988
        %v1081 = vand.u32 %v943, %v991
        %v1082 = vand.u32 %v944, %v991
        %v1083 = vand.u32 %v943, %v994
        %v1084 = vand.u32 %v944, %v994
        %v1085 = vand.u32 %v943, %v997
        %v1086 = vand.u32 %v944, %v997
        %v1087 = vand.u32 %v943, %v1000
        %v1088 = vand.u32 %v944, %v1000
        %v1089 = vand.u32 %v943, %v1003
        %v1090 = vand.u32 %v944, %v1003
        %v1091 = vand.u32 %v943, %v1006
        %v1092 = vand.u32 %v944, %v1006
        %v1093 = vand.u32 %v943, %v1009
        %v1094 = vand.u32 %v944, %v1009
        %v1095 = vand.u32 %v943, %v1012
        %v1096 = vand.u32 %v944, %v1012
        %v1097 = vand.u32 %v943, %v1015
        %v1098 = vand.u32 %v944, %v1015
        %v1099 = vand.u32 %v943, %v1018
        %v1100 = vand.u32 %v944, %v1018
        %v1101 = vand.u32 %v943, %v1021
        %v1102 = vand.u32 %v944, %v1021
        %v1103 = vand.u32 %v943, %v1024
        %v1104 = vand.u32 %v944, %v1024
        %v1105 = vand.u32 %v943, %v1027
        %v1106 = vand.u32 %v944, %v1027
        %v1107 = vand.u32 %v943, %v1030
        %v1108 = vand.u32 %v944, %v1030
        %v1109 = vand.u32 %v943, %v1033
        %v1110 = vand.u32 %v944, %v1033
        %v1111 = vand.u32 %v943, %v1036
        %v1112 = vand.u32 %v944, %v1036
        %v1113 = vand.u32 %v943, %v1039
        %v1114 = vand.u32 %v944, %v1039
        %v1115 = vand.u32 %v943, %v1042
        %v1116 = vand.u32 %v944, %v1042
        %v1117 = vand.u32 %v943, %v1045
        %v1118 = vand.u32 %v944, %v1045
        %v1119 = vand.u32 %v943, %v1048
        %v1120 = vand.u32 %v944, %v1048
        %v1121 = vand.u32 %v943, %v1051
        %v1122 = vand.u32 %v944, %v1051
        %v1123 = vand.u32 %v943, %v1054
        %v1124 = vand.u32 %v944, %v1054
        %v1125 = vand.u32 %v943, %v1057
        %v1126 = vand.u32 %v944, %v1057
        %v1127 = vand.u32 %v943, %v1060
        %v1128 = vand.u32 %v944, %v1060
        %v1129 = vand.u32 %v943, %v1063
        %v1130 = vand.u32 %v944, %v1063
        %v1131 = vand.u32 %v943, %v1066
        %v1132 = vand.u32 %v944, %v1066
        %v1133 = vand.u32 %v943, %v1069
        %v1134 = vand.u32 %v944, %v1069
        %v1135 = vand.u32 %v943, %v1072
        %v1136 = vand.u32 %v944, %v1072
        %vm1137 = vcmp.ne.s32.totalorder %v1073, 0
        %vm1138 = vcmp.ne.s32.totalorder %v1074, 0
        %vm1139 = vcmp.ne.s32.totalorder %v1075, 0
        %vm1140 = vcmp.ne.s32.totalorder %v1076, 0
        %vm1141 = vcmp.ne.s32.totalorder %v1077, 0
        %vm1142 = vcmp.ne.s32.totalorder %v1078, 0
        %vm1143 = vcmp.ne.s32.totalorder %v1079, 0
        %vm1144 = vcmp.ne.s32.totalorder %v1080, 0
        %vm1145 = vcmp.ne.s32.totalorder %v1081, 0
        %vm1146 = vcmp.ne.s32.totalorder %v1082, 0
        %vm1147 = vcmp.ne.s32.totalorder %v1083, 0
        %vm1148 = vcmp.ne.s32.totalorder %v1084, 0
        %vm1149 = vcmp.ne.s32.totalorder %v1085, 0
        %vm1150 = vcmp.ne.s32.totalorder %v1086, 0
        %vm1151 = vcmp.ne.s32.totalorder %v1087, 0
        %vm1152 = vcmp.ne.s32.totalorder %v1088, 0
        %vm1153 = vcmp.ne.s32.totalorder %v1089, 0
        %vm1154 = vcmp.ne.s32.totalorder %v1090, 0
        %vm1155 = vcmp.ne.s32.totalorder %v1091, 0
        %vm1156 = vcmp.ne.s32.totalorder %v1092, 0
        %vm1157 = vcmp.ne.s32.totalorder %v1093, 0
        %vm1158 = vcmp.ne.s32.totalorder %v1094, 0
        %vm1159 = vcmp.ne.s32.totalorder %v1095, 0
        %vm1160 = vcmp.ne.s32.totalorder %v1096, 0
        %vm1161 = vcmp.ne.s32.totalorder %v1097, 0
        %vm1162 = vcmp.ne.s32.totalorder %v1098, 0
        %vm1163 = vcmp.ne.s32.totalorder %v1099, 0
        %vm1164 = vcmp.ne.s32.totalorder %v1100, 0
        %vm1165 = vcmp.ne.s32.totalorder %v1101, 0
        %vm1166 = vcmp.ne.s32.totalorder %v1102, 0
        %vm1167 = vcmp.ne.s32.totalorder %v1103, 0
        %vm1168 = vcmp.ne.s32.totalorder %v1104, 0
        %vm1169 = vcmp.ne.s32.totalorder %v1105, 0
        %vm1170 = vcmp.ne.s32.totalorder %v1106, 0
        %vm1171 = vcmp.ne.s32.totalorder %v1107, 0
        %vm1172 = vcmp.ne.s32.totalorder %v1108, 0
        %vm1173 = vcmp.ne.s32.totalorder %v1109, 0
        %vm1174 = vcmp.ne.s32.totalorder %v1110, 0
        %vm1175 = vcmp.ne.s32.totalorder %v1111, 0
        %vm1176 = vcmp.ne.s32.totalorder %v1112, 0
        %vm1177 = vcmp.ne.s32.totalorder %v1113, 0
        %vm1178 = vcmp.ne.s32.totalorder %v1114, 0
        %vm1179 = vcmp.ne.s32.totalorder %v1115, 0
        %vm1180 = vcmp.ne.s32.totalorder %v1116, 0
        %vm1181 = vcmp.ne.s32.totalorder %v1117, 0
        %vm1182 = vcmp.ne.s32.totalorder %v1118, 0
        %vm1183 = vcmp.ne.s32.totalorder %v1119, 0
        %vm1184 = vcmp.ne.s32.totalorder %v1120, 0
        %vm1185 = vcmp.ne.s32.totalorder %v1121, 0
        %vm1186 = vcmp.ne.s32.totalorder %v1122, 0
        %vm1187 = vcmp.ne.s32.totalorder %v1123, 0
        %vm1188 = vcmp.ne.s32.totalorder %v1124, 0
        %vm1189 = vcmp.ne.s32.totalorder %v1125, 0
        %vm1190 = vcmp.ne.s32.totalorder %v1126, 0
        %vm1191 = vcmp.ne.s32.totalorder %v1127, 0
        %vm1192 = vcmp.ne.s32.totalorder %v1128, 0
        %vm1193 = vcmp.ne.s32.totalorder %v1129, 0
        %vm1194 = vcmp.ne.s32.totalorder %v1130, 0
        %vm1195 = vcmp.ne.s32.totalorder %v1131, 0
        %vm1196 = vcmp.ne.s32.totalorder %v1132, 0
        %vm1197 = vcmp.ne.s32.totalorder %v1133, 0
        %vm1198 = vcmp.ne.s32.totalorder %v1134, 0
        %vm1199 = vcmp.ne.s32.totalorder %v1135, 0
        %vm1200 = vcmp.ne.s32.totalorder %v1136, 0
        %v1201 = vld [vmem:[%s331] sm:$0x3]
        %v1203 = vlaneseq
        %v1204 = vshrl.u32 %v1203, 7
        %v1205 = vsub.s32 0, %v1204
        %v1206 = vrot.slane %v1201, %v1205
        %v1207 = vlaneseq
        %v1208 = vshrl.u32 %v1207, 7
        %v1209 = vsub.s32 1, %v1208
        %v1210 = vrot.slane %v1201, %v1209
        %v1213 = vsub.f32 %v785, %v1206
        %v1214 = vsub.f32 %v787, %v1210
        %v1215 = vsub.f32 %v789, %v1206
        %v1216 = vsub.f32 %v791, %v1210
        %v1217 = vsub.f32 %v795, %v1206
        %v1218 = vsub.f32 %v797, %v1210
        %v1219 = vsub.f32 %v799, %v1206
        %v1220 = vsub.f32 %v801, %v1210
        %v1221 = vsub.f32 %v805, %v1206
        %v1222 = vsub.f32 %v807, %v1210
        %v1223 = vsub.f32 %v809, %v1206
        %v1224 = vsub.f32 %v811, %v1210
        %v1225 = vsub.f32 %v815, %v1206
        %v1226 = vsub.f32 %v817, %v1210
        %v1227 = vsub.f32 %v819, %v1206
        %v1228 = vsub.f32 %v821, %v1210
        %v1229 = vsub.f32 %v825, %v1206
        %v1230 = vsub.f32 %v827, %v1210
        %v1231 = vsub.f32 %v829, %v1206
        %v1232 = vsub.f32 %v831, %v1210
        %v1233 = vsub.f32 %v835, %v1206
        %v1234 = vsub.f32 %v837, %v1210
        %v1235 = vsub.f32 %v839, %v1206
        %v1236 = vsub.f32 %v841, %v1210
        %v1237 = vsub.f32 %v845, %v1206
        %v1238 = vsub.f32 %v847, %v1210
        %v1239 = vsub.f32 %v849, %v1206
        %v1240 = vsub.f32 %v851, %v1210
        %v1241 = vsub.f32 %v855, %v1206
        %v1242 = vsub.f32 %v857, %v1210
        %v1243 = vsub.f32 %v859, %v1206
        %v1244 = vsub.f32 %v861, %v1210
        %v1245 = vsub.f32 %v865, %v1206
        %v1246 = vsub.f32 %v867, %v1210
        %v1247 = vsub.f32 %v869, %v1206
        %v1248 = vsub.f32 %v871, %v1210
        %v1249 = vsub.f32 %v875, %v1206
        %v1250 = vsub.f32 %v877, %v1210
        %v1251 = vsub.f32 %v879, %v1206
        %v1252 = vsub.f32 %v881, %v1210
        %v1253 = vsub.f32 %v885, %v1206
        %v1254 = vsub.f32 %v887, %v1210
        %v1255 = vsub.f32 %v889, %v1206
        %v1256 = vsub.f32 %v891, %v1210
        %v1257 = vsub.f32 %v895, %v1206
        %v1258 = vsub.f32 %v897, %v1210
        %v1259 = vsub.f32 %v899, %v1206
        %v1260 = vsub.f32 %v901, %v1210
        %v1261 = vsub.f32 %v905, %v1206
        %v1262 = vsub.f32 %v907, %v1210
        %v1263 = vsub.f32 %v909, %v1206
        %v1264 = vsub.f32 %v911, %v1210
        %v1265 = vsub.f32 %v915, %v1206
        %v1266 = vsub.f32 %v917, %v1210
        %v1267 = vsub.f32 %v919, %v1206
        %v1268 = vsub.f32 %v921, %v1210
        %v1269 = vsub.f32 %v925, %v1206
        %v1270 = vsub.f32 %v927, %v1210
        %v1271 = vsub.f32 %v929, %v1206
        %v1272 = vsub.f32 %v931, %v1210
        %v1273 = vsub.f32 %v935, %v1206
        %v1274 = vsub.f32 %v937, %v1210
        %v1275 = vsub.f32 %v939, %v1206
        %v1276 = vsub.f32 %v941, %v1210
        %v1277 = vsel %vm1137, -1e+09, %v1213
        %v1278 = vsel %vm1138, -1e+09, %v1214
        %v1279 = vsel %vm1139, -1e+09, %v1215
        %v1280 = vsel %vm1140, -1e+09, %v1216
        %v1281 = vsel %vm1141, -1e+09, %v1217
        %v1282 = vsel %vm1142, -1e+09, %v1218
        %v1283 = vsel %vm1143, -1e+09, %v1219
        %v1284 = vsel %vm1144, -1e+09, %v1220
        %v1285 = vsel %vm1145, -1e+09, %v1221
        %v1286 = vsel %vm1146, -1e+09, %v1222
        %v1287 = vsel %vm1147, -1e+09, %v1223
        %v1288 = vsel %vm1148, -1e+09, %v1224
        %v1289 = vsel %vm1149, -1e+09, %v1225
        %v1290 = vsel %vm1150, -1e+09, %v1226
        %v1291 = vsel %vm1151, -1e+09, %v1227
        %v1292 = vsel %vm1152, -1e+09, %v1228
        %v1293 = vsel %vm1153, -1e+09, %v1229
        %v1294 = vsel %vm1154, -1e+09, %v1230
        %v1295 = vsel %vm1155, -1e+09, %v1231
        %v1296 = vsel %vm1156, -1e+09, %v1232
        %v1297 = vsel %vm1157, -1e+09, %v1233
        %v1298 = vsel %vm1158, -1e+09, %v1234
        %v1299 = vsel %vm1159, -1e+09, %v1235
        %v1300 = vsel %vm1160, -1e+09, %v1236
        %v1301 = vsel %vm1161, -1e+09, %v1237
        %v1302 = vsel %vm1162, -1e+09, %v1238
        %v1303 = vsel %vm1163, -1e+09, %v1239
        %v1304 = vsel %vm1164, -1e+09, %v1240
        %v1305 = vsel %vm1165, -1e+09, %v1241
        %v1306 = vsel %vm1166, -1e+09, %v1242
        %v1307 = vsel %vm1167, -1e+09, %v1243
        %v1308 = vsel %vm1168, -1e+09, %v1244
        %v1309 = vsel %vm1169, -1e+09, %v1245
        %v1310 = vsel %vm1170, -1e+09, %v1246
        %v1311 = vsel %vm1171, -1e+09, %v1247
        %v1312 = vsel %vm1172, -1e+09, %v1248
        %v1313 = vsel %vm1173, -1e+09, %v1249
        %v1314 = vsel %vm1174, -1e+09, %v1250
        %v1315 = vsel %vm1175, -1e+09, %v1251
        %v1316 = vsel %vm1176, -1e+09, %v1252
        %v1317 = vsel %vm1177, -1e+09, %v1253
        %v1318 = vsel %vm1178, -1e+09, %v1254
        %v1319 = vsel %vm1179, -1e+09, %v1255
        %v1320 = vsel %vm1180, -1e+09, %v1256
        %v1321 = vsel %vm1181, -1e+09, %v1257
        %v1322 = vsel %vm1182, -1e+09, %v1258
        %v1323 = vsel %vm1183, -1e+09, %v1259
        %v1324 = vsel %vm1184, -1e+09, %v1260
        %v1325 = vsel %vm1185, -1e+09, %v1261
        %v1326 = vsel %vm1186, -1e+09, %v1262
        %v1327 = vsel %vm1187, -1e+09, %v1263
        %v1328 = vsel %vm1188, -1e+09, %v1264
        %v1329 = vsel %vm1189, -1e+09, %v1265
        %v1330 = vsel %vm1190, -1e+09, %v1266
        %v1331 = vsel %vm1191, -1e+09, %v1267
        %v1332 = vsel %vm1192, -1e+09, %v1268
        %v1333 = vsel %vm1193, -1e+09, %v1269
        %v1334 = vsel %vm1194, -1e+09, %v1270
        %v1335 = vsel %vm1195, -1e+09, %v1271
        %v1336 = vsel %vm1196, -1e+09, %v1272
        %v1337 = vsel %vm1197, -1e+09, %v1273
        %v1338 = vsel %vm1198, -1e+09, %v1274
        %v1339 = vsel %vm1199, -1e+09, %v1275
        %v1340 = vsel %vm1200, -1e+09, %v1276
        %p1341 = scmp.eq.s32.totalorder %s33, %s32
        // Predicated region
        $region65: #{_lambda_.1} parent=39 // pred_check
          %p1342 = pneg %p1341
        $region66: #{_lambda_.1} parent=39 // pred_check_branch
          %1344 = sbr.rel (%p1342) target = $region68
        $region67: #{_lambda_.1} parent=39 // pred_region
          %v1345 = vlaneseq
          %v1346 = vshrl.u32 %v1345, 7
          %v1347 = vadd.s32 %v1346, 8
          %v1348 = vadd.s32 %v1346, 16
          %v1349 = vadd.s32 %v1346, 24
          %v1350 = vadd.s32 %v1346, 32
          %v1351 = vadd.s32 %v1346, 40
          %v1352 = vadd.s32 %v1346, 48
          %v1353 = vadd.s32 %v1346, 56
          %v1354 = vadd.s32 %v1346, 64
          %v1355 = vadd.s32 %v1346, 72
          %v1356 = vadd.s32 %v1346, 80
          %v1357 = vadd.s32 %v1346, 88
          %v1358 = vadd.s32 %v1346, 96
          %v1359 = vadd.s32 %v1346, 104
          %v1360 = vadd.s32 %v1346, 112
          %v1361 = vadd.s32 %v1346, 120
          %v1362 = vadd.s32 %v1346, 128
          %v1363 = vadd.s32 %v1346, 136
          %v1364 = vadd.s32 %v1346, 144
          %v1365 = vadd.s32 %v1346, 152
          %v1366 = vadd.s32 %v1346, 160
          %v1367 = vadd.s32 %v1346, 168
          %v1368 = vadd.s32 %v1346, 176
          %v1369 = vadd.s32 %v1346, 184
          %v1370 = vadd.s32 %v1346, 192
          %v1371 = vadd.s32 %v1346, 200
          %v1372 = vadd.s32 %v1346, 208
          %v1373 = vadd.s32 %v1346, 216
          %v1374 = vadd.s32 %v1346, 224
          %v1375 = vadd.s32 %v1346, 232
          %v1376 = vadd.s32 %v1346, 240
          %v1377 = vadd.s32 %v1346, 248
          %v1378 = vlaneseq
          %v1379 = vand.u32 %v1378, 127
          %v1380 = vadd.s32 %v1379, 128
          %vm1381 = vcmp.eq.s32.totalorder %v1346, %v1379
          %vm1382 = vcmp.eq.s32.totalorder %v1346, %v1380
          %vm1383 = vcmp.eq.s32.totalorder %v1347, %v1379
          %vm1384 = vcmp.eq.s32.totalorder %v1347, %v1380
          %vm1385 = vcmp.eq.s32.totalorder %v1348, %v1379
          %vm1386 = vcmp.eq.s32.totalorder %v1348, %v1380
          %vm1387 = vcmp.eq.s32.totalorder %v1349, %v1379
          %vm1388 = vcmp.eq.s32.totalorder %v1349, %v1380
          %vm1389 = vcmp.eq.s32.totalorder %v1350, %v1379
          %vm1390 = vcmp.eq.s32.totalorder %v1350, %v1380
          %vm1391 = vcmp.eq.s32.totalorder %v1351, %v1379
          %vm1392 = vcmp.eq.s32.totalorder %v1351, %v1380
          %vm1393 = vcmp.eq.s32.totalorder %v1352, %v1379
          %vm1394 = vcmp.eq.s32.totalorder %v1352, %v1380
          %vm1395 = vcmp.eq.s32.totalorder %v1353, %v1379
          %vm1396 = vcmp.eq.s32.totalorder %v1353, %v1380
          %vm1397 = vcmp.eq.s32.totalorder %v1354, %v1379
          %vm1398 = vcmp.eq.s32.totalorder %v1354, %v1380
          %vm1399 = vcmp.eq.s32.totalorder %v1355, %v1379
          %vm1400 = vcmp.eq.s32.totalorder %v1355, %v1380
          %vm1401 = vcmp.eq.s32.totalorder %v1356, %v1379
          %vm1402 = vcmp.eq.s32.totalorder %v1356, %v1380
          %vm1403 = vcmp.eq.s32.totalorder %v1357, %v1379
          %vm1404 = vcmp.eq.s32.totalorder %v1357, %v1380
          %vm1405 = vcmp.eq.s32.totalorder %v1358, %v1379
          %vm1406 = vcmp.eq.s32.totalorder %v1358, %v1380
          %vm1407 = vcmp.eq.s32.totalorder %v1359, %v1379
          %vm1408 = vcmp.eq.s32.totalorder %v1359, %v1380
          %vm1409 = vcmp.eq.s32.totalorder %v1360, %v1379
          %vm1410 = vcmp.eq.s32.totalorder %v1360, %v1380
          %vm1411 = vcmp.eq.s32.totalorder %v1361, %v1379
          %vm1412 = vcmp.eq.s32.totalorder %v1361, %v1380
          %vm1413 = vcmp.eq.s32.totalorder %v1362, %v1379
          %vm1414 = vcmp.eq.s32.totalorder %v1362, %v1380
          %vm1415 = vcmp.eq.s32.totalorder %v1363, %v1379
          %vm1416 = vcmp.eq.s32.totalorder %v1363, %v1380
          %vm1417 = vcmp.eq.s32.totalorder %v1364, %v1379
          %vm1418 = vcmp.eq.s32.totalorder %v1364, %v1380
          %vm1419 = vcmp.eq.s32.totalorder %v1365, %v1379
          %vm1420 = vcmp.eq.s32.totalorder %v1365, %v1380
          %vm1421 = vcmp.eq.s32.totalorder %v1366, %v1379
          %vm1422 = vcmp.eq.s32.totalorder %v1366, %v1380
          %vm1423 = vcmp.eq.s32.totalorder %v1367, %v1379
          %vm1424 = vcmp.eq.s32.totalorder %v1367, %v1380
          %vm1425 = vcmp.eq.s32.totalorder %v1368, %v1379
          %vm1426 = vcmp.eq.s32.totalorder %v1368, %v1380
          %vm1427 = vcmp.eq.s32.totalorder %v1369, %v1379
          %vm1428 = vcmp.eq.s32.totalorder %v1369, %v1380
          %vm1429 = vcmp.eq.s32.totalorder %v1370, %v1379
          %vm1430 = vcmp.eq.s32.totalorder %v1370, %v1380
          %vm1431 = vcmp.eq.s32.totalorder %v1371, %v1379
          %vm1432 = vcmp.eq.s32.totalorder %v1371, %v1380
          %vm1433 = vcmp.eq.s32.totalorder %v1372, %v1379
          %vm1434 = vcmp.eq.s32.totalorder %v1372, %v1380
          %vm1435 = vcmp.eq.s32.totalorder %v1373, %v1379
          %vm1436 = vcmp.eq.s32.totalorder %v1373, %v1380
          %vm1437 = vcmp.eq.s32.totalorder %v1374, %v1379
          %vm1438 = vcmp.eq.s32.totalorder %v1374, %v1380
          %vm1439 = vcmp.eq.s32.totalorder %v1375, %v1379
          %vm1440 = vcmp.eq.s32.totalorder %v1375, %v1380
          %vm1441 = vcmp.eq.s32.totalorder %v1376, %v1379
          %vm1442 = vcmp.eq.s32.totalorder %v1376, %v1380
          %vm1443 = vcmp.eq.s32.totalorder %v1377, %v1379
          %vm1444 = vcmp.eq.s32.totalorder %v1377, %v1380
          %v1445 = vsel %vm1381, %v1277, 0.0
          %v1446 = vsel %vm1382, %v1278, 0.0
          %v1447 = vsel %vm1383, %v1279, 0.0
          %v1448 = vsel %vm1384, %v1280, 0.0
          %v1449 = vsel %vm1385, %v1281, 0.0
          %v1450 = vsel %vm1386, %v1282, 0.0
          %v1451 = vsel %vm1387, %v1283, 0.0
          %v1452 = vsel %vm1388, %v1284, 0.0
          %v1453 = vsel %vm1389, %v1285, 0.0
          %v1454 = vsel %vm1390, %v1286, 0.0
          %v1455 = vsel %vm1391, %v1287, 0.0
          %v1456 = vsel %vm1392, %v1288, 0.0
          %v1457 = vsel %vm1393, %v1289, 0.0
          %v1458 = vsel %vm1394, %v1290, 0.0
          %v1459 = vsel %vm1395, %v1291, 0.0
          %v1460 = vsel %vm1396, %v1292, 0.0
          %v1461 = vsel %vm1397, %v1293, 0.0
          %v1462 = vsel %vm1398, %v1294, 0.0
          %v1463 = vsel %vm1399, %v1295, 0.0
          %v1464 = vsel %vm1400, %v1296, 0.0
          %v1465 = vsel %vm1401, %v1297, 0.0
          %v1466 = vsel %vm1402, %v1298, 0.0
          %v1467 = vsel %vm1403, %v1299, 0.0
          %v1468 = vsel %vm1404, %v1300, 0.0
          %v1469 = vsel %vm1405, %v1301, 0.0
          %v1470 = vsel %vm1406, %v1302, 0.0
          %v1471 = vsel %vm1407, %v1303, 0.0
          %v1472 = vsel %vm1408, %v1304, 0.0
          %v1473 = vsel %vm1409, %v1305, 0.0
          %v1474 = vsel %vm1410, %v1306, 0.0
          %v1475 = vsel %vm1411, %v1307, 0.0
          %v1476 = vsel %vm1412, %v1308, 0.0
          %v1477 = vsel %vm1413, %v1309, 0.0
          %v1478 = vsel %vm1414, %v1310, 0.0
          %v1479 = vsel %vm1415, %v1311, 0.0
          %v1480 = vsel %vm1416, %v1312, 0.0
          %v1481 = vsel %vm1417, %v1313, 0.0
          %v1482 = vsel %vm1418, %v1314, 0.0
          %v1483 = vsel %vm1419, %v1315, 0.0
          %v1484 = vsel %vm1420, %v1316, 0.0
          %v1485 = vsel %vm1421, %v1317, 0.0
          %v1486 = vsel %vm1422, %v1318, 0.0
          %v1487 = vsel %vm1423, %v1319, 0.0
          %v1488 = vsel %vm1424, %v1320, 0.0
          %v1489 = vsel %vm1425, %v1321, 0.0
          %v1490 = vsel %vm1426, %v1322, 0.0
          %v1491 = vsel %vm1427, %v1323, 0.0
          %v1492 = vsel %vm1428, %v1324, 0.0
          %v1493 = vsel %vm1429, %v1325, 0.0
          %v1494 = vsel %vm1430, %v1326, 0.0
          %v1495 = vsel %vm1431, %v1327, 0.0
          %v1496 = vsel %vm1432, %v1328, 0.0
          %v1497 = vsel %vm1433, %v1329, 0.0
          %v1498 = vsel %vm1434, %v1330, 0.0
          %v1499 = vsel %vm1435, %v1331, 0.0
          %v1500 = vsel %vm1436, %v1332, 0.0
          %v1501 = vsel %vm1437, %v1333, 0.0
          %v1502 = vsel %vm1438, %v1334, 0.0
          %v1503 = vsel %vm1439, %v1335, 0.0
          %v1504 = vsel %vm1440, %v1336, 0.0
          %v1505 = vsel %vm1441, %v1337, 0.0
          %v1506 = vsel %vm1442, %v1338, 0.0
          %v1507 = vsel %vm1443, %v1339, 0.0
          %v1508 = vsel %vm1444, %v1340, 0.0
          %v1509 = vadd.f32 %v1445, %v1446
          %1510 = vadd.xlane.f32.xlu0 %v1509
          %v1511 = vpop.xlane.xlu0 %1510
          %v1512 = vadd.f32 %v1447, %v1448
          %1513 = vadd.xlane.f32.xlu0 %v1512
          %v1514 = vpop.xlane.xlu0 %1513
          %v1515 = vadd.f32 %v1449, %v1450
          %1516 = vadd.xlane.f32.xlu0 %v1515
          %v1517 = vpop.xlane.xlu0 %1516
          %v1518 = vadd.f32 %v1451, %v1452
          %1519 = vadd.xlane.f32.xlu0 %v1518
          %v1520 = vpop.xlane.xlu0 %1519
          %v1521 = vadd.f32 %v1453, %v1454
          %1522 = vadd.xlane.f32.xlu0 %v1521
          %v1523 = vpop.xlane.xlu0 %1522
          %v1524 = vadd.f32 %v1455, %v1456
          %1525 = vadd.xlane.f32.xlu0 %v1524
          %v1526 = vpop.xlane.xlu0 %1525
          %v1527 = vadd.f32 %v1457, %v1458
          %1528 = vadd.xlane.f32.xlu0 %v1527
          %v1529 = vpop.xlane.xlu0 %1528
          %v1530 = vadd.f32 %v1459, %v1460
          %1531 = vadd.xlane.f32.xlu0 %v1530
          %v1532 = vpop.xlane.xlu0 %1531
          %v1533 = vadd.f32 %v1461, %v1462
          %1534 = vadd.xlane.f32.xlu0 %v1533
          %v1535 = vpop.xlane.xlu0 %1534
          %v1536 = vadd.f32 %v1463, %v1464
          %1537 = vadd.xlane.f32.xlu0 %v1536
          %v1538 = vpop.xlane.xlu0 %1537
          %v1539 = vadd.f32 %v1465, %v1466
          %1540 = vadd.xlane.f32.xlu0 %v1539
          %v1541 = vpop.xlane.xlu0 %1540
          %v1542 = vadd.f32 %v1467, %v1468
          %1543 = vadd.xlane.f32.xlu0 %v1542
          %v1544 = vpop.xlane.xlu0 %1543
          %v1545 = vadd.f32 %v1469, %v1470
          %1546 = vadd.xlane.f32.xlu0 %v1545
          %v1547 = vpop.xlane.xlu0 %1546
          %v1548 = vadd.f32 %v1471, %v1472
          %1549 = vadd.xlane.f32.xlu0 %v1548
          %v1550 = vpop.xlane.xlu0 %1549
          %v1551 = vadd.f32 %v1473, %v1474
          %1552 = vadd.xlane.f32.xlu0 %v1551
          %v1553 = vpop.xlane.xlu0 %1552
          %v1554 = vadd.f32 %v1475, %v1476
          %1555 = vadd.xlane.f32.xlu0 %v1554
          %v1556 = vpop.xlane.xlu0 %1555
          %v1557 = vadd.f32 %v1477, %v1478
          %1558 = vadd.xlane.f32.xlu0 %v1557
          %v1559 = vpop.xlane.xlu0 %1558
          %v1560 = vadd.f32 %v1479, %v1480
          %1561 = vadd.xlane.f32.xlu0 %v1560
          %v1562 = vpop.xlane.xlu0 %1561
          %v1563 = vadd.f32 %v1481, %v1482
          %1564 = vadd.xlane.f32.xlu0 %v1563
          %v1565 = vpop.xlane.xlu0 %1564
          %v1566 = vadd.f32 %v1483, %v1484
          %1567 = vadd.xlane.f32.xlu0 %v1566
          %v1568 = vpop.xlane.xlu0 %1567
          %v1569 = vadd.f32 %v1485, %v1486
          %1570 = vadd.xlane.f32.xlu0 %v1569
          %v1571 = vpop.xlane.xlu0 %1570
          %v1572 = vadd.f32 %v1487, %v1488
          %1573 = vadd.xlane.f32.xlu0 %v1572
          %v1574 = vpop.xlane.xlu0 %1573
          %v1575 = vadd.f32 %v1489, %v1490
          %1576 = vadd.xlane.f32.xlu0 %v1575
          %v1577 = vpop.xlane.xlu0 %1576
          %v1578 = vadd.f32 %v1491, %v1492
          %1579 = vadd.xlane.f32.xlu0 %v1578
          %v1580 = vpop.xlane.xlu0 %1579
          %v1581 = vadd.f32 %v1493, %v1494
          %1582 = vadd.xlane.f32.xlu0 %v1581
          %v1583 = vpop.xlane.xlu0 %1582
          %v1584 = vadd.f32 %v1495, %v1496
          %1585 = vadd.xlane.f32.xlu0 %v1584
          %v1586 = vpop.xlane.xlu0 %1585
          %v1587 = vadd.f32 %v1497, %v1498
          %1588 = vadd.xlane.f32.xlu0 %v1587
          %v1589 = vpop.xlane.xlu0 %1588
          %v1590 = vadd.f32 %v1499, %v1500
          %1591 = vadd.xlane.f32.xlu0 %v1590
          %v1592 = vpop.xlane.xlu0 %1591
          %v1593 = vadd.f32 %v1501, %v1502
          %1594 = vadd.xlane.f32.xlu0 %v1593
          %v1595 = vpop.xlane.xlu0 %1594
          %v1596 = vadd.f32 %v1503, %v1504
          %1597 = vadd.xlane.f32.xlu0 %v1596
          %v1598 = vpop.xlane.xlu0 %1597
          %v1599 = vadd.f32 %v1505, %v1506
          %1600 = vadd.xlane.f32.xlu0 %v1599
          %v1601 = vpop.xlane.xlu0 %1600
          %v1602 = vadd.f32 %v1507, %v1508
          %1603 = vadd.xlane.f32.xlu0 %v1602
          %v1604 = vpop.xlane.xlu0 %1603
          %vm1605 = vcmask 7168
          %1606 = vst.msk [vmem:[#allocation4] sm:$0xff] %vm1605, %v1511
          %1607 = vst.msk [vmem:[#allocation4 + $0x8] sm:$0xff] %vm1605, %v1514
          %1608 = vst.msk [vmem:[#allocation4 + $0x10] sm:$0xff] %vm1605, %v1517
          %1609 = vst.msk [vmem:[#allocation4 + $0x18] sm:$0xff] %vm1605, %v1520
          %1610 = vst.msk [vmem:[#allocation4 + $0x20] sm:$0xff] %vm1605, %v1523
          %1611 = vst.msk [vmem:[#allocation4 + $0x28] sm:$0xff] %vm1605, %v1526
          %1612 = vst.msk [vmem:[#allocation4 + $0x30] sm:$0xff] %vm1605, %v1529
          %1613 = vst.msk [vmem:[#allocation4 + $0x38] sm:$0xff] %vm1605, %v1532
          %1614 = vst.msk [vmem:[#allocation4 + $0x40] sm:$0xff] %vm1605, %v1535
          %1615 = vst.msk [vmem:[#allocation4 + $0x48] sm:$0xff] %vm1605, %v1538
          %1616 = vst.msk [vmem:[#allocation4 + $0x50] sm:$0xff] %vm1605, %v1541
          %1617 = vst.msk [vmem:[#allocation4 + $0x58] sm:$0xff] %vm1605, %v1544
          %1618 = vst.msk [vmem:[#allocation4 + $0x60] sm:$0xff] %vm1605, %v1547
          %1619 = vst.msk [vmem:[#allocation4 + $0x68] sm:$0xff] %vm1605, %v1550
          %1620 = vst.msk [vmem:[#allocation4 + $0x70] sm:$0xff] %vm1605, %v1553
          %1621 = vst.msk [vmem:[#allocation4 + $0x78] sm:$0xff] %vm1605, %v1556
          %1622 = vst.msk [vmem:[#allocation4 + $0x80] sm:$0xff] %vm1605, %v1559
          %1623 = vst.msk [vmem:[#allocation4 + $0x88] sm:$0xff] %vm1605, %v1562
          %1624 = vst.msk [vmem:[#allocation4 + $0x90] sm:$0xff] %vm1605, %v1565
          %1625 = vst.msk [vmem:[#allocation4 + $0x98] sm:$0xff] %vm1605, %v1568
          %1626 = vst.msk [vmem:[#allocation4 + $0xa0] sm:$0xff] %vm1605, %v1571
          %1627 = vst.msk [vmem:[#allocation4 + $0xa8] sm:$0xff] %vm1605, %v1574
          %1628 = vst.msk [vmem:[#allocation4 + $0xb0] sm:$0xff] %vm1605, %v1577
          %1629 = vst.msk [vmem:[#allocation4 + $0xb8] sm:$0xff] %vm1605, %v1580
          %1630 = vst.msk [vmem:[#allocation4 + $0xc0] sm:$0xff] %vm1605, %v1583
          %1631 = vst.msk [vmem:[#allocation4 + $0xc8] sm:$0xff] %vm1605, %v1586
          %1632 = vst.msk [vmem:[#allocation4 + $0xd0] sm:$0xff] %vm1605, %v1589
          %1633 = vst.msk [vmem:[#allocation4 + $0xd8] sm:$0xff] %vm1605, %v1592
          %1634 = vst.msk [vmem:[#allocation4 + $0xe0] sm:$0xff] %vm1605, %v1595
          %1635 = vst.msk [vmem:[#allocation4 + $0xe8] sm:$0xff] %vm1605, %v1598
          %1636 = vst.msk [vmem:[#allocation4 + $0xf0] sm:$0xff] %vm1605, %v1601
          %1637 = vst.msk [vmem:[#allocation4 + $0xf8] sm:$0xff] %vm1605, %v1604
        $region68: #{_lambda_.1} parent=39 // pred_fallthru
          _
        %v1638 = vld [vmem:[#allocation2] sm:$0xff]
        %v1639 = vld [vmem:[#allocation2 + $0x8] sm:$0xff]
        %v1640 = vld [vmem:[#allocation2 + $0x10] sm:$0xff]
        %v1641 = vld [vmem:[#allocation2 + $0x18] sm:$0xff]
        %v1642 = vld [vmem:[#allocation2 + $0x20] sm:$0xff]
        %v1643 = vld [vmem:[#allocation2 + $0x28] sm:$0xff]
        %v1644 = vld [vmem:[#allocation2 + $0x30] sm:$0xff]
        %v1645 = vld [vmem:[#allocation2 + $0x38] sm:$0xff]
        %v1646 = vld [vmem:[#allocation2 + $0x40] sm:$0xff]
        %v1647 = vld [vmem:[#allocation2 + $0x48] sm:$0xff]
        %v1648 = vld [vmem:[#allocation2 + $0x50] sm:$0xff]
        %v1649 = vld [vmem:[#allocation2 + $0x58] sm:$0xff]
        %v1650 = vld [vmem:[#allocation2 + $0x60] sm:$0xff]
        %v1651 = vld [vmem:[#allocation2 + $0x68] sm:$0xff]
        %v1652 = vld [vmem:[#allocation2 + $0x70] sm:$0xff]
        %v1653 = vld [vmem:[#allocation2 + $0x78] sm:$0xff]
        %v1654 = vld [vmem:[#allocation2 + $0x80] sm:$0xff]
        %v1655 = vld [vmem:[#allocation2 + $0x88] sm:$0xff]
        %v1656 = vld [vmem:[#allocation2 + $0x90] sm:$0xff]
        %v1657 = vld [vmem:[#allocation2 + $0x98] sm:$0xff]
        %v1658 = vld [vmem:[#allocation2 + $0xa0] sm:$0xff]
        %v1659 = vld [vmem:[#allocation2 + $0xa8] sm:$0xff]
        %v1660 = vld [vmem:[#allocation2 + $0xb0] sm:$0xff]
        %v1661 = vld [vmem:[#allocation2 + $0xb8] sm:$0xff]
        %v1662 = vld [vmem:[#allocation2 + $0xc0] sm:$0xff]
        %v1663 = vld [vmem:[#allocation2 + $0xc8] sm:$0xff]
        %v1664 = vld [vmem:[#allocation2 + $0xd0] sm:$0xff]
        %v1665 = vld [vmem:[#allocation2 + $0xd8] sm:$0xff]
        %v1666 = vld [vmem:[#allocation2 + $0xe0] sm:$0xff]
        %v1667 = vld [vmem:[#allocation2 + $0xe8] sm:$0xff]
        %v1668 = vld [vmem:[#allocation2 + $0xf0] sm:$0xff]
        %v1669 = vld [vmem:[#allocation2 + $0xf8] sm:$0xff]
        %v1670 = vmax.f32 %v1277, %v1278
        %1671 = vmax.xlane.f32.xlu0 %v1670
        %v1672 = vpop.xlane.xlu0 %1671
        %v1673 = vmax.f32 %v1279, %v1280
        %1674 = vmax.xlane.f32.xlu0 %v1673
        %v1675 = vpop.xlane.xlu0 %1674
        %v1676 = vmax.f32 %v1281, %v1282
        %1677 = vmax.xlane.f32.xlu0 %v1676
        %v1678 = vpop.xlane.xlu0 %1677
        %v1679 = vmax.f32 %v1283, %v1284
        %1680 = vmax.xlane.f32.xlu0 %v1679
        %v1681 = vpop.xlane.xlu0 %1680
        %v1682 = vmax.f32 %v1285, %v1286
        %1683 = vmax.xlane.f32.xlu0 %v1682
        %v1684 = vpop.xlane.xlu0 %1683
        %v1685 = vmax.f32 %v1287, %v1288
        %1686 = vmax.xlane.f32.xlu0 %v1685
        %v1687 = vpop.xlane.xlu0 %1686
        %v1688 = vmax.f32 %v1289, %v1290
        %1689 = vmax.xlane.f32.xlu0 %v1688
        %v1690 = vpop.xlane.xlu0 %1689
        %v1691 = vmax.f32 %v1291, %v1292
        %1692 = vmax.xlane.f32.xlu0 %v1691
        %v1693 = vpop.xlane.xlu0 %1692
        %v1694 = vmax.f32 %v1293, %v1294
        %1695 = vmax.xlane.f32.xlu0 %v1694
        %v1696 = vpop.xlane.xlu0 %1695
        %v1697 = vmax.f32 %v1295, %v1296
        %1698 = vmax.xlane.f32.xlu0 %v1697
        %v1699 = vpop.xlane.xlu0 %1698
        %v1700 = vmax.f32 %v1297, %v1298
        %1701 = vmax.xlane.f32.xlu0 %v1700
        %v1702 = vpop.xlane.xlu0 %1701
        %v1703 = vmax.f32 %v1299, %v1300
        %1704 = vmax.xlane.f32.xlu0 %v1703
        %v1705 = vpop.xlane.xlu0 %1704
        %v1706 = vmax.f32 %v1301, %v1302
        %1707 = vmax.xlane.f32.xlu0 %v1706
        %v1708 = vpop.xlane.xlu0 %1707
        %v1709 = vmax.f32 %v1303, %v1304
        %1710 = vmax.xlane.f32.xlu0 %v1709
        %v1711 = vpop.xlane.xlu0 %1710
        %v1712 = vmax.f32 %v1305, %v1306
        %1713 = vmax.xlane.f32.xlu0 %v1712
        %v1714 = vpop.xlane.xlu0 %1713
        %v1715 = vmax.f32 %v1307, %v1308
        %1716 = vmax.xlane.f32.xlu0 %v1715
        %v1717 = vpop.xlane.xlu0 %1716
        %v1718 = vmax.f32 %v1309, %v1310
        %1719 = vmax.xlane.f32.xlu0 %v1718
        %v1720 = vpop.xlane.xlu0 %1719
        %v1721 = vmax.f32 %v1311, %v1312
        %1722 = vmax.xlane.f32.xlu0 %v1721
        %v1723 = vpop.xlane.xlu0 %1722
        %v1724 = vmax.f32 %v1313, %v1314
        %1725 = vmax.xlane.f32.xlu0 %v1724
        %v1726 = vpop.xlane.xlu0 %1725
        %v1727 = vmax.f32 %v1315, %v1316
        %1728 = vmax.xlane.f32.xlu0 %v1727
        %v1729 = vpop.xlane.xlu0 %1728
        %v1730 = vmax.f32 %v1317, %v1318
        %1731 = vmax.xlane.f32.xlu0 %v1730
        %v1732 = vpop.xlane.xlu0 %1731
        %v1733 = vmax.f32 %v1319, %v1320
        %1734 = vmax.xlane.f32.xlu0 %v1733
        %v1735 = vpop.xlane.xlu0 %1734
        %v1736 = vmax.f32 %v1321, %v1322
        %1737 = vmax.xlane.f32.xlu0 %v1736
        %v1738 = vpop.xlane.xlu0 %1737
        %v1739 = vmax.f32 %v1323, %v1324
        %1740 = vmax.xlane.f32.xlu0 %v1739
        %v1741 = vpop.xlane.xlu0 %1740
        %v1742 = vmax.f32 %v1325, %v1326
        %1743 = vmax.xlane.f32.xlu0 %v1742
        %v1744 = vpop.xlane.xlu0 %1743
        %v1745 = vmax.f32 %v1327, %v1328
        %1746 = vmax.xlane.f32.xlu0 %v1745
        %v1747 = vpop.xlane.xlu0 %1746
        %v1748 = vmax.f32 %v1329, %v1330
        %1749 = vmax.xlane.f32.xlu0 %v1748
        %v1750 = vpop.xlane.xlu0 %1749
        %v1751 = vmax.f32 %v1331, %v1332
        %1752 = vmax.xlane.f32.xlu0 %v1751
        %v1753 = vpop.xlane.xlu0 %1752
        %v1754 = vmax.f32 %v1333, %v1334
        %1755 = vmax.xlane.f32.xlu0 %v1754
        %v1756 = vpop.xlane.xlu0 %1755
        %v1757 = vmax.f32 %v1335, %v1336
        %1758 = vmax.xlane.f32.xlu0 %v1757
        %v1759 = vpop.xlane.xlu0 %1758
        %v1760 = vmax.f32 %v1337, %v1338
        %1761 = vmax.xlane.f32.xlu0 %v1760
        %v1762 = vpop.xlane.xlu0 %1761
        %v1763 = vmax.f32 %v1339, %v1340
        %1764 = vmax.xlane.f32.xlu0 %v1763
        %v1765 = vpop.xlane.xlu0 %1764
        %v1766 = vmax.f32 %v1638, %v1672
        %v1767 = vmax.f32 %v1639, %v1675
        %v1768 = vmax.f32 %v1640, %v1678
        %v1769 = vmax.f32 %v1641, %v1681
        %v1770 = vmax.f32 %v1642, %v1684
        %v1771 = vmax.f32 %v1643, %v1687
        %v1772 = vmax.f32 %v1644, %v1690
        %v1773 = vmax.f32 %v1645, %v1693
        %v1774 = vmax.f32 %v1646, %v1696
        %v1775 = vmax.f32 %v1647, %v1699
        %v1776 = vmax.f32 %v1648, %v1702
        %v1777 = vmax.f32 %v1649, %v1705
        %v1778 = vmax.f32 %v1650, %v1708
        %v1779 = vmax.f32 %v1651, %v1711
        %v1780 = vmax.f32 %v1652, %v1714
        %v1781 = vmax.f32 %v1653, %v1717
        %v1782 = vmax.f32 %v1654, %v1720
        %v1783 = vmax.f32 %v1655, %v1723
        %v1784 = vmax.f32 %v1656, %v1726
        %v1785 = vmax.f32 %v1657, %v1729
        %v1786 = vmax.f32 %v1658, %v1732
        %v1787 = vmax.f32 %v1659, %v1735
        %v1788 = vmax.f32 %v1660, %v1738
        %v1789 = vmax.f32 %v1661, %v1741
        %v1790 = vmax.f32 %v1662, %v1744
        %v1791 = vmax.f32 %v1663, %v1747
        %v1792 = vmax.f32 %v1664, %v1750
        %v1793 = vmax.f32 %v1665, %v1753
        %v1794 = vmax.f32 %v1666, %v1756
        %v1795 = vmax.f32 %v1667, %v1759
        %v1796 = vmax.f32 %v1668, %v1762
        %v1797 = vmax.f32 %v1669, %v1765
        %1799 = vset.pattern.permute.xlu0 0
        %1800 = vperm.xlu0 %1799, %v1766
        %v1801 = vpop.permute.xlu0 %1800
        %1804 = vset.pattern.permute.xlu0 0
        %1805 = vperm.xlu0 %1804, %v1767
        %v1806 = vpop.permute.xlu0 %1805
        %1809 = vset.pattern.permute.xlu0 0
        %1810 = vperm.xlu0 %1809, %v1768
        %v1811 = vpop.permute.xlu0 %1810
        %1814 = vset.pattern.permute.xlu0 0
        %1815 = vperm.xlu0 %1814, %v1769
        %v1816 = vpop.permute.xlu0 %1815
        %1819 = vset.pattern.permute.xlu0 0
        %1820 = vperm.xlu0 %1819, %v1770
        %v1821 = vpop.permute.xlu0 %1820
        %1824 = vset.pattern.permute.xlu0 0
        %1825 = vperm.xlu0 %1824, %v1771
        %v1826 = vpop.permute.xlu0 %1825
        %1829 = vset.pattern.permute.xlu0 0
        %1830 = vperm.xlu0 %1829, %v1772
        %v1831 = vpop.permute.xlu0 %1830
        %1834 = vset.pattern.permute.xlu0 0
        %1835 = vperm.xlu0 %1834, %v1773
        %v1836 = vpop.permute.xlu0 %1835
        %1839 = vset.pattern.permute.xlu0 0
        %1840 = vperm.xlu0 %1839, %v1774
        %v1841 = vpop.permute.xlu0 %1840
        %1844 = vset.pattern.permute.xlu0 0
        %1845 = vperm.xlu0 %1844, %v1775
        %v1846 = vpop.permute.xlu0 %1845
        %1849 = vset.pattern.permute.xlu0 0
        %1850 = vperm.xlu0 %1849, %v1776
        %v1851 = vpop.permute.xlu0 %1850
        %1854 = vset.pattern.permute.xlu0 0
        %1855 = vperm.xlu0 %1854, %v1777
        %v1856 = vpop.permute.xlu0 %1855
        %1859 = vset.pattern.permute.xlu0 0
        %1860 = vperm.xlu0 %1859, %v1778
        %v1861 = vpop.permute.xlu0 %1860
        %1864 = vset.pattern.permute.xlu0 0
        %1865 = vperm.xlu0 %1864, %v1779
        %v1866 = vpop.permute.xlu0 %1865
        %1869 = vset.pattern.permute.xlu0 0
        %1870 = vperm.xlu0 %1869, %v1780
        %v1871 = vpop.permute.xlu0 %1870
        %1874 = vset.pattern.permute.xlu0 0
        %1875 = vperm.xlu0 %1874, %v1781
        %v1876 = vpop.permute.xlu0 %1875
        %1879 = vset.pattern.permute.xlu0 0
        %1880 = vperm.xlu0 %1879, %v1782
        %v1881 = vpop.permute.xlu0 %1880
        %1884 = vset.pattern.permute.xlu0 0
        %1885 = vperm.xlu0 %1884, %v1783
        %v1886 = vpop.permute.xlu0 %1885
        %1889 = vset.pattern.permute.xlu0 0
        %1890 = vperm.xlu0 %1889, %v1784
        %v1891 = vpop.permute.xlu0 %1890
        %1894 = vset.pattern.permute.xlu0 0
        %1895 = vperm.xlu0 %1894, %v1785
        %v1896 = vpop.permute.xlu0 %1895
        %1899 = vset.pattern.permute.xlu0 0
        %1900 = vperm.xlu0 %1899, %v1786
        %v1901 = vpop.permute.xlu0 %1900
        %1904 = vset.pattern.permute.xlu0 0
        %1905 = vperm.xlu0 %1904, %v1787
        %v1906 = vpop.permute.xlu0 %1905
        %1909 = vset.pattern.permute.xlu0 0
        %1910 = vperm.xlu0 %1909, %v1788
        %v1911 = vpop.permute.xlu0 %1910
        %1914 = vset.pattern.permute.xlu0 0
        %1915 = vperm.xlu0 %1914, %v1789
        %v1916 = vpop.permute.xlu0 %1915
        %1919 = vset.pattern.permute.xlu0 0
        %1920 = vperm.xlu0 %1919, %v1790
        %v1921 = vpop.permute.xlu0 %1920
        %1924 = vset.pattern.permute.xlu0 0
        %1925 = vperm.xlu0 %1924, %v1791
        %v1926 = vpop.permute.xlu0 %1925
        %1929 = vset.pattern.permute.xlu0 0
        %1930 = vperm.xlu0 %1929, %v1792
        %v1931 = vpop.permute.xlu0 %1930
        %1934 = vset.pattern.permute.xlu0 0
        %1935 = vperm.xlu0 %1934, %v1793
        %v1936 = vpop.permute.xlu0 %1935
        %1939 = vset.pattern.permute.xlu0 0
        %1940 = vperm.xlu0 %1939, %v1794
        %v1941 = vpop.permute.xlu0 %1940
        %1944 = vset.pattern.permute.xlu0 0
        %1945 = vperm.xlu0 %1944, %v1795
        %v1946 = vpop.permute.xlu0 %1945
        %1949 = vset.pattern.permute.xlu0 0
        %1950 = vperm.xlu0 %1949, %v1796
        %v1951 = vpop.permute.xlu0 %1950
        %1954 = vset.pattern.permute.xlu0 0
        %1955 = vperm.xlu0 %1954, %v1797
        %v1956 = vpop.permute.xlu0 %1955
        %v1958 = vsub.f32 %v1277, %v1801
        %v1959 = vsub.f32 %v1278, %v1801
        %v1960 = vsub.f32 %v1279, %v1806
        %v1961 = vsub.f32 %v1280, %v1806
        %v1962 = vsub.f32 %v1281, %v1811
        %v1963 = vsub.f32 %v1282, %v1811
        %v1964 = vsub.f32 %v1283, %v1816
        %v1965 = vsub.f32 %v1284, %v1816
        %v1966 = vsub.f32 %v1285, %v1821
        %v1967 = vsub.f32 %v1286, %v1821
        %v1968 = vsub.f32 %v1287, %v1826
        %v1969 = vsub.f32 %v1288, %v1826
        %v1970 = vsub.f32 %v1289, %v1831
        %v1971 = vsub.f32 %v1290, %v1831
        %v1972 = vsub.f32 %v1291, %v1836
        %v1973 = vsub.f32 %v1292, %v1836
        %v1974 = vsub.f32 %v1293, %v1841
        %v1975 = vsub.f32 %v1294, %v1841
        %v1976 = vsub.f32 %v1295, %v1846
        %v1977 = vsub.f32 %v1296, %v1846
        %v1978 = vsub.f32 %v1297, %v1851
        %v1979 = vsub.f32 %v1298, %v1851
        %v1980 = vsub.f32 %v1299, %v1856
        %v1981 = vsub.f32 %v1300, %v1856
        %v1982 = vsub.f32 %v1301, %v1861
        %v1983 = vsub.f32 %v1302, %v1861
        %v1984 = vsub.f32 %v1303, %v1866
        %v1985 = vsub.f32 %v1304, %v1866
        %v1986 = vsub.f32 %v1305, %v1871
        %v1987 = vsub.f32 %v1306, %v1871
        %v1988 = vsub.f32 %v1307, %v1876
        %v1989 = vsub.f32 %v1308, %v1876
        %v1990 = vsub.f32 %v1309, %v1881
        %v1991 = vsub.f32 %v1310, %v1881
        %v1992 = vsub.f32 %v1311, %v1886
        %v1993 = vsub.f32 %v1312, %v1886
        %v1994 = vsub.f32 %v1313, %v1891
        %v1995 = vsub.f32 %v1314, %v1891
        %v1996 = vsub.f32 %v1315, %v1896
        %v1997 = vsub.f32 %v1316, %v1896
        %v1998 = vsub.f32 %v1317, %v1901
        %v1999 = vsub.f32 %v1318, %v1901
        %v2000 = vsub.f32 %v1319, %v1906
        %v2001 = vsub.f32 %v1320, %v1906
        %v2002 = vsub.f32 %v1321, %v1911
        %v2003 = vsub.f32 %v1322, %v1911
        %v2004 = vsub.f32 %v1323, %v1916
        %v2005 = vsub.f32 %v1324, %v1916
        %v2006 = vsub.f32 %v1325, %v1921
        %v2007 = vsub.f32 %v1326, %v1921
        %v2008 = vsub.f32 %v1327, %v1926
        %v2009 = vsub.f32 %v1328, %v1926
        %v2010 = vsub.f32 %v1329, %v1931
        %v2011 = vsub.f32 %v1330, %v1931
        %v2012 = vsub.f32 %v1331, %v1936
        %v2013 = vsub.f32 %v1332, %v1936
        %v2014 = vsub.f32 %v1333, %v1941
        %v2015 = vsub.f32 %v1334, %v1941
        %v2016 = vsub.f32 %v1335, %v1946
        %v2017 = vsub.f32 %v1336, %v1946
        %v2018 = vsub.f32 %v1337, %v1951
        %v2019 = vsub.f32 %v1338, %v1951
        %v2020 = vsub.f32 %v1339, %v1956
        %v2021 = vsub.f32 %v1340, %v1956
        %v2022 = vpack.c.bf16 %v1960, %v1958
        %v2023 = vpack.c.bf16 %v1961, %v1959
        %v2024 = vpack.c.bf16 %v1964, %v1962
        %v2025 = vpack.c.bf16 %v1965, %v1963
        %v2026 = vpack.c.bf16 %v1968, %v1966
        %v2027 = vpack.c.bf16 %v1969, %v1967
        %v2028 = vpack.c.bf16 %v1972, %v1970
        %v2029 = vpack.c.bf16 %v1973, %v1971
        %v2030 = vpack.c.bf16 %v1976, %v1974
        %v2031 = vpack.c.bf16 %v1977, %v1975
        %v2032 = vpack.c.bf16 %v1980, %v1978
        %v2033 = vpack.c.bf16 %v1981, %v1979
        %v2034 = vpack.c.bf16 %v1984, %v1982
        %v2035 = vpack.c.bf16 %v1985, %v1983
        %v2036 = vpack.c.bf16 %v1988, %v1986
        %v2037 = vpack.c.bf16 %v1989, %v1987
        %v2038 = vpack.c.bf16 %v1992, %v1990
        %v2039 = vpack.c.bf16 %v1993, %v1991
        %v2040 = vpack.c.bf16 %v1996, %v1994
        %v2041 = vpack.c.bf16 %v1997, %v1995
        %v2042 = vpack.c.bf16 %v2000, %v1998
        %v2043 = vpack.c.bf16 %v2001, %v1999
        %v2044 = vpack.c.bf16 %v2004, %v2002
        %v2045 = vpack.c.bf16 %v2005, %v2003
        %v2046 = vpack.c.bf16 %v2008, %v2006
        %v2047 = vpack.c.bf16 %v2009, %v2007
        %v2048 = vpack.c.bf16 %v2012, %v2010
        %v2049 = vpack.c.bf16 %v2013, %v2011
        %v2050 = vpack.c.bf16 %v2016, %v2014
        %v2051 = vpack.c.bf16 %v2017, %v2015
        %v2052 = vpack.c.bf16 %v2020, %v2018
        %v2053 = vpack.c.bf16 %v2021, %v2019
        %v2055 = vmul.bf16 %v2022, 1069105081
        %v2056 = vpow.bf16.pop %v2055
        %v2058 = vmul.bf16 %v2023, 1069105081
        %v2059 = vpow.bf16.pop %v2058
        %v2061 = vmul.bf16 %v2024, 1069105081
        %v2062 = vpow.bf16.pop %v2061
        %v2064 = vmul.bf16 %v2025, 1069105081
        %v2065 = vpow.bf16.pop %v2064
        %v2067 = vmul.bf16 %v2026, 1069105081
        %v2068 = vpow.bf16.pop %v2067
        %v2070 = vmul.bf16 %v2027, 1069105081
        %v2071 = vpow.bf16.pop %v2070
        %v2073 = vmul.bf16 %v2028, 1069105081
        %v2074 = vpow.bf16.pop %v2073
        %v2076 = vmul.bf16 %v2029, 1069105081
        %v2077 = vpow.bf16.pop %v2076
        %v2079 = vmul.bf16 %v2030, 1069105081
        %v2080 = vpow.bf16.pop %v2079
        %v2082 = vmul.bf16 %v2031, 1069105081
        %v2083 = vpow.bf16.pop %v2082
        %v2085 = vmul.bf16 %v2032, 1069105081
        %v2086 = vpow.bf16.pop %v2085
        %v2088 = vmul.bf16 %v2033, 1069105081
        %v2089 = vpow.bf16.pop %v2088
        %v2091 = vmul.bf16 %v2034, 1069105081
        %v2092 = vpow.bf16.pop %v2091
        %v2094 = vmul.bf16 %v2035, 1069105081
        %v2095 = vpow.bf16.pop %v2094
        %v2097 = vmul.bf16 %v2036, 1069105081
        %v2098 = vpow.bf16.pop %v2097
        %v2100 = vmul.bf16 %v2037, 1069105081
        %v2101 = vpow.bf16.pop %v2100
        %v2103 = vmul.bf16 %v2038, 1069105081
        %v2104 = vpow.bf16.pop %v2103
        %v2106 = vmul.bf16 %v2039, 1069105081
        %v2107 = vpow.bf16.pop %v2106
        %v2109 = vmul.bf16 %v2040, 1069105081
        %v2110 = vpow.bf16.pop %v2109
        %v2112 = vmul.bf16 %v2041, 1069105081
        %v2113 = vpow.bf16.pop %v2112
        %v2115 = vmul.bf16 %v2042, 1069105081
        %v2116 = vpow.bf16.pop %v2115
        %v2118 = vmul.bf16 %v2043, 1069105081
        %v2119 = vpow.bf16.pop %v2118
        %v2121 = vmul.bf16 %v2044, 1069105081
        %v2122 = vpow.bf16.pop %v2121
        %v2124 = vmul.bf16 %v2045, 1069105081
        %v2125 = vpow.bf16.pop %v2124
        %v2127 = vmul.bf16 %v2046, 1069105081
        %v2128 = vpow.bf16.pop %v2127
        %v2130 = vmul.bf16 %v2047, 1069105081
        %v2131 = vpow.bf16.pop %v2130
        %v2133 = vmul.bf16 %v2048, 1069105081
        %v2134 = vpow.bf16.pop %v2133
        %v2136 = vmul.bf16 %v2049, 1069105081
        %v2137 = vpow.bf16.pop %v2136
        %v2139 = vmul.bf16 %v2050, 1069105081
        %v2140 = vpow.bf16.pop %v2139
        %v2142 = vmul.bf16 %v2051, 1069105081
        %v2143 = vpow.bf16.pop %v2142
        %v2145 = vmul.bf16 %v2052, 1069105081
        %v2146 = vpow.bf16.pop %v2145
        %v2148 = vmul.bf16 %v2053, 1069105081
        %v2149 = vpow.bf16.pop %v2148
        %v2150 = vsub.f32 %v1638, %v1766
        %v2151 = vsub.f32 %v1639, %v1767
        %v2152 = vsub.f32 %v1640, %v1768
        %v2153 = vsub.f32 %v1641, %v1769
        %v2154 = vsub.f32 %v1642, %v1770
        %v2155 = vsub.f32 %v1643, %v1771
        %v2156 = vsub.f32 %v1644, %v1772
        %v2157 = vsub.f32 %v1645, %v1773
        %v2158 = vsub.f32 %v1646, %v1774
        %v2159 = vsub.f32 %v1647, %v1775
        %v2160 = vsub.f32 %v1648, %v1776
        %v2161 = vsub.f32 %v1649, %v1777
        %v2162 = vsub.f32 %v1650, %v1778
        %v2163 = vsub.f32 %v1651, %v1779
        %v2164 = vsub.f32 %v1652, %v1780
        %v2165 = vsub.f32 %v1653, %v1781
        %v2166 = vsub.f32 %v1654, %v1782
        %v2167 = vsub.f32 %v1655, %v1783
        %v2168 = vsub.f32 %v1656, %v1784
        %v2169 = vsub.f32 %v1657, %v1785
        %v2170 = vsub.f32 %v1658, %v1786
        %v2171 = vsub.f32 %v1659, %v1787
        %v2172 = vsub.f32 %v1660, %v1788
        %v2173 = vsub.f32 %v1661, %v1789
        %v2174 = vsub.f32 %v1662, %v1790
        %v2175 = vsub.f32 %v1663, %v1791
        %v2176 = vsub.f32 %v1664, %v1792
        %v2177 = vsub.f32 %v1665, %v1793
        %v2178 = vsub.f32 %v1666, %v1794
        %v2179 = vsub.f32 %v1667, %v1795
        %v2180 = vsub.f32 %v1668, %v1796
        %v2181 = vsub.f32 %v1669, %v1797
        %v2182 = vmul.f32 %v2150, 1.442695
        %v2183 = vpow.pop %v2182
        %v2184 = vmul.f32 %v2151, 1.442695
        %v2185 = vpow.pop %v2184
        %v2186 = vmul.f32 %v2152, 1.442695
        %v2187 = vpow.pop %v2186
        %v2188 = vmul.f32 %v2153, 1.442695
        %v2189 = vpow.pop %v2188
        %v2190 = vmul.f32 %v2154, 1.442695
        %v2191 = vpow.pop %v2190
        %v2192 = vmul.f32 %v2155, 1.442695
        %v2193 = vpow.pop %v2192
        %v2194 = vmul.f32 %v2156, 1.442695
        %v2195 = vpow.pop %v2194
        %v2196 = vmul.f32 %v2157, 1.442695
        %v2197 = vpow.pop %v2196
        %v2198 = vmul.f32 %v2158, 1.442695
        %v2199 = vpow.pop %v2198
        %v2200 = vmul.f32 %v2159, 1.442695
        %v2201 = vpow.pop %v2200
        %v2202 = vmul.f32 %v2160, 1.442695
        %v2203 = vpow.pop %v2202
        %v2204 = vmul.f32 %v2161, 1.442695
        %v2205 = vpow.pop %v2204
        %v2206 = vmul.f32 %v2162, 1.442695
        %v2207 = vpow.pop %v2206
        %v2208 = vmul.f32 %v2163, 1.442695
        %v2209 = vpow.pop %v2208
        %v2210 = vmul.f32 %v2164, 1.442695
        %v2211 = vpow.pop %v2210
        %v2212 = vmul.f32 %v2165, 1.442695
        %v2213 = vpow.pop %v2212
        %v2214 = vmul.f32 %v2166, 1.442695
        %v2215 = vpow.pop %v2214
        %v2216 = vmul.f32 %v2167, 1.442695
        %v2217 = vpow.pop %v2216
        %v2218 = vmul.f32 %v2168, 1.442695
        %v2219 = vpow.pop %v2218
        %v2220 = vmul.f32 %v2169, 1.442695
        %v2221 = vpow.pop %v2220
        %v2222 = vmul.f32 %v2170, 1.442695
        %v2223 = vpow.pop %v2222
        %v2224 = vmul.f32 %v2171, 1.442695
        %v2225 = vpow.pop %v2224
        %v2226 = vmul.f32 %v2172, 1.442695
        %v2227 = vpow.pop %v2226
        %v2228 = vmul.f32 %v2173, 1.442695
        %v2229 = vpow.pop %v2228
        %v2230 = vmul.f32 %v2174, 1.442695
        %v2231 = vpow.pop %v2230
        %v2232 = vmul.f32 %v2175, 1.442695
        %v2233 = vpow.pop %v2232
        %v2234 = vmul.f32 %v2176, 1.442695
        %v2235 = vpow.pop %v2234
        %v2236 = vmul.f32 %v2177, 1.442695
        %v2237 = vpow.pop %v2236
        %v2238 = vmul.f32 %v2178, 1.442695
        %v2239 = vpow.pop %v2238
        %v2240 = vmul.f32 %v2179, 1.442695
        %v2241 = vpow.pop %v2240
        %v2242 = vmul.f32 %v2180, 1.442695
        %v2243 = vpow.pop %v2242
        %v2244 = vmul.f32 %v2181, 1.442695
        %v2245 = vpow.pop %v2244
        %v2246 = vld [vmem:[#allocation3] sm:$0xff]
        %v2247 = vld [vmem:[#allocation3 + $0x8] sm:$0xff]
        %v2248 = vld [vmem:[#allocation3 + $0x10] sm:$0xff]
        %v2249 = vld [vmem:[#allocation3 + $0x18] sm:$0xff]
        %v2250 = vld [vmem:[#allocation3 + $0x20] sm:$0xff]
        %v2251 = vld [vmem:[#allocation3 + $0x28] sm:$0xff]
        %v2252 = vld [vmem:[#allocation3 + $0x30] sm:$0xff]
        %v2253 = vld [vmem:[#allocation3 + $0x38] sm:$0xff]
        %v2254 = vld [vmem:[#allocation3 + $0x40] sm:$0xff]
        %v2255 = vld [vmem:[#allocation3 + $0x48] sm:$0xff]
        %v2256 = vld [vmem:[#allocation3 + $0x50] sm:$0xff]
        %v2257 = vld [vmem:[#allocation3 + $0x58] sm:$0xff]
        %v2258 = vld [vmem:[#allocation3 + $0x60] sm:$0xff]
        %v2259 = vld [vmem:[#allocation3 + $0x68] sm:$0xff]
        %v2260 = vld [vmem:[#allocation3 + $0x70] sm:$0xff]
        %v2261 = vld [vmem:[#allocation3 + $0x78] sm:$0xff]
        %v2262 = vld [vmem:[#allocation3 + $0x80] sm:$0xff]
        %v2263 = vld [vmem:[#allocation3 + $0x88] sm:$0xff]
        %v2264 = vld [vmem:[#allocation3 + $0x90] sm:$0xff]
        %v2265 = vld [vmem:[#allocation3 + $0x98] sm:$0xff]
        %v2266 = vld [vmem:[#allocation3 + $0xa0] sm:$0xff]
        %v2267 = vld [vmem:[#allocation3 + $0xa8] sm:$0xff]
        %v2268 = vld [vmem:[#allocation3 + $0xb0] sm:$0xff]
        %v2269 = vld [vmem:[#allocation3 + $0xb8] sm:$0xff]
        %v2270 = vld [vmem:[#allocation3 + $0xc0] sm:$0xff]
        %v2271 = vld [vmem:[#allocation3 + $0xc8] sm:$0xff]
        %v2272 = vld [vmem:[#allocation3 + $0xd0] sm:$0xff]
        %v2273 = vld [vmem:[#allocation3 + $0xd8] sm:$0xff]
        %v2274 = vld [vmem:[#allocation3 + $0xe0] sm:$0xff]
        %v2275 = vld [vmem:[#allocation3 + $0xe8] sm:$0xff]
        %v2276 = vld [vmem:[#allocation3 + $0xf0] sm:$0xff]
        %v2277 = vld [vmem:[#allocation3 + $0xf8] sm:$0xff]
        %v2278 = vmul.f32 %v2183, %v2246
        %v2279 = vmul.f32 %v2185, %v2247
        %v2280 = vmul.f32 %v2187, %v2248
        %v2281 = vmul.f32 %v2189, %v2249
        %v2282 = vmul.f32 %v2191, %v2250
        %v2283 = vmul.f32 %v2193, %v2251
        %v2284 = vmul.f32 %v2195, %v2252
        %v2285 = vmul.f32 %v2197, %v2253
        %v2286 = vmul.f32 %v2199, %v2254
        %v2287 = vmul.f32 %v2201, %v2255
        %v2288 = vmul.f32 %v2203, %v2256
        %v2289 = vmul.f32 %v2205, %v2257
        %v2290 = vmul.f32 %v2207, %v2258
        %v2291 = vmul.f32 %v2209, %v2259
        %v2292 = vmul.f32 %v2211, %v2260
        %v2293 = vmul.f32 %v2213, %v2261
        %v2294 = vmul.f32 %v2215, %v2262
        %v2295 = vmul.f32 %v2217, %v2263
        %v2296 = vmul.f32 %v2219, %v2264
        %v2297 = vmul.f32 %v2221, %v2265
        %v2298 = vmul.f32 %v2223, %v2266
        %v2299 = vmul.f32 %v2225, %v2267
        %v2300 = vmul.f32 %v2227, %v2268
        %v2301 = vmul.f32 %v2229, %v2269
        %v2302 = vmul.f32 %v2231, %v2270
        %v2303 = vmul.f32 %v2233, %v2271
        %v2304 = vmul.f32 %v2235, %v2272
        %v2305 = vmul.f32 %v2237, %v2273
        %v2306 = vmul.f32 %v2239, %v2274
        %v2307 = vmul.f32 %v2241, %v2275
        %v2308 = vmul.f32 %v2243, %v2276
        %v2309 = vmul.f32 %v2245, %v2277
        %v2310 = vunpack.c.l.bf16 %v2056
        %v2311 = vunpack.c.l.bf16 %v2059
        %v2312 = vunpack.c.h.bf16 %v2056
        %v2313 = vunpack.c.h.bf16 %v2059
        %v2314 = vunpack.c.l.bf16 %v2062
        %v2315 = vunpack.c.l.bf16 %v2065
        %v2316 = vunpack.c.h.bf16 %v2062
        %v2317 = vunpack.c.h.bf16 %v2065
        %v2318 = vunpack.c.l.bf16 %v2068
        %v2319 = vunpack.c.l.bf16 %v2071
        %v2320 = vunpack.c.h.bf16 %v2068
        %v2321 = vunpack.c.h.bf16 %v2071
        %v2322 = vunpack.c.l.bf16 %v2074
        %v2323 = vunpack.c.l.bf16 %v2077
        %v2324 = vunpack.c.h.bf16 %v2074
        %v2325 = vunpack.c.h.bf16 %v2077
        %v2326 = vunpack.c.l.bf16 %v2080
        %v2327 = vunpack.c.l.bf16 %v2083
        %v2328 = vunpack.c.h.bf16 %v2080
        %v2329 = vunpack.c.h.bf16 %v2083
        %v2330 = vunpack.c.l.bf16 %v2086
        %v2331 = vunpack.c.l.bf16 %v2089
        %v2332 = vunpack.c.h.bf16 %v2086
        %v2333 = vunpack.c.h.bf16 %v2089
        %v2334 = vunpack.c.l.bf16 %v2092
        %v2335 = vunpack.c.l.bf16 %v2095
        %v2336 = vunpack.c.h.bf16 %v2092
        %v2337 = vunpack.c.h.bf16 %v2095
        %v2338 = vunpack.c.l.bf16 %v2098
        %v2339 = vunpack.c.l.bf16 %v2101
        %v2340 = vunpack.c.h.bf16 %v2098
        %v2341 = vunpack.c.h.bf16 %v2101
        %v2342 = vunpack.c.l.bf16 %v2104
        %v2343 = vunpack.c.l.bf16 %v2107
        %v2344 = vunpack.c.h.bf16 %v2104
        %v2345 = vunpack.c.h.bf16 %v2107
        %v2346 = vunpack.c.l.bf16 %v2110
        %v2347 = vunpack.c.l.bf16 %v2113
        %v2348 = vunpack.c.h.bf16 %v2110
        %v2349 = vunpack.c.h.bf16 %v2113
        %v2350 = vunpack.c.l.bf16 %v2116
        %v2351 = vunpack.c.l.bf16 %v2119
        %v2352 = vunpack.c.h.bf16 %v2116
        %v2353 = vunpack.c.h.bf16 %v2119
        %v2354 = vunpack.c.l.bf16 %v2122
        %v2355 = vunpack.c.l.bf16 %v2125
        %v2356 = vunpack.c.h.bf16 %v2122
        %v2357 = vunpack.c.h.bf16 %v2125
        %v2358 = vunpack.c.l.bf16 %v2128
        %v2359 = vunpack.c.l.bf16 %v2131
        %v2360 = vunpack.c.h.bf16 %v2128
        %v2361 = vunpack.c.h.bf16 %v2131
        %v2362 = vunpack.c.l.bf16 %v2134
        %v2363 = vunpack.c.l.bf16 %v2137
        %v2364 = vunpack.c.h.bf16 %v2134
        %v2365 = vunpack.c.h.bf16 %v2137
        %v2366 = vunpack.c.l.bf16 %v2140
        %v2367 = vunpack.c.l.bf16 %v2143
        %v2368 = vunpack.c.h.bf16 %v2140
        %v2369 = vunpack.c.h.bf16 %v2143
        %v2370 = vunpack.c.l.bf16 %v2146
        %v2371 = vunpack.c.l.bf16 %v2149
        %v2372 = vunpack.c.h.bf16 %v2146
        %v2373 = vunpack.c.h.bf16 %v2149
        %v2374 = vadd.f32 %v2310, %v2311
        %2375 = vadd.xlane.f32.xlu0 %v2374
        %v2376 = vpop.xlane.xlu0 %2375
        %v2377 = vadd.f32 %v2312, %v2313
        %2378 = vadd.xlane.f32.xlu0 %v2377
        %v2379 = vpop.xlane.xlu0 %2378
        %v2380 = vadd.f32 %v2314, %v2315
        %2381 = vadd.xlane.f32.xlu0 %v2380
        %v2382 = vpop.xlane.xlu0 %2381
        %v2383 = vadd.f32 %v2316, %v2317
        %2384 = vadd.xlane.f32.xlu0 %v2383
        %v2385 = vpop.xlane.xlu0 %2384
        %v2386 = vadd.f32 %v2318, %v2319
        %2387 = vadd.xlane.f32.xlu0 %v2386
        %v2388 = vpop.xlane.xlu0 %2387
        %v2389 = vadd.f32 %v2320, %v2321
        %2390 = vadd.xlane.f32.xlu0 %v2389
        %v2391 = vpop.xlane.xlu0 %2390
        %v2392 = vadd.f32 %v2322, %v2323
        %2393 = vadd.xlane.f32.xlu0 %v2392
        %v2394 = vpop.xlane.xlu0 %2393
        %v2395 = vadd.f32 %v2324, %v2325
        %2396 = vadd.xlane.f32.xlu0 %v2395
        %v2397 = vpop.xlane.xlu0 %2396
        %v2398 = vadd.f32 %v2326, %v2327
        %2399 = vadd.xlane.f32.xlu0 %v2398
        %v2400 = vpop.xlane.xlu0 %2399
        %v2401 = vadd.f32 %v2328, %v2329
        %2402 = vadd.xlane.f32.xlu0 %v2401
        %v2403 = vpop.xlane.xlu0 %2402
        %v2404 = vadd.f32 %v2330, %v2331
        %2405 = vadd.xlane.f32.xlu0 %v2404
        %v2406 = vpop.xlane.xlu0 %2405
        %v2407 = vadd.f32 %v2332, %v2333
        %2408 = vadd.xlane.f32.xlu0 %v2407
        %v2409 = vpop.xlane.xlu0 %2408
        %v2410 = vadd.f32 %v2334, %v2335
        %2411 = vadd.xlane.f32.xlu0 %v2410
        %v2412 = vpop.xlane.xlu0 %2411
        %v2413 = vadd.f32 %v2336, %v2337
        %2414 = vadd.xlane.f32.xlu0 %v2413
        %v2415 = vpop.xlane.xlu0 %2414
        %v2416 = vadd.f32 %v2338, %v2339
        %2417 = vadd.xlane.f32.xlu0 %v2416
        %v2418 = vpop.xlane.xlu0 %2417
        %v2419 = vadd.f32 %v2340, %v2341
        %2420 = vadd.xlane.f32.xlu0 %v2419
        %v2421 = vpop.xlane.xlu0 %2420
        %v2422 = vadd.f32 %v2342, %v2343
        %2423 = vadd.xlane.f32.xlu0 %v2422
        %v2424 = vpop.xlane.xlu0 %2423
        %v2425 = vadd.f32 %v2344, %v2345
        %2426 = vadd.xlane.f32.xlu0 %v2425
        %v2427 = vpop.xlane.xlu0 %2426
        %v2428 = vadd.f32 %v2346, %v2347
        %2429 = vadd.xlane.f32.xlu0 %v2428
        %v2430 = vpop.xlane.xlu0 %2429
        %v2431 = vadd.f32 %v2348, %v2349
        %2432 = vadd.xlane.f32.xlu0 %v2431
        %v2433 = vpop.xlane.xlu0 %2432
        %v2434 = vadd.f32 %v2350, %v2351
        %2435 = vadd.xlane.f32.xlu0 %v2434
        %v2436 = vpop.xlane.xlu0 %2435
        %v2437 = vadd.f32 %v2352, %v2353
        %2438 = vadd.xlane.f32.xlu0 %v2437
        %v2439 = vpop.xlane.xlu0 %2438
        %v2440 = vadd.f32 %v2354, %v2355
        %2441 = vadd.xlane.f32.xlu0 %v2440
        %v2442 = vpop.xlane.xlu0 %2441
        %v2443 = vadd.f32 %v2356, %v2357
        %2444 = vadd.xlane.f32.xlu0 %v2443
        %v2445 = vpop.xlane.xlu0 %2444
        %v2446 = vadd.f32 %v2358, %v2359
        %2447 = vadd.xlane.f32.xlu0 %v2446
        %v2448 = vpop.xlane.xlu0 %2447
        %v2449 = vadd.f32 %v2360, %v2361
        %2450 = vadd.xlane.f32.xlu0 %v2449
        %v2451 = vpop.xlane.xlu0 %2450
        %v2452 = vadd.f32 %v2362, %v2363
        %2453 = vadd.xlane.f32.xlu0 %v2452
        %v2454 = vpop.xlane.xlu0 %2453
        %v2455 = vadd.f32 %v2364, %v2365
        %2456 = vadd.xlane.f32.xlu0 %v2455
        %v2457 = vpop.xlane.xlu0 %2456
        %v2458 = vadd.f32 %v2366, %v2367
        %2459 = vadd.xlane.f32.xlu0 %v2458
        %v2460 = vpop.xlane.xlu0 %2459
        %v2461 = vadd.f32 %v2368, %v2369
        %2462 = vadd.xlane.f32.xlu0 %v2461
        %v2463 = vpop.xlane.xlu0 %2462
        %v2464 = vadd.f32 %v2370, %v2371
        %2465 = vadd.xlane.f32.xlu0 %v2464
        %v2466 = vpop.xlane.xlu0 %2465
        %v2467 = vadd.f32 %v2372, %v2373
        %2468 = vadd.xlane.f32.xlu0 %v2467
        %v2469 = vpop.xlane.xlu0 %2468
        %v2470 = vadd.f32 %v2278, %v2376
        %v2471 = vadd.f32 %v2279, %v2379
        %v2472 = vadd.f32 %v2280, %v2382
        %v2473 = vadd.f32 %v2281, %v2385
        %v2474 = vadd.f32 %v2282, %v2388
        %v2475 = vadd.f32 %v2283, %v2391
        %v2476 = vadd.f32 %v2284, %v2394
        %v2477 = vadd.f32 %v2285, %v2397
        %v2478 = vadd.f32 %v2286, %v2400
        %v2479 = vadd.f32 %v2287, %v2403
        %v2480 = vadd.f32 %v2288, %v2406
        %v2481 = vadd.f32 %v2289, %v2409
        %v2482 = vadd.f32 %v2290, %v2412
        %v2483 = vadd.f32 %v2291, %v2415
        %v2484 = vadd.f32 %v2292, %v2418
        %v2485 = vadd.f32 %v2293, %v2421
        %v2486 = vadd.f32 %v2294, %v2424
        %v2487 = vadd.f32 %v2295, %v2427
        %v2488 = vadd.f32 %v2296, %v2430
        %v2489 = vadd.f32 %v2297, %v2433
        %v2490 = vadd.f32 %v2298, %v2436
        %v2491 = vadd.f32 %v2299, %v2439
        %v2492 = vadd.f32 %v2300, %v2442
        %v2493 = vadd.f32 %v2301, %v2445
        %v2494 = vadd.f32 %v2302, %v2448
        %v2495 = vadd.f32 %v2303, %v2451
        %v2496 = vadd.f32 %v2304, %v2454
        %v2497 = vadd.f32 %v2305, %v2457
        %v2498 = vadd.f32 %v2306, %v2460
        %v2499 = vadd.f32 %v2307, %v2463
        %v2500 = vadd.f32 %v2308, %v2466
        %v2501 = vadd.f32 %v2309, %v2469
        %vm2502 = vcmask 7168
        %2503 = vst.msk [vmem:[#allocation3] sm:$0xff] %vm2502, %v2470
        %2504 = vst.msk [vmem:[#allocation3 + $0x8] sm:$0xff] %vm2502, %v2471
        %2505 = vst.msk [vmem:[#allocation3 + $0x10] sm:$0xff] %vm2502, %v2472
        %2506 = vst.msk [vmem:[#allocation3 + $0x18] sm:$0xff] %vm2502, %v2473
        %2507 = vst.msk [vmem:[#allocation3 + $0x20] sm:$0xff] %vm2502, %v2474
        %2508 = vst.msk [vmem:[#allocation3 + $0x28] sm:$0xff] %vm2502, %v2475
        %2509 = vst.msk [vmem:[#allocation3 + $0x30] sm:$0xff] %vm2502, %v2476
        %2510 = vst.msk [vmem:[#allocation3 + $0x38] sm:$0xff] %vm2502, %v2477
        %2511 = vst.msk [vmem:[#allocation3 + $0x40] sm:$0xff] %vm2502, %v2478
        %2512 = vst.msk [vmem:[#allocation3 + $0x48] sm:$0xff] %vm2502, %v2479
        %2513 = vst.msk [vmem:[#allocation3 + $0x50] sm:$0xff] %vm2502, %v2480
        %2514 = vst.msk [vmem:[#allocation3 + $0x58] sm:$0xff] %vm2502, %v2481
        %2515 = vst.msk [vmem:[#allocation3 + $0x60] sm:$0xff] %vm2502, %v2482
        %2516 = vst.msk [vmem:[#allocation3 + $0x68] sm:$0xff] %vm2502, %v2483
        %2517 = vst.msk [vmem:[#allocation3 + $0x70] sm:$0xff] %vm2502, %v2484
        %2518 = vst.msk [vmem:[#allocation3 + $0x78] sm:$0xff] %vm2502, %v2485
        %2519 = vst.msk [vmem:[#allocation3 + $0x80] sm:$0xff] %vm2502, %v2486
        %2520 = vst.msk [vmem:[#allocation3 + $0x88] sm:$0xff] %vm2502, %v2487
        %2521 = vst.msk [vmem:[#allocation3 + $0x90] sm:$0xff] %vm2502, %v2488
        %2522 = vst.msk [vmem:[#allocation3 + $0x98] sm:$0xff] %vm2502, %v2489
        %2523 = vst.msk [vmem:[#allocation3 + $0xa0] sm:$0xff] %vm2502, %v2490
        %2524 = vst.msk [vmem:[#allocation3 + $0xa8] sm:$0xff] %vm2502, %v2491
        %2525 = vst.msk [vmem:[#allocation3 + $0xb0] sm:$0xff] %vm2502, %v2492
        %2526 = vst.msk [vmem:[#allocation3 + $0xb8] sm:$0xff] %vm2502, %v2493
        %2527 = vst.msk [vmem:[#allocation3 + $0xc0] sm:$0xff] %vm2502, %v2494
        %2528 = vst.msk [vmem:[#allocation3 + $0xc8] sm:$0xff] %vm2502, %v2495
        %2529 = vst.msk [vmem:[#allocation3 + $0xd0] sm:$0xff] %vm2502, %v2496
        %2530 = vst.msk [vmem:[#allocation3 + $0xd8] sm:$0xff] %vm2502, %v2497
        %2531 = vst.msk [vmem:[#allocation3 + $0xe0] sm:$0xff] %vm2502, %v2498
        %2532 = vst.msk [vmem:[#allocation3 + $0xe8] sm:$0xff] %vm2502, %v2499
        %2533 = vst.msk [vmem:[#allocation3 + $0xf0] sm:$0xff] %vm2502, %v2500
        %2534 = vst.msk [vmem:[#allocation3 + $0xf8] sm:$0xff] %vm2502, %v2501
        %2535 = vst.msk [vmem:[#allocation2] sm:$0xff] %vm2502, %v1766
        %2536 = vst.msk [vmem:[#allocation2 + $0x8] sm:$0xff] %vm2502, %v1767
        %2537 = vst.msk [vmem:[#allocation2 + $0x10] sm:$0xff] %vm2502, %v1768
        %2538 = vst.msk [vmem:[#allocation2 + $0x18] sm:$0xff] %vm2502, %v1769
        %2539 = vst.msk [vmem:[#allocation2 + $0x20] sm:$0xff] %vm2502, %v1770
        %2540 = vst.msk [vmem:[#allocation2 + $0x28] sm:$0xff] %vm2502, %v1771
        %2541 = vst.msk [vmem:[#allocation2 + $0x30] sm:$0xff] %vm2502, %v1772
        %2542 = vst.msk [vmem:[#allocation2 + $0x38] sm:$0xff] %vm2502, %v1773
        %2543 = vst.msk [vmem:[#allocation2 + $0x40] sm:$0xff] %vm2502, %v1774
        %2544 = vst.msk [vmem:[#allocation2 + $0x48] sm:$0xff] %vm2502, %v1775
        %2545 = vst.msk [vmem:[#allocation2 + $0x50] sm:$0xff] %vm2502, %v1776
        %2546 = vst.msk [vmem:[#allocation2 + $0x58] sm:$0xff] %vm2502, %v1777
        %2547 = vst.msk [vmem:[#allocation2 + $0x60] sm:$0xff] %vm2502, %v1778
        %2548 = vst.msk [vmem:[#allocation2 + $0x68] sm:$0xff] %vm2502, %v1779
        %2549 = vst.msk [vmem:[#allocation2 + $0x70] sm:$0xff] %vm2502, %v1780
        %2550 = vst.msk [vmem:[#allocation2 + $0x78] sm:$0xff] %vm2502, %v1781
        %2551 = vst.msk [vmem:[#allocation2 + $0x80] sm:$0xff] %vm2502, %v1782
        %2552 = vst.msk [vmem:[#allocation2 + $0x88] sm:$0xff] %vm2502, %v1783
        %2553 = vst.msk [vmem:[#allocation2 + $0x90] sm:$0xff] %vm2502, %v1784
        %2554 = vst.msk [vmem:[#allocation2 + $0x98] sm:$0xff] %vm2502, %v1785
        %2555 = vst.msk [vmem:[#allocation2 + $0xa0] sm:$0xff] %vm2502, %v1786
        %2556 = vst.msk [vmem:[#allocation2 + $0xa8] sm:$0xff] %vm2502, %v1787
        %2557 = vst.msk [vmem:[#allocation2 + $0xb0] sm:$0xff] %vm2502, %v1788
        %2558 = vst.msk [vmem:[#allocation2 + $0xb8] sm:$0xff] %vm2502, %v1789
        %2559 = vst.msk [vmem:[#allocation2 + $0xc0] sm:$0xff] %vm2502, %v1790
        %2560 = vst.msk [vmem:[#allocation2 + $0xc8] sm:$0xff] %vm2502, %v1791
        %2561 = vst.msk [vmem:[#allocation2 + $0xd0] sm:$0xff] %vm2502, %v1792
        %2562 = vst.msk [vmem:[#allocation2 + $0xd8] sm:$0xff] %vm2502, %v1793
        %2563 = vst.msk [vmem:[#allocation2 + $0xe0] sm:$0xff] %vm2502, %v1794
        %2564 = vst.msk [vmem:[#allocation2 + $0xe8] sm:$0xff] %vm2502, %v1795
        %2565 = vst.msk [vmem:[#allocation2 + $0xf0] sm:$0xff] %vm2502, %v1796
        %2566 = vst.msk [vmem:[#allocation2 + $0xf8] sm:$0xff] %vm2502, %v1797
        %p2567 = scmp.eq.s32.totalorder %s33, 1
        // Predicated region
        $region69: #{_lambda_.1} parent=39 // pred_check
          %p2568 = pneg %p2567
        $region70: #{_lambda_.1} parent=39 // pred_check_branch
          %2570 = sbr.rel (%p2568) target = $region72
        $region71: #{_lambda_.1} parent=39 // pred_region
          %v2571 = vld [vmem:[#allocation2] sm:$0xff]
          %v2572 = vld [vmem:[#allocation2 + $0x8] sm:$0xff]
          %v2573 = vld [vmem:[#allocation2 + $0x10] sm:$0xff]
          %v2574 = vld [vmem:[#allocation2 + $0x18] sm:$0xff]
          %v2575 = vld [vmem:[#allocation2 + $0x20] sm:$0xff]
          %v2576 = vld [vmem:[#allocation2 + $0x28] sm:$0xff]
          %v2577 = vld [vmem:[#allocation2 + $0x30] sm:$0xff]
          %v2578 = vld [vmem:[#allocation2 + $0x38] sm:$0xff]
          %v2579 = vld [vmem:[#allocation2 + $0x40] sm:$0xff]
          %v2580 = vld [vmem:[#allocation2 + $0x48] sm:$0xff]
          %v2581 = vld [vmem:[#allocation2 + $0x50] sm:$0xff]
          %v2582 = vld [vmem:[#allocation2 + $0x58] sm:$0xff]
          %v2583 = vld [vmem:[#allocation2 + $0x60] sm:$0xff]
          %v2584 = vld [vmem:[#allocation2 + $0x68] sm:$0xff]
          %v2585 = vld [vmem:[#allocation2 + $0x70] sm:$0xff]
          %v2586 = vld [vmem:[#allocation2 + $0x78] sm:$0xff]
          %v2587 = vld [vmem:[#allocation2 + $0x80] sm:$0xff]
          %v2588 = vld [vmem:[#allocation2 + $0x88] sm:$0xff]
          %v2589 = vld [vmem:[#allocation2 + $0x90] sm:$0xff]
          %v2590 = vld [vmem:[#allocation2 + $0x98] sm:$0xff]
          %v2591 = vld [vmem:[#allocation2 + $0xa0] sm:$0xff]
          %v2592 = vld [vmem:[#allocation2 + $0xa8] sm:$0xff]
          %v2593 = vld [vmem:[#allocation2 + $0xb0] sm:$0xff]
          %v2594 = vld [vmem:[#allocation2 + $0xb8] sm:$0xff]
          %v2595 = vld [vmem:[#allocation2 + $0xc0] sm:$0xff]
          %v2596 = vld [vmem:[#allocation2 + $0xc8] sm:$0xff]
          %v2597 = vld [vmem:[#allocation2 + $0xd0] sm:$0xff]
          %v2598 = vld [vmem:[#allocation2 + $0xd8] sm:$0xff]
          %v2599 = vld [vmem:[#allocation2 + $0xe0] sm:$0xff]
          %v2600 = vld [vmem:[#allocation2 + $0xe8] sm:$0xff]
          %v2601 = vld [vmem:[#allocation2 + $0xf0] sm:$0xff]
          %v2602 = vld [vmem:[#allocation2 + $0xf8] sm:$0xff]
          %v2603 = vld [vmem:[#allocation3] sm:$0xff]
          %v2604 = vld [vmem:[#allocation3 + $0x8] sm:$0xff]
          %v2605 = vld [vmem:[#allocation3 + $0x10] sm:$0xff]
          %v2606 = vld [vmem:[#allocation3 + $0x18] sm:$0xff]
          %v2607 = vld [vmem:[#allocation3 + $0x20] sm:$0xff]
          %v2608 = vld [vmem:[#allocation3 + $0x28] sm:$0xff]
          %v2609 = vld [vmem:[#allocation3 + $0x30] sm:$0xff]
          %v2610 = vld [vmem:[#allocation3 + $0x38] sm:$0xff]
          %v2611 = vld [vmem:[#allocation3 + $0x40] sm:$0xff]
          %v2612 = vld [vmem:[#allocation3 + $0x48] sm:$0xff]
          %v2613 = vld [vmem:[#allocation3 + $0x50] sm:$0xff]
          %v2614 = vld [vmem:[#allocation3 + $0x58] sm:$0xff]
          %v2615 = vld [vmem:[#allocation3 + $0x60] sm:$0xff]
          %v2616 = vld [vmem:[#allocation3 + $0x68] sm:$0xff]
          %v2617 = vld [vmem:[#allocation3 + $0x70] sm:$0xff]
          %v2618 = vld [vmem:[#allocation3 + $0x78] sm:$0xff]
          %v2619 = vld [vmem:[#allocation3 + $0x80] sm:$0xff]
          %v2620 = vld [vmem:[#allocation3 + $0x88] sm:$0xff]
          %v2621 = vld [vmem:[#allocation3 + $0x90] sm:$0xff]
          %v2622 = vld [vmem:[#allocation3 + $0x98] sm:$0xff]
          %v2623 = vld [vmem:[#allocation3 + $0xa0] sm:$0xff]
          %v2624 = vld [vmem:[#allocation3 + $0xa8] sm:$0xff]
          %v2625 = vld [vmem:[#allocation3 + $0xb0] sm:$0xff]
          %v2626 = vld [vmem:[#allocation3 + $0xb8] sm:$0xff]
          %v2627 = vld [vmem:[#allocation3 + $0xc0] sm:$0xff]
          %v2628 = vld [vmem:[#allocation3 + $0xc8] sm:$0xff]
          %v2629 = vld [vmem:[#allocation3 + $0xd0] sm:$0xff]
          %v2630 = vld [vmem:[#allocation3 + $0xd8] sm:$0xff]
          %v2631 = vld [vmem:[#allocation3 + $0xe0] sm:$0xff]
          %v2632 = vld [vmem:[#allocation3 + $0xe8] sm:$0xff]
          %v2633 = vld [vmem:[#allocation3 + $0xf0] sm:$0xff]
          %v2634 = vld [vmem:[#allocation3 + $0xf8] sm:$0xff]
          %v2635 = vlog2.pop %v2603
          %v2636 = vmul.f32 %v2635, 0.6931472
          %v2637 = vlog2.pop %v2604
          %v2638 = vmul.f32 %v2637, 0.6931472
          %v2639 = vlog2.pop %v2605
          %v2640 = vmul.f32 %v2639, 0.6931472
          %v2641 = vlog2.pop %v2606
          %v2642 = vmul.f32 %v2641, 0.6931472
          %v2643 = vlog2.pop %v2607
          %v2644 = vmul.f32 %v2643, 0.6931472
          %v2645 = vlog2.pop %v2608
          %v2646 = vmul.f32 %v2645, 0.6931472
          %v2647 = vlog2.pop %v2609
          %v2648 = vmul.f32 %v2647, 0.6931472
          %v2649 = vlog2.pop %v2610
          %v2650 = vmul.f32 %v2649, 0.6931472
          %v2651 = vlog2.pop %v2611
          %v2652 = vmul.f32 %v2651, 0.6931472
          %v2653 = vlog2.pop %v2612
          %v2654 = vmul.f32 %v2653, 0.6931472
          %v2655 = vlog2.pop %v2613
          %v2656 = vmul.f32 %v2655, 0.6931472
          %v2657 = vlog2.pop %v2614
          %v2658 = vmul.f32 %v2657, 0.6931472
          %v2659 = vlog2.pop %v2615
          %v2660 = vmul.f32 %v2659, 0.6931472
          %v2661 = vlog2.pop %v2616
          %v2662 = vmul.f32 %v2661, 0.6931472
          %v2663 = vlog2.pop %v2617
          %v2664 = vmul.f32 %v2663, 0.6931472
          %v2665 = vlog2.pop %v2618
          %v2666 = vmul.f32 %v2665, 0.6931472
          %v2667 = vlog2.pop %v2619
          %v2668 = vmul.f32 %v2667, 0.6931472
          %v2669 = vlog2.pop %v2620
          %v2670 = vmul.f32 %v2669, 0.6931472
          %v2671 = vlog2.pop %v2621
          %v2672 = vmul.f32 %v2671, 0.6931472
          %v2673 = vlog2.pop %v2622
          %v2674 = vmul.f32 %v2673, 0.6931472
          %v2675 = vlog2.pop %v2623
          %v2676 = vmul.f32 %v2675, 0.6931472
          %v2677 = vlog2.pop %v2624
          %v2678 = vmul.f32 %v2677, 0.6931472
          %v2679 = vlog2.pop %v2625
          %v2680 = vmul.f32 %v2679, 0.6931472
          %v2681 = vlog2.pop %v2626
          %v2682 = vmul.f32 %v2681, 0.6931472
          %v2683 = vlog2.pop %v2627
          %v2684 = vmul.f32 %v2683, 0.6931472
          %v2685 = vlog2.pop %v2628
          %v2686 = vmul.f32 %v2685, 0.6931472
          %v2687 = vlog2.pop %v2629
          %v2688 = vmul.f32 %v2687, 0.6931472
          %v2689 = vlog2.pop %v2630
          %v2690 = vmul.f32 %v2689, 0.6931472
          %v2691 = vlog2.pop %v2631
          %v2692 = vmul.f32 %v2691, 0.6931472
          %v2693 = vlog2.pop %v2632
          %v2694 = vmul.f32 %v2693, 0.6931472
          %v2695 = vlog2.pop %v2633
          %v2696 = vmul.f32 %v2695, 0.6931472
          %v2697 = vlog2.pop %v2634
          %v2698 = vmul.f32 %v2697, 0.6931472
          %v2699 = vadd.f32 %v2571, %v2636
          %v2700 = vadd.f32 %v2572, %v2638
          %v2701 = vadd.f32 %v2573, %v2640
          %v2702 = vadd.f32 %v2574, %v2642
          %v2703 = vadd.f32 %v2575, %v2644
          %v2704 = vadd.f32 %v2576, %v2646
          %v2705 = vadd.f32 %v2577, %v2648
          %v2706 = vadd.f32 %v2578, %v2650
          %v2707 = vadd.f32 %v2579, %v2652
          %v2708 = vadd.f32 %v2580, %v2654
          %v2709 = vadd.f32 %v2581, %v2656
          %v2710 = vadd.f32 %v2582, %v2658
          %v2711 = vadd.f32 %v2583, %v2660
          %v2712 = vadd.f32 %v2584, %v2662
          %v2713 = vadd.f32 %v2585, %v2664
          %v2714 = vadd.f32 %v2586, %v2666
          %v2715 = vadd.f32 %v2587, %v2668
          %v2716 = vadd.f32 %v2588, %v2670
          %v2717 = vadd.f32 %v2589, %v2672
          %v2718 = vadd.f32 %v2590, %v2674
          %v2719 = vadd.f32 %v2591, %v2676
          %v2720 = vadd.f32 %v2592, %v2678
          %v2721 = vadd.f32 %v2593, %v2680
          %v2722 = vadd.f32 %v2594, %v2682
          %v2723 = vadd.f32 %v2595, %v2684
          %v2724 = vadd.f32 %v2596, %v2686
          %v2725 = vadd.f32 %v2597, %v2688
          %v2726 = vadd.f32 %v2598, %v2690
          %v2727 = vadd.f32 %v2599, %v2692
          %v2728 = vadd.f32 %v2600, %v2694
          %v2729 = vadd.f32 %v2601, %v2696
          %v2730 = vadd.f32 %v2602, %v2698
          %v2731 = vld [vmem:[#allocation4] sm:$0xff]
          %v2732 = vld [vmem:[#allocation4 + $0x8] sm:$0xff]
          %v2733 = vld [vmem:[#allocation4 + $0x10] sm:$0xff]
          %v2734 = vld [vmem:[#allocation4 + $0x18] sm:$0xff]
          %v2735 = vld [vmem:[#allocation4 + $0x20] sm:$0xff]
          %v2736 = vld [vmem:[#allocation4 + $0x28] sm:$0xff]
          %v2737 = vld [vmem:[#allocation4 + $0x30] sm:$0xff]
          %v2738 = vld [vmem:[#allocation4 + $0x38] sm:$0xff]
          %v2739 = vld [vmem:[#allocation4 + $0x40] sm:$0xff]
          %v2740 = vld [vmem:[#allocation4 + $0x48] sm:$0xff]
          %v2741 = vld [vmem:[#allocation4 + $0x50] sm:$0xff]
          %v2742 = vld [vmem:[#allocation4 + $0x58] sm:$0xff]
          %v2743 = vld [vmem:[#allocation4 + $0x60] sm:$0xff]
          %v2744 = vld [vmem:[#allocation4 + $0x68] sm:$0xff]
          %v2745 = vld [vmem:[#allocation4 + $0x70] sm:$0xff]
          %v2746 = vld [vmem:[#allocation4 + $0x78] sm:$0xff]
          %v2747 = vld [vmem:[#allocation4 + $0x80] sm:$0xff]
          %v2748 = vld [vmem:[#allocation4 + $0x88] sm:$0xff]
          %v2749 = vld [vmem:[#allocation4 + $0x90] sm:$0xff]
          %v2750 = vld [vmem:[#allocation4 + $0x98] sm:$0xff]
          %v2751 = vld [vmem:[#allocation4 + $0xa0] sm:$0xff]
          %v2752 = vld [vmem:[#allocation4 + $0xa8] sm:$0xff]
          %v2753 = vld [vmem:[#allocation4 + $0xb0] sm:$0xff]
          %v2754 = vld [vmem:[#allocation4 + $0xb8] sm:$0xff]
          %v2755 = vld [vmem:[#allocation4 + $0xc0] sm:$0xff]
          %v2756 = vld [vmem:[#allocation4 + $0xc8] sm:$0xff]
          %v2757 = vld [vmem:[#allocation4 + $0xd0] sm:$0xff]
          %v2758 = vld [vmem:[#allocation4 + $0xd8] sm:$0xff]
          %v2759 = vld [vmem:[#allocation4 + $0xe0] sm:$0xff]
          %v2760 = vld [vmem:[#allocation4 + $0xe8] sm:$0xff]
          %v2761 = vld [vmem:[#allocation4 + $0xf0] sm:$0xff]
          %v2762 = vld [vmem:[#allocation4 + $0xf8] sm:$0xff]
          %v2763 = vsub.f32 %v2699, %v2731
          %v2764 = vsub.f32 %v2700, %v2732
          %v2765 = vsub.f32 %v2701, %v2733
          %v2766 = vsub.f32 %v2702, %v2734
          %v2767 = vsub.f32 %v2703, %v2735
          %v2768 = vsub.f32 %v2704, %v2736
          %v2769 = vsub.f32 %v2705, %v2737
          %v2770 = vsub.f32 %v2706, %v2738
          %v2771 = vsub.f32 %v2707, %v2739
          %v2772 = vsub.f32 %v2708, %v2740
          %v2773 = vsub.f32 %v2709, %v2741
          %v2774 = vsub.f32 %v2710, %v2742
          %v2775 = vsub.f32 %v2711, %v2743
          %v2776 = vsub.f32 %v2712, %v2744
          %v2777 = vsub.f32 %v2713, %v2745
          %v2778 = vsub.f32 %v2714, %v2746
          %v2779 = vsub.f32 %v2715, %v2747
          %v2780 = vsub.f32 %v2716, %v2748
          %v2781 = vsub.f32 %v2717, %v2749
          %v2782 = vsub.f32 %v2718, %v2750
          %v2783 = vsub.f32 %v2719, %v2751
          %v2784 = vsub.f32 %v2720, %v2752
          %v2785 = vsub.f32 %v2721, %v2753
          %v2786 = vsub.f32 %v2722, %v2754
          %v2787 = vsub.f32 %v2723, %v2755
          %v2788 = vsub.f32 %v2724, %v2756
          %v2789 = vsub.f32 %v2725, %v2757
          %v2790 = vsub.f32 %v2726, %v2758
          %v2791 = vsub.f32 %v2727, %v2759
          %v2792 = vsub.f32 %v2728, %v2760
          %v2793 = vsub.f32 %v2729, %v2761
          %v2794 = vsub.f32 %v2730, %v2762
          %2795 = vst.msk [vmem:[%s385] sm:$0xff] %vm2502, %v2763
          %2796 = vst.msk [vmem:[%s385 + $0x8] sm:$0xff] %vm2502, %v2764
          %2797 = vst.msk [vmem:[%s385 + $0x10] sm:$0xff] %vm2502, %v2765
          %2798 = vst.msk [vmem:[%s385 + $0x18] sm:$0xff] %vm2502, %v2766
          %2799 = vst.msk [vmem:[%s385 + $0x20] sm:$0xff] %vm2502, %v2767
          %2800 = vst.msk [vmem:[%s385 + $0x28] sm:$0xff] %vm2502, %v2768
          %2801 = vst.msk [vmem:[%s385 + $0x30] sm:$0xff] %vm2502, %v2769
          %2802 = vst.msk [vmem:[%s385 + $0x38] sm:$0xff] %vm2502, %v2770
          %2803 = vst.msk [vmem:[%s385 + $0x40] sm:$0xff] %vm2502, %v2771
          %2804 = vst.msk [vmem:[%s385 + $0x48] sm:$0xff] %vm2502, %v2772
          %2805 = vst.msk [vmem:[%s385 + $0x50] sm:$0xff] %vm2502, %v2773
          %2806 = vst.msk [vmem:[%s385 + $0x58] sm:$0xff] %vm2502, %v2774
          %2807 = vst.msk [vmem:[%s385 + $0x60] sm:$0xff] %vm2502, %v2775
          %2808 = vst.msk [vmem:[%s385 + $0x68] sm:$0xff] %vm2502, %v2776
          %2809 = vst.msk [vmem:[%s385 + $0x70] sm:$0xff] %vm2502, %v2777
          %2810 = vst.msk [vmem:[%s385 + $0x78] sm:$0xff] %vm2502, %v2778
          %2811 = vst.msk [vmem:[%s385 + $0x80] sm:$0xff] %vm2502, %v2779
          %2812 = vst.msk [vmem:[%s385 + $0x88] sm:$0xff] %vm2502, %v2780
          %2813 = vst.msk [vmem:[%s385 + $0x90] sm:$0xff] %vm2502, %v2781
          %2814 = vst.msk [vmem:[%s385 + $0x98] sm:$0xff] %vm2502, %v2782
          %2815 = vst.msk [vmem:[%s385 + $0xa0] sm:$0xff] %vm2502, %v2783
          %2816 = vst.msk [vmem:[%s385 + $0xa8] sm:$0xff] %vm2502, %v2784
          %2817 = vst.msk [vmem:[%s385 + $0xb0] sm:$0xff] %vm2502, %v2785
          %2818 = vst.msk [vmem:[%s385 + $0xb8] sm:$0xff] %vm2502, %v2786
          %2819 = vst.msk [vmem:[%s385 + $0xc0] sm:$0xff] %vm2502, %v2787
          %2820 = vst.msk [vmem:[%s385 + $0xc8] sm:$0xff] %vm2502, %v2788
          %2821 = vst.msk [vmem:[%s385 + $0xd0] sm:$0xff] %vm2502, %v2789
          %2822 = vst.msk [vmem:[%s385 + $0xd8] sm:$0xff] %vm2502, %v2790
          %2823 = vst.msk [vmem:[%s385 + $0xe0] sm:$0xff] %vm2502, %v2791
          %2824 = vst.msk [vmem:[%s385 + $0xe8] sm:$0xff] %vm2502, %v2792
          %2825 = vst.msk [vmem:[%s385 + $0xf0] sm:$0xff] %vm2502, %v2793
          %2826 = vst.msk [vmem:[%s385 + $0xf8] sm:$0xff] %vm2502, %v2794
        $region72: #{_lambda_.1} parent=39 // pred_fallthru
          _
        %s2827 = sand.u32 %s175, 1
        %s2828 = scalar_lea.sflag [#allocation8], %s2827
        %s2829 = sand.u32 %s175, 1
        %s2830 = smul.addr %s2829, 256
        %s2831 = scalar_lea.vmem [#allocation15], %s2830
        // Predicated region
        $region73: #{_lambda_.1} parent=39 // pred_check
          %p2832 = pneg %p185
        $region74: #{_lambda_.1} parent=39 // pred_check_branch
          %2834 = sbr.rel (%p2832) target = $region76
        $region75: #{_lambda_.1} parent=39 // pred_region
          %s2835 = smul.u32 32, %s32
          %s2837 = ssub.s32 4096, 4096
          %2838 = vsyncadd %s2828, %s2837
          %s2839 = smul.addr %s2835, 128
          %s2840 = scalar_lea.hbm %s5, %s2839
          %s2841 = sshll.u32 %s2831, 4
          %s2842 = int_to_ptr.vmem [resolvable:$true] %s2841
          %2847 = dma.vmem_to_hbm [thread:$0]  %s2842, 4096, %s2840, %s2828, 128, 128, 8
        $region76: #{_lambda_.1} parent=39 // pred_fallthru
          _
      $region40: #{_lambda_.1} parent=5 // pred_fallthru
        _
      %p2848 = scmp.le.s32.totalorder 2, %s23
      // Predicated region
      $region77: #{_lambda_.1} parent=5 // pred_check
        %p2849 = pneg %p2848
      $region78: #{_lambda_.1} parent=5 // pred_check_branch
        %2851 = sbr.rel (%p2849) target = $region80
      $region79: #{_lambda_.1} parent=5 // pred_region
        %s2852 = ssub.s32 %s23, 2
        // Predicated region
        $region81: #{_lambda_.1} parent=79 // pred_check
          %p2853 = pneg %p191
        $region82: #{_lambda_.1} parent=79 // pred_check_branch
          %2855 = sbr.rel (%p2853) target = $region84
        $region83: #{_lambda_.1} parent=79 // pred_region
          %s2856 = sand.u32 %s176, 1
          %s2857 = scalar_lea.sflag [#allocation8], %s2856
          %s2858 = sand.u32 %s176, 1
          %s2859 = smul.addr %s2858, 256
          %s2860 = scalar_lea.vmem [#allocation15], %s2859
          %2861 = dma.done %s2857, 4096
        $region84: #{_lambda_.1} parent=79 // pred_fallthru
          _
      $region80: #{_lambda_.1} parent=5 // pred_fallthru
        _
    $region6: #{_lambda_.1} parent=1 // loop_footer
      %s27 = sadd.s32 1, %s23
    $region7: #{_lambda_.1} parent=1 // loop_footer_branch
      %22 = sbr.rel target = $region3
    $region8: #{_lambda_.1} parent=1 // loop_exit
      _
    %2862 = vsyncpa [#allocation7], 1
    %s2863 = scalar_lea.sflag [#allocation7], 1
    %2864 = vsyncpa %s2863, 1
    %2865 = vsyncpa [#allocation10], 1
    %s2866 = scalar_lea.sflag [#allocation10], 1
    %2867 = vsyncpa %s2866, 1
    %2868 = vsyncpa [#allocation13], 1
    %s2869 = scalar_lea.sflag [#allocation13], 1
    %2870 = vsyncpa %s2869, 1
    %2871 = vsyncpa [#allocation8], 1
    %s2872 = scalar_lea.sflag [#allocation8], 1
    %2873 = vsyncpa %s2872, 1

</llo_original>
